<compile_context>
chip_gen: v6e
topology: v6e:2x2x1
jax: 0.10.0
libtpu: 0.0.40
codegen_flags: <defaults>
</compile_context>

<pallas_src>
import functools

import jax
import jax.numpy as jnp
from jax.experimental import pallas as pl
from jax.experimental.pallas import tpu as pltpu

F32 = jnp.float32
LEAKY_SLOPE = 0.1
LN_EPS = 1e-5
BN_EPS = 1e-5
LANE = 128  # lane-dense output slab width


# ----------------------------- kernel helpers ------------------------------

def _leaky(x):
    return jnp.where(x > 0, x, LEAKY_SLOPE * x)


def _layernorm(x, gamma, beta):
    # independent reductions (sum x, sum x^2) so the two XLU reduces can co-issue
    mu = jnp.mean(x, axis=-1, keepdims=True)
    ms = jnp.mean(x * x, axis=-1, keepdims=True)
    var = ms - mu * mu
    return (x - mu) * jax.lax.rsqrt(var + LN_EPS) * gamma + beta


def _dot(a, b):
    """f32 MXU matmul with f32 accumulation (interpret-safe, numerics-exact)."""
    return jnp.dot(a, b, preferred_element_type=F32)


def _relproj(x, w, b, g, beta):
    """RelationEmbedding.proj: Linear -> LeakyReLU -> (Dropout=id) -> LayerNorm."""
    return _layernorm(_leaky(_dot(x, w) + b), g, beta)


# ------------------------------ fused kernel --------------------------------

def rasg_fused_kernel(
    # graph data (all VMEM resident for the whole forward)
    norm_ref, nrel_ref, reltab_ref, rcnt_ref, adj_ref,
    m_ref, mt_ref, hsel_ref, tsel_ref,
    # NodeLabelEmbedding
    ne_w1, ne_b1, ne_w2, ne_b2,
    # RelationEmbedding.proj
    re_w, re_b, re_g, re_beta,
    # edge_proj
    ep_w, ep_b,
    # stacked CompGCN layer parameters (L, ...)
    gw_fused, gb_node, gbn_s, gbn_b, gln_g, gln_b,
    # AttentionPooling
    ap_w, ap_q, ap_bsum, ap_bsumT, ap_ln_g, ap_ln_b,
    # Scorer (first-layer weight pre-split so no feature concat is needed)
    sc_w1z, sc_w1h, sc_w1t, sc_b1, sc_w2, sc_b2, sc_w3t, sc_b3,
    # output
    o_ref,
    *, num_layers,
):
    # ---- NodeLabelEmbedding: Linear(K=2 on the VPU) -> LeakyReLU -> Linear
    norm = norm_ref[...]                                                 # (N, 2)
    w1 = ne_w1[...]                                                      # (2, 2*ne)
    t = _leaky(norm[:, 0:1] * w1[0:1, :] + norm[:, 1:2] * w1[1:2, :] + ne_b1[...])
    node_feat = _dot(t, ne_w2[...]) + ne_b2[...]                         # (N, node_emb)

    # ---- RelationEmbedding over the (num_rels+1)-row table, reused twice
    tab_rel = _relproj(reltab_ref[...], re_w[...], re_b[...],
                       re_g[...], re_beta[...])                          # (R, rel_emb)

    # per-node relation feature = one-hot(rel_id of node's graph) @ tab_rel
    rel_feat = _dot(nrel_ref[...], tab_rel)                              # (N, rel_emb)

    # h0 = concat([node_feat, rel_feat], -1) (plain concat, no placement matmuls)
    h = jnp.concatenate([node_feat, rel_feat], axis=-1)                  # (N, Din)

    # ---- edge path collapsed onto the relation table (no E dependence):
    #   se[i] = sum_{e: dst(e)=i} edge_proj(relproj(table[attr(e)]))
    #         = rel_counts[i] @ (relproj(table) @ ep_w + ep_b)
    proj_tab = _dot(tab_rel, ep_w[...]) + ep_b[...]                      # (R, Din)
    se = _dot(rcnt_ref[...], proj_tab)                                   # (N, Din)

    adj = adj_ref[...]                                                   # (N, N) counts

    # ---- CompGCN stack (composition='sub', aggr='add'), 2 matmuls / layer:
    #   aggr = (adj @ h - se) @ W_rel ;  out = aggr + h @ W_node + b
    #   -> out = concat([adj@h - se, h], -1) @ [W_rel ; W_node] + b
    for i in range(num_layers):
        ah = _dot(adj, h)                                                # (N, D)
        inp = jnp.concatenate([ah - se, h], axis=-1)                     # (N, 2D)
        out = _dot(inp, gw_fused[i]) + gb_node[i]                        # (N, D)
        out = out * gbn_s[i] + gbn_b[i]           # BatchNorm1d (eval, default stats)
        out = _leaky(out)                         # CompGCN update activation
        out = _layernorm(out, gln_g[i], gln_b[i])                        # RASG norms[i]
        if i < num_layers - 1:
            out = _leaky(out)
        h = out                                                          # (N, hidden)

    # ---- AttentionPooling: per-head segment softmax + segment sum + LayerNorm
    mt = mt_ref[...]                                                     # (N, B)
    keys = _dot(h, ap_w[...])                                            # (N, H*A)
    att = _dot(keys * ap_q[...], ap_bsum[...])                           # (N, H)

    # vectorized per-graph max (robust softmax shift), no per-graph Python loop
    neg = jnp.float32(-1e30)
    masked = jnp.where(mt[:, :, None] > 0.5, att[:, None, :], neg)       # (N, B, H)
    seg_max = jnp.max(masked, axis=0)                                    # (B, H)
    max_per_node = _dot(mt, seg_max)                                     # (N, H) exact

    ex = jnp.exp(att - max_per_node)                                     # (N, H)
    seg_sum = _dot(m_ref[...], ex)                                       # (B, H)
    sum_per_node = _dot(mt, seg_sum)                                     # (N, H)
    attn = ex * pl.reciprocal(sum_per_node, approx=True)                 # seg. softmax
    attn_exp = _dot(attn, ap_bsumT[...])                                 # (N, H*A)
    pooled = _dot(m_ref[...], keys * attn_exp)                           # (B, H*A)
    z_graph = _layernorm(pooled, ap_ln_g[...], ap_ln_b[...])

    # ---- head / tail node representations (one-hot rows; idx < 0 -> zero row)
    head_repr = _dot(hsel_ref[...], h)                                   # (B, hidden)
    tail_repr = _dot(tsel_ref[...], h)                                   # (B, hidden)

    # ---- Scorer MLP on features = [z_graph | head | tail] via split weights
    s1 = _leaky(_dot(z_graph, sc_w1z[...]) + _dot(head_repr, sc_w1h[...])
                + _dot(tail_repr, sc_w1t[...]) + sc_b1[...])
    s2 = _leaky(_dot(s1, sc_w2[...]) + sc_b2[...])
    # final (D/2 -> 1) layer as VPU multiply + lane reduce (no 1-lane MXU matmul)
    score = jnp.sum(s2 * sc_w3t[...], axis=-1, keepdims=True) + sc_b3[...]  # (B, 1)

    # lane-dense output slab: broadcast across 128 lanes; wrapper slices column 0
    o_ref[...] = jnp.broadcast_to(score, o_ref.shape)


# ------------------------------ parameters ---------------------------------

def init_params(key, *, num_rels, node_emb_dim, rel_emb_dim, gnn_hidden,
                num_layers, att_dim, att_heads):
    input_dim = node_emb_dim + rel_emb_dim
    assert input_dim == gnn_hidden, "config must satisfy node_emb+rel_emb == gnn_hidden"

    def nxt():
        nonlocal key
        key, sub = jax.random.split(key)
        return sub

    def lin(fan_in, fan_out, bias=True, zero_bias=False):
        w = jax.random.normal(nxt(), (fan_in, fan_out), F32) / jnp.sqrt(float(fan_in))
        if not bias:
            return w, None
        b = (jnp.zeros((1, fan_out), F32) if zero_bias else
             0.01 * jax.random.normal(nxt(), (1, fan_out), F32))
        return w, b

    p = {}
    # NodeLabelEmbedding (biases initialized to zero, as in the module)
    p["ne_w1"], p["ne_b1"] = lin(2, 2 * node_emb_dim, zero_bias=True)
    p["ne_w2"], p["ne_b2"] = lin(2 * node_emb_dim, node_emb_dim, zero_bias=True)
    # RelationEmbedding
    p["rel_table"] = jax.random.normal(nxt(), (num_rels + 1, rel_emb_dim), F32) * 0.3
    p["re_w"], p["re_b"] = lin(rel_emb_dim, rel_emb_dim)
    p["re_g"] = jnp.ones((1, rel_emb_dim), F32)
    p["re_beta"] = jnp.zeros((1, rel_emb_dim), F32)
    # edge_proj (rel_emb_dim != input_dim -> Linear)
    p["ep_w"], p["ep_b"] = lin(rel_emb_dim, input_dim)
    # CompGCN layers
    p["gnn"] = []
    for i in range(num_layers):
        din = input_dim if i == 0 else gnn_hidden
        w_rel, _ = lin(din, gnn_hidden, bias=False)
        w_node, b_node = lin(din, gnn_hidden)
        p["gnn"].append({
            "w_rel": w_rel, "w_node": w_node, "b_node": b_node,
            # BatchNorm1d in eval mode with default stats: y = x / sqrt(1 + eps)
            "bn_s": jnp.full((1, gnn_hidden), 1.0 / jnp.sqrt(1.0 + BN_EPS), F32),
            "bn_b": jnp.zeros((1, gnn_hidden), F32),
            "ln_g": jnp.ones((1, gnn_hidden), F32),
            "ln_b": jnp.zeros((1, gnn_hidden), F32),
        })
    # AttentionPooling
    ha = att_heads * att_dim
    p["ap_w"], _ = lin(gnn_hidden, ha, bias=False)
    p["ap_q"] = jax.random.normal(nxt(), (1, ha), F32)   # query, flattened (heads, att_dim)
    p["ap_ln_g"] = jnp.ones((1, ha), F32)
    p["ap_ln_b"] = jnp.zeros((1, ha), F32)
    # block-sum matrix: (H*A, H), column h sums the h-th att_dim slice
    bsum = jnp.zeros((ha, att_heads), F32)
    for h in range(att_heads):
        bsum = bsum.at[h * att_dim:(h + 1) * att_dim, h].set(1.0)
    p["ap_bsum"] = bsum
    p["ap_bsumT"] = bsum.T
    # Scorer
    feat_dim = ha + 2 * gnn_hidden
    p["sc_w1"], p["sc_b1"] = lin(feat_dim, gnn_hidden)
    p["sc_w2"], p["sc_b2"] = lin(gnn_hidden, gnn_hidden // 2)
    p["sc_w3"], p["sc_b3"] = lin(gnn_hidden // 2, 1)
    return p


# -------------------------------- forward ----------------------------------

def _vmem_limit_bytes():
    """Generation-aware VMEM ceiling: ~48 MiB on v7x, ~96 MiB on v5e/v6e."""
    try:
        cap = int(pltpu.get_tpu_info().vmem_capacity_bytes)
    except Exception:
        cap = 64 * 1024 * 1024
    return int(min(int(0.75 * cap), 112 * 1024 * 1024))


@functools.partial(jax.jit, static_argnames=("num_graphs", "max_dist", "num_layers"))
def rasg_forward(p, node_labels, node2graph, edge_index, edge_attr, rel_ids,
                 head_idx, tail_idx, *, num_graphs, max_dist, num_layers):
    n = node_labels.shape[0]
    gnn_hidden = p["gnn"][0]["w_rel"].shape[1]
    ha = p["ap_w"].shape[1]
    num_rel_rows = p["rel_table"].shape[0]               # num_rels + 1

    # ---- host-side glue: gathers / one-hot / adjacency construction only ----
    norm = node_labels.astype(F32) / (max_dist + 1e-5)                    # (N, 2)
    # per-node one-hot of its graph's relation id (N, R)
    nrel_oh = jax.nn.one_hot(rel_ids[node2graph], num_rel_rows, dtype=F32)

    src, dst = edge_index[0], edge_index[1]
    # dense adjacency counts: adj[i, j] = #edges j -> i
    adj = jnp.zeros((n, n), F32).at[dst, src].add(1.0)                    # (N, N)
    # per-destination relation counts (replaces the (N,E) scatter matrix)
    rel_counts = jnp.zeros((n, num_rel_rows), F32).at[dst, edge_attr].add(1.0)

    m = jax.nn.one_hot(node2graph, num_graphs, dtype=F32).T               # (B, N)
    mt = m.T                                                              # (N, B)
    hsel = jax.nn.one_hot(head_idx, n, dtype=F32)                         # (B, N); -1 -> zero row
    tsel = jax.nn.one_hot(tail_idx, n, dtype=F32)                         # (B, N)

    # stacked CompGCN parameters; W_rel / W_node fused into one (2D, D) weight
    gw_fused = jnp.stack([jnp.concatenate([L["w_rel"], L["w_node"]], axis=0)
                          for L in p["gnn"]])                             # (L, 2D, D)
    gb_node = jnp.stack([L["b_node"] for L in p["gnn"]])
    gbn_s = jnp.stack([L["bn_s"] for L in p["gnn"]])
    gbn_b = jnp.stack([L["bn_b"] for L in p["gnn"]])
    gln_g = jnp.stack([L["ln_g"] for L in p["gnn"]])
    gln_b = jnp.stack([L["ln_b"] for L in p["gnn"]])

    # scorer first-layer weight split to avoid an in-kernel feature concat
    sc_w1z = p["sc_w1"][:ha]
    sc_w1h = p["sc_w1"][ha:ha + gnn_hidden]
    sc_w1t = p["sc_w1"][ha + gnn_hidden:]
    sc_w3t = p["sc_w3"].T                                                 # (1, D//2)

    inputs = (
        norm, nrel_oh, p["rel_table"], rel_counts, adj, m, mt, hsel, tsel,
        p["ne_w1"], p["ne_b1"], p["ne_w2"], p["ne_b2"],
        p["re_w"], p["re_b"], p["re_g"], p["re_beta"],
        p["ep_w"], p["ep_b"],
        gw_fused, gb_node, gbn_s, gbn_b, gln_g, gln_b,
        p["ap_w"], p["ap_q"], p["ap_bsum"], p["ap_bsumT"], p["ap_ln_g"], p["ap_ln_b"],
        sc_w1z, sc_w1h, sc_w1t, p["sc_b1"], p["sc_w2"], p["sc_b2"], sc_w3t, p["sc_b3"],
    )

    kernel = functools.partial(rasg_fused_kernel, num_layers=num_layers)
    out = pl.pallas_call(
        kernel,
        out_shape=jax.ShapeDtypeStruct((num_graphs, LANE), F32),
        in_specs=[pl.BlockSpec(memory_space=pltpu.MemorySpace.VMEM)] * len(inputs),
        out_specs=pl.BlockSpec(memory_space=pltpu.MemorySpace.VMEM),
        compiler_params=pltpu.CompilerParams(vmem_limit_bytes=_vmem_limit_bytes()),
    )(*inputs)
    return out[:, 0]                                                      # (B,)


# ---------------------------------- main ------------------------------------

if __name__ == "__main__":
    # Small config consistent with the module constructor (input_dim == gnn_hidden).
    NUM_RELS = 6
    MAX_DIST = 10
    NODE_EMB_DIM = 16
    REL_EMB_DIM = 16
    GNN_HIDDEN = 32
    NUM_LAYERS = 3
    ATT_DIM = 16
    ATT_HEADS = 4

    N, B, E = 12, 3, 24

    key = jax.random.PRNGKey(0)
    k_par, k_x, k_src, k_dst, k_ea, k_rel = jax.random.split(key, 6)

    params = init_params(
        k_par, num_rels=NUM_RELS, node_emb_dim=NODE_EMB_DIM,
        rel_emb_dim=REL_EMB_DIM, gnn_hidden=GNN_HIDDEN, num_layers=NUM_LAYERS,
        att_dim=ATT_DIM, att_heads=ATT_HEADS)

    node_labels = jax.random.randint(k_x, (N, 2), 0, MAX_DIST + 1)        # (d(h,v), d(t,v))
    node2graph = jnp.repeat(jnp.arange(B, dtype=jnp.int32), N // B)       # PyG-style batch
    src = jax.random.randint(k_src, (E,), 0, N)
    dst = jax.random.randint(k_dst, (E,), 0, N)
    edge_index = jnp.stack([src, dst]).astype(jnp.int32)
    edge_attr = jax.random.randint(k_ea, (E,), 0, NUM_RELS + 1)
    rel_ids = jax.random.randint(k_rel, (B,), 0, NUM_RELS + 1)
    head_idx = jnp.array([0, 4, 8], dtype=jnp.int32)
    tail_idx = jnp.array([3, 7, -1], dtype=jnp.int32)                     # -1 -> zero repr

    score = rasg_forward(
        params, node_labels, node2graph, edge_index, edge_attr, rel_ids,
        head_idx, tail_idx, num_graphs=B, max_dist=MAX_DIST,
        num_layers=NUM_LAYERS)
    score = jax.block_until_ready(score)
    assert score.shape == (B,)
    assert bool(jnp.all(jnp.isfinite(score)))
    print("KERNEL_OK")
</pallas_src>

<mosaic_0001>
module attributes {stable_mosaic.version = 11 : i64} {
  func.func private @main(%arg0: i32) attributes {dimension_semantics = [#tpu.dimension_semantics<core_parallel>], iteration_bounds = array<i64: 2>, tpu.core_type = #tpu.core_type<sc_scalar_subcore>, window_params = []} {
    return
  }
}

module attributes {stable_mosaic.version = 11 : i64} {
  func.func private @main(%arg0: i32) attributes {dimension_semantics = [#tpu.dimension_semantics<core_parallel>], iteration_bounds = array<i64: 2>, tpu.core_type = #tpu.core_type<sc_scalar_subcore>, window_params = []} {
    return
  }
}

module attributes {stable_mosaic.version = 11 : i64} {
  func.func @rasg_fused_kernel(%arg0: memref<12x2xf32, #tpu.memory_space<vmem>>, %arg1: memref<12x7xf32, #tpu.memory_space<vmem>>, %arg2: memref<7x16xf32, #tpu.memory_space<vmem>>, %arg3: memref<12x7xf32, #tpu.memory_space<vmem>>, %arg4: memref<12x12xf32, #tpu.memory_space<vmem>>, %arg5: memref<3x12xf32, #tpu.memory_space<vmem>>, %arg6: memref<12x3xf32, #tpu.memory_space<vmem>>, %arg7: memref<3x12xf32, #tpu.memory_space<vmem>>, %arg8: memref<3x12xf32, #tpu.memory_space<vmem>>, %arg9: memref<2x32xf32, #tpu.memory_space<vmem>>, %arg10: memref<1x32xf32, #tpu.memory_space<vmem>>, %arg11: memref<32x16xf32, #tpu.memory_space<vmem>>, %arg12: memref<1x16xf32, #tpu.memory_space<vmem>>, %arg13: memref<16x16xf32, #tpu.memory_space<vmem>>, %arg14: memref<1x16xf32, #tpu.memory_space<vmem>>, %arg15: memref<1x16xf32, #tpu.memory_space<vmem>>, %arg16: memref<1x16xf32, #tpu.memory_space<vmem>>, %arg17: memref<16x32xf32, #tpu.memory_space<vmem>>, %arg18: memref<1x32xf32, #tpu.memory_space<vmem>>, %arg19: memref<3x64x32xf32, #tpu.memory_space<vmem>>, %arg20: memref<3x1x32xf32, #tpu.memory_space<vmem>>, %arg21: memref<3x1x32xf32, #tpu.memory_space<vmem>>, %arg22: memref<3x1x32xf32, #tpu.memory_space<vmem>>, %arg23: memref<3x1x32xf32, #tpu.memory_space<vmem>>, %arg24: memref<3x1x32xf32, #tpu.memory_space<vmem>>, %arg25: memref<32x64xf32, #tpu.memory_space<vmem>>, %arg26: memref<1x64xf32, #tpu.memory_space<vmem>>, %arg27: memref<64x4xf32, #tpu.memory_space<vmem>>, %arg28: memref<4x64xf32, #tpu.memory_space<vmem>>, %arg29: memref<1x64xf32, #tpu.memory_space<vmem>>, %arg30: memref<1x64xf32, #tpu.memory_space<vmem>>, %arg31: memref<64x32xf32, #tpu.memory_space<vmem>>, %arg32: memref<32x32xf32, #tpu.memory_space<vmem>>, %arg33: memref<32x32xf32, #tpu.memory_space<vmem>>, %arg34: memref<1x32xf32, #tpu.memory_space<vmem>>, %arg35: memref<32x16xf32, #tpu.memory_space<vmem>>, %arg36: memref<1x16xf32, #tpu.memory_space<vmem>>, %arg37: memref<1x16xf32, #tpu.memory_space<vmem>>, %arg38: memref<1x1xf32, #tpu.memory_space<vmem>>, %arg39: memref<3x128xf32, #tpu.memory_space<vmem>>) attributes {dimension_semantics = [], scalar_prefetch = 0 : i64, scratch_operands = 0 : i64, tpu.core_type = #tpu.core_type<tc>} {
    %c0 = arith.constant 0 : index
    %c0_0 = arith.constant 0 : index
    %0 = vector.load %arg0[%c0, %c0_0] : memref<12x2xf32, #tpu.memory_space<vmem>>, vector<12x2xf32>
    %c0_1 = arith.constant 0 : index
    %c0_2 = arith.constant 0 : index
    %1 = vector.load %arg9[%c0_1, %c0_2] : memref<2x32xf32, #tpu.memory_space<vmem>>, vector<2x32xf32>
    %2 = vector.extract_strided_slice %0 {offsets = [0, 0], sizes = [12, 1], strides = [1, 1]} : vector<12x2xf32> to vector<12x1xf32>
    %3 = vector.extract_strided_slice %1 {offsets = [0, 0], sizes = [1, 32], strides = [1, 1]} : vector<2x32xf32> to vector<1x32xf32>
    %4 = vector.broadcast %2 : vector<12x1xf32> to vector<12x32xf32>
    %5 = vector.broadcast %3 : vector<1x32xf32> to vector<12x32xf32>
    %6 = arith.mulf %4, %5 : vector<12x32xf32>
    %7 = vector.extract_strided_slice %0 {offsets = [0, 1], sizes = [12, 1], strides = [1, 1]} : vector<12x2xf32> to vector<12x1xf32>
    %8 = vector.extract_strided_slice %1 {offsets = [1, 0], sizes = [1, 32], strides = [1, 1]} : vector<2x32xf32> to vector<1x32xf32>
    %9 = vector.broadcast %7 : vector<12x1xf32> to vector<12x32xf32>
    %10 = vector.broadcast %8 : vector<1x32xf32> to vector<12x32xf32>
    %11 = arith.mulf %9, %10 : vector<12x32xf32>
    %12 = arith.addf %6, %11 : vector<12x32xf32>
    %c0_3 = arith.constant 0 : index
    %c0_4 = arith.constant 0 : index
    %13 = vector.load %arg10[%c0_3, %c0_4] : memref<1x32xf32, #tpu.memory_space<vmem>>, vector<1x32xf32>
    %14 = vector.broadcast %13 : vector<1x32xf32> to vector<12x32xf32>
    %15 = arith.addf %12, %14 : vector<12x32xf32>
    %cst = arith.constant 0.000000e+00 : f32
    %16 = vector.broadcast %cst : f32 to vector<12x32xf32>
    %17 = arith.cmpf ogt, %15, %16 : vector<12x32xf32>
    %cst_5 = arith.constant 1.000000e-01 : f32
    %18 = vector.broadcast %cst_5 : f32 to vector<12x32xf32>
    %19 = arith.mulf %18, %15 : vector<12x32xf32>
    %20 = arith.select %17, %15, %19 : vector<12x32xi1>, vector<12x32xf32>
    %c0_6 = arith.constant 0 : index
    %c0_7 = arith.constant 0 : index
    %21 = vector.load %arg11[%c0_6, %c0_7] : memref<32x16xf32, #tpu.memory_space<vmem>>, vector<32x16xf32>
    %cst_8 = arith.constant dense<0.000000e+00> : vector<12x16xf32>
    %22 = tpu.matmul %20, %21, %cst_8 {dimension_numbers = #tpu.dot_dimension_numbers<[1], [0], [0], [1], [0, 0, 1, 1], [], []>} : vector<12x32xf32>, vector<32x16xf32>, vector<12x16xf32> -> vector<12x16xf32>
    %c0_9 = arith.constant 0 : index
    %c0_10 = arith.constant 0 : index
    %23 = vector.load %arg12[%c0_9, %c0_10] : memref<1x16xf32, #tpu.memory_space<vmem>>, vector<1x16xf32>
    %24 = vector.broadcast %23 : vector<1x16xf32> to vector<12x16xf32>
    %25 = arith.addf %22, %24 : vector<12x16xf32>
    %c0_11 = arith.constant 0 : index
    %c0_12 = arith.constant 0 : index
    %26 = vector.load %arg2[%c0_11, %c0_12] : memref<7x16xf32, #tpu.memory_space<vmem>>, vector<7x16xf32>
    %c0_13 = arith.constant 0 : index
    %c0_14 = arith.constant 0 : index
    %27 = vector.load %arg13[%c0_13, %c0_14] : memref<16x16xf32, #tpu.memory_space<vmem>>, vector<16x16xf32>
    %c0_15 = arith.constant 0 : index
    %c0_16 = arith.constant 0 : index
    %28 = vector.load %arg14[%c0_15, %c0_16] : memref<1x16xf32, #tpu.memory_space<vmem>>, vector<1x16xf32>
    %c0_17 = arith.constant 0 : index
    %c0_18 = arith.constant 0 : index
    %29 = vector.load %arg15[%c0_17, %c0_18] : memref<1x16xf32, #tpu.memory_space<vmem>>, vector<1x16xf32>
    %c0_19 = arith.constant 0 : index
    %c0_20 = arith.constant 0 : index
    %30 = vector.load %arg16[%c0_19, %c0_20] : memref<1x16xf32, #tpu.memory_space<vmem>>, vector<1x16xf32>
    %cst_21 = arith.constant dense<0.000000e+00> : vector<7x16xf32>
    %31 = tpu.matmul %26, %27, %cst_21 {dimension_numbers = #tpu.dot_dimension_numbers<[1], [0], [0], [1], [0, 0, 1, 1], [], []>} : vector<7x16xf32>, vector<16x16xf32>, vector<7x16xf32> -> vector<7x16xf32>
    %32 = vector.broadcast %28 : vector<1x16xf32> to vector<7x16xf32>
    %33 = arith.addf %31, %32 : vector<7x16xf32>
    %cst_22 = arith.constant 0.000000e+00 : f32
    %34 = vector.broadcast %cst_22 : f32 to vector<7x16xf32>
    %35 = arith.cmpf ogt, %33, %34 : vector<7x16xf32>
    %cst_23 = arith.constant 1.000000e-01 : f32
    %36 = vector.broadcast %cst_23 : f32 to vector<7x16xf32>
    %37 = arith.mulf %36, %33 : vector<7x16xf32>
    %38 = arith.select %35, %33, %37 : vector<7x16xi1>, vector<7x16xf32>
    %cst_24 = arith.constant dense<0.000000e+00> : vector<7xf32>
    %39 = vector.multi_reduction <add>, %38, %cst_24 [1] : vector<7x16xf32> to vector<7xf32>
    %40 = vector.shape_cast %39 : vector<7xf32> to vector<7x1xf32>
    %cst_25 = arith.constant 1.600000e+01 : f32
    %41 = vector.broadcast %cst_25 : f32 to vector<7x1xf32>
    %42 = arith.divf %40, %41 : vector<7x1xf32>
    %43 = arith.mulf %38, %38 : vector<7x16xf32>
    %cst_26 = arith.constant dense<0.000000e+00> : vector<7xf32>
    %44 = vector.multi_reduction <add>, %43, %cst_26 [1] : vector<7x16xf32> to vector<7xf32>
    %45 = vector.shape_cast %44 : vector<7xf32> to vector<7x1xf32>
    %cst_27 = arith.constant 1.600000e+01 : f32
    %46 = vector.broadcast %cst_27 : f32 to vector<7x1xf32>
    %47 = arith.divf %45, %46 : vector<7x1xf32>
    %48 = arith.mulf %42, %42 : vector<7x1xf32>
    %49 = arith.subf %47, %48 : vector<7x1xf32>
    %50 = vector.broadcast %42 : vector<7x1xf32> to vector<7x16xf32>
    %51 = arith.subf %38, %50 : vector<7x16xf32>
    %cst_28 = arith.constant 9.99999974E-6 : f32
    %52 = vector.broadcast %cst_28 : f32 to vector<7x1xf32>
    %53 = arith.addf %49, %52 : vector<7x1xf32>
    %54 = math.rsqrt %53 : vector<7x1xf32>
    %55 = vector.broadcast %54 : vector<7x1xf32> to vector<7x16xf32>
    %56 = arith.mulf %51, %55 : vector<7x16xf32>
    %57 = vector.broadcast %29 : vector<1x16xf32> to vector<7x16xf32>
    %58 = arith.mulf %56, %57 : vector<7x16xf32>
    %59 = vector.broadcast %30 : vector<1x16xf32> to vector<7x16xf32>
    %60 = arith.addf %58, %59 : vector<7x16xf32>
    %c0_29 = arith.constant 0 : index
    %c0_30 = arith.constant 0 : index
    %61 = vector.load %arg1[%c0_29, %c0_30] : memref<12x7xf32, #tpu.memory_space<vmem>>, vector<12x7xf32>
    %cst_31 = arith.constant dense<0.000000e+00> : vector<12x16xf32>
    %62 = tpu.matmul %61, %60, %cst_31 {dimension_numbers = #tpu.dot_dimension_numbers<[1], [0], [0], [1], [0, 0, 1, 1], [], []>} : vector<12x7xf32>, vector<7x16xf32>, vector<12x16xf32> -> vector<12x16xf32>
    %63 = tpu.concatenate %25, %62 in 1 : vector<12x16xf32>, vector<12x16xf32> -> vector<12x32xf32>
    %c0_32 = arith.constant 0 : index
    %c0_33 = arith.constant 0 : index
    %64 = vector.load %arg17[%c0_32, %c0_33] : memref<16x32xf32, #tpu.memory_space<vmem>>, vector<16x32xf32>
    %cst_34 = arith.constant dense<0.000000e+00> : vector<7x32xf32>
    %65 = tpu.matmul %60, %64, %cst_34 {dimension_numbers = #tpu.dot_dimension_numbers<[1], [0], [0], [1], [0, 0, 1, 1], [], []>} : vector<7x16xf32>, vector<16x32xf32>, vector<7x32xf32> -> vector<7x32xf32>
    %c0_35 = arith.constant 0 : index
    %c0_36 = arith.constant 0 : index
    %66 = vector.load %arg18[%c0_35, %c0_36] : memref<1x32xf32, #tpu.memory_space<vmem>>, vector<1x32xf32>
    %67 = vector.broadcast %66 : vector<1x32xf32> to vector<7x32xf32>
    %68 = arith.addf %65, %67 : vector<7x32xf32>
    %c0_37 = arith.constant 0 : index
    %c0_38 = arith.constant 0 : index
    %69 = vector.load %arg3[%c0_37, %c0_38] : memref<12x7xf32, #tpu.memory_space<vmem>>, vector<12x7xf32>
    %cst_39 = arith.constant dense<0.000000e+00> : vector<12x32xf32>
    %70 = tpu.matmul %69, %68, %cst_39 {dimension_numbers = #tpu.dot_dimension_numbers<[1], [0], [0], [1], [0, 0, 1, 1], [], []>} : vector<12x7xf32>, vector<7x32xf32>, vector<12x32xf32> -> vector<12x32xf32>
    %c0_40 = arith.constant 0 : index
    %c0_41 = arith.constant 0 : index
    %71 = vector.load %arg4[%c0_40, %c0_41] : memref<12x12xf32, #tpu.memory_space<vmem>>, vector<12x12xf32>
    %cst_42 = arith.constant dense<0.000000e+00> : vector<12x32xf32>
    %72 = tpu.matmul %71, %63, %cst_42 {dimension_numbers = #tpu.dot_dimension_numbers<[1], [0], [0], [1], [0, 0, 1, 1], [], []>} : vector<12x12xf32>, vector<12x32xf32>, vector<12x32xf32> -> vector<12x32xf32>
    %73 = arith.subf %72, %70 : vector<12x32xf32>
    %74 = tpu.concatenate %73, %63 in 1 : vector<12x32xf32>, vector<12x32xf32> -> vector<12x64xf32>
    %c0_43 = arith.constant 0 : index
    %c0_44 = arith.constant 0 : index
    %c0_45 = arith.constant 0 : index
    %75 = vector.load %arg19[%c0_43, %c0_44, %c0_45] : memref<3x64x32xf32, #tpu.memory_space<vmem>>, vector<1x64x32xf32>
    %76 = vector.shape_cast %75 : vector<1x64x32xf32> to vector<64x32xf32>
    %cst_46 = arith.constant dense<0.000000e+00> : vector<12x32xf32>
    %77 = tpu.matmul %74, %76, %cst_46 {dimension_numbers = #tpu.dot_dimension_numbers<[1], [0], [0], [1], [0, 0, 1, 1], [], []>} : vector<12x64xf32>, vector<64x32xf32>, vector<12x32xf32> -> vector<12x32xf32>
    %c0_47 = arith.constant 0 : index
    %c0_48 = arith.constant 0 : index
    %c0_49 = arith.constant 0 : index
    %78 = vector.load %arg20[%c0_47, %c0_48, %c0_49] : memref<3x1x32xf32, #tpu.memory_space<vmem>>, vector<1x1x32xf32>
    %79 = vector.shape_cast %78 : vector<1x1x32xf32> to vector<1x32xf32>
    %80 = vector.broadcast %79 : vector<1x32xf32> to vector<12x32xf32>
    %81 = arith.addf %77, %80 : vector<12x32xf32>
    %c0_50 = arith.constant 0 : index
    %c0_51 = arith.constant 0 : index
    %c0_52 = arith.constant 0 : index
    %82 = vector.load %arg21[%c0_50, %c0_51, %c0_52] : memref<3x1x32xf32, #tpu.memory_space<vmem>>, vector<1x1x32xf32>
    %83 = vector.shape_cast %82 : vector<1x1x32xf32> to vector<1x32xf32>
    %84 = vector.broadcast %83 : vector<1x32xf32> to vector<12x32xf32>
    %85 = arith.mulf %81, %84 : vector<12x32xf32>
    %c0_53 = arith.constant 0 : index
    %c0_54 = arith.constant 0 : index
    %c0_55 = arith.constant 0 : index
    %86 = vector.load %arg22[%c0_53, %c0_54, %c0_55] : memref<3x1x32xf32, #tpu.memory_space<vmem>>, vector<1x1x32xf32>
    %87 = vector.shape_cast %86 : vector<1x1x32xf32> to vector<1x32xf32>
    %88 = vector.broadcast %87 : vector<1x32xf32> to vector<12x32xf32>
    %89 = arith.addf %85, %88 : vector<12x32xf32>
    %cst_56 = arith.constant 0.000000e+00 : f32
    %90 = vector.broadcast %cst_56 : f32 to vector<12x32xf32>
    %91 = arith.cmpf ogt, %89, %90 : vector<12x32xf32>
    %cst_57 = arith.constant 1.000000e-01 : f32
    %92 = vector.broadcast %cst_57 : f32 to vector<12x32xf32>
    %93 = arith.mulf %92, %89 : vector<12x32xf32>
    %94 = arith.select %91, %89, %93 : vector<12x32xi1>, vector<12x32xf32>
    %c0_58 = arith.constant 0 : index
    %c0_59 = arith.constant 0 : index
    %c0_60 = arith.constant 0 : index
    %95 = vector.load %arg23[%c0_58, %c0_59, %c0_60] : memref<3x1x32xf32, #tpu.memory_space<vmem>>, vector<1x1x32xf32>
    %96 = vector.shape_cast %95 : vector<1x1x32xf32> to vector<1x32xf32>
    %c0_61 = arith.constant 0 : index
    %c0_62 = arith.constant 0 : index
    %c0_63 = arith.constant 0 : index
    %97 = vector.load %arg24[%c0_61, %c0_62, %c0_63] : memref<3x1x32xf32, #tpu.memory_space<vmem>>, vector<1x1x32xf32>
    %98 = vector.shape_cast %97 : vector<1x1x32xf32> to vector<1x32xf32>
    %cst_64 = arith.constant dense<0.000000e+00> : vector<12xf32>
    %99 = vector.multi_reduction <add>, %94, %cst_64 [1] : vector<12x32xf32> to vector<12xf32>
    %100 = vector.shape_cast %99 : vector<12xf32> to vector<12x1xf32>
    %cst_65 = arith.constant 3.200000e+01 : f32
    %101 = vector.broadcast %cst_65 : f32 to vector<12x1xf32>
    %102 = arith.divf %100, %101 : vector<12x1xf32>
    %103 = arith.mulf %94, %94 : vector<12x32xf32>
    %cst_66 = arith.constant dense<0.000000e+00> : vector<12xf32>
    %104 = vector.multi_reduction <add>, %103, %cst_66 [1] : vector<12x32xf32> to vector<12xf32>
    %105 = vector.shape_cast %104 : vector<12xf32> to vector<12x1xf32>
    %cst_67 = arith.constant 3.200000e+01 : f32
    %106 = vector.broadcast %cst_67 : f32 to vector<12x1xf32>
    %107 = arith.divf %105, %106 : vector<12x1xf32>
    %108 = arith.mulf %102, %102 : vector<12x1xf32>
    %109 = arith.subf %107, %108 : vector<12x1xf32>
    %110 = vector.broadcast %102 : vector<12x1xf32> to vector<12x32xf32>
    %111 = arith.subf %94, %110 : vector<12x32xf32>
    %cst_68 = arith.constant 9.99999974E-6 : f32
    %112 = vector.broadcast %cst_68 : f32 to vector<12x1xf32>
    %113 = arith.addf %109, %112 : vector<12x1xf32>
    %114 = math.rsqrt %113 : vector<12x1xf32>
    %115 = vector.broadcast %114 : vector<12x1xf32> to vector<12x32xf32>
    %116 = arith.mulf %111, %115 : vector<12x32xf32>
    %117 = vector.broadcast %96 : vector<1x32xf32> to vector<12x32xf32>
    %118 = arith.mulf %116, %117 : vector<12x32xf32>
    %119 = vector.broadcast %98 : vector<1x32xf32> to vector<12x32xf32>
    %120 = arith.addf %118, %119 : vector<12x32xf32>
    %cst_69 = arith.constant 0.000000e+00 : f32
    %121 = vector.broadcast %cst_69 : f32 to vector<12x32xf32>
    %122 = arith.cmpf ogt, %120, %121 : vector<12x32xf32>
    %cst_70 = arith.constant 1.000000e-01 : f32
    %123 = vector.broadcast %cst_70 : f32 to vector<12x32xf32>
    %124 = arith.mulf %123, %120 : vector<12x32xf32>
    %125 = arith.select %122, %120, %124 : vector<12x32xi1>, vector<12x32xf32>
    %cst_71 = arith.constant dense<0.000000e+00> : vector<12x32xf32>
    %126 = tpu.matmul %71, %125, %cst_71 {dimension_numbers = #tpu.dot_dimension_numbers<[1], [0], [0], [1], [0, 0, 1, 1], [], []>} : vector<12x12xf32>, vector<12x32xf32>, vector<12x32xf32> -> vector<12x32xf32>
    %127 = arith.subf %126, %70 : vector<12x32xf32>
    %128 = tpu.concatenate %127, %125 in 1 : vector<12x32xf32>, vector<12x32xf32> -> vector<12x64xf32>
    %c1 = arith.constant 1 : index
    %c0_72 = arith.constant 0 : index
    %c0_73 = arith.constant 0 : index
    %129 = vector.load %arg19[%c1, %c0_72, %c0_73] : memref<3x64x32xf32, #tpu.memory_space<vmem>>, vector<1x64x32xf32>
    %130 = vector.shape_cast %129 : vector<1x64x32xf32> to vector<64x32xf32>
    %cst_74 = arith.constant dense<0.000000e+00> : vector<12x32xf32>
    %131 = tpu.matmul %128, %130, %cst_74 {dimension_numbers = #tpu.dot_dimension_numbers<[1], [0], [0], [1], [0, 0, 1, 1], [], []>} : vector<12x64xf32>, vector<64x32xf32>, vector<12x32xf32> -> vector<12x32xf32>
    %c1_75 = arith.constant 1 : index
    %c0_76 = arith.constant 0 : index
    %c0_77 = arith.constant 0 : index
    %132 = vector.load %arg20[%c1_75, %c0_76, %c0_77] : memref<3x1x32xf32, #tpu.memory_space<vmem>>, vector<1x1x32xf32>
    %133 = vector.shape_cast %132 : vector<1x1x32xf32> to vector<1x32xf32>
    %134 = vector.broadcast %133 : vector<1x32xf32> to vector<12x32xf32>
    %135 = arith.addf %131, %134 : vector<12x32xf32>
    %c1_78 = arith.constant 1 : index
    %c0_79 = arith.constant 0 : index
    %c0_80 = arith.constant 0 : index
    %136 = vector.load %arg21[%c1_78, %c0_79, %c0_80] : memref<3x1x32xf32, #tpu.memory_space<vmem>>, vector<1x1x32xf32>
    %137 = vector.shape_cast %136 : vector<1x1x32xf32> to vector<1x32xf32>
    %138 = vector.broadcast %137 : vector<1x32xf32> to vector<12x32xf32>
    %139 = arith.mulf %135, %138 : vector<12x32xf32>
    %c1_81 = arith.constant 1 : index
    %c0_82 = arith.constant 0 : index
    %c0_83 = arith.constant 0 : index
    %140 = vector.load %arg22[%c1_81, %c0_82, %c0_83] : memref<3x1x32xf32, #tpu.memory_space<vmem>>, vector<1x1x32xf32>
    %141 = vector.shape_cast %140 : vector<1x1x32xf32> to vector<1x32xf32>
    %142 = vector.broadcast %141 : vector<1x32xf32> to vector<12x32xf32>
    %143 = arith.addf %139, %142 : vector<12x32xf32>
    %cst_84 = arith.constant 0.000000e+00 : f32
    %144 = vector.broadcast %cst_84 : f32 to vector<12x32xf32>
    %145 = arith.cmpf ogt, %143, %144 : vector<12x32xf32>
    %cst_85 = arith.constant 1.000000e-01 : f32
    %146 = vector.broadcast %cst_85 : f32 to vector<12x32xf32>
    %147 = arith.mulf %146, %143 : vector<12x32xf32>
    %148 = arith.select %145, %143, %147 : vector<12x32xi1>, vector<12x32xf32>
    %c1_86 = arith.constant 1 : index
    %c0_87 = arith.constant 0 : index
    %c0_88 = arith.constant 0 : index
    %149 = vector.load %arg23[%c1_86, %c0_87, %c0_88] : memref<3x1x32xf32, #tpu.memory_space<vmem>>, vector<1x1x32xf32>
    %150 = vector.shape_cast %149 : vector<1x1x32xf32> to vector<1x32xf32>
    %c1_89 = arith.constant 1 : index
    %c0_90 = arith.constant 0 : index
    %c0_91 = arith.constant 0 : index
    %151 = vector.load %arg24[%c1_89, %c0_90, %c0_91] : memref<3x1x32xf32, #tpu.memory_space<vmem>>, vector<1x1x32xf32>
    %152 = vector.shape_cast %151 : vector<1x1x32xf32> to vector<1x32xf32>
    %cst_92 = arith.constant dense<0.000000e+00> : vector<12xf32>
    %153 = vector.multi_reduction <add>, %148, %cst_92 [1] : vector<12x32xf32> to vector<12xf32>
    %154 = vector.shape_cast %153 : vector<12xf32> to vector<12x1xf32>
    %cst_93 = arith.constant 3.200000e+01 : f32
    %155 = vector.broadcast %cst_93 : f32 to vector<12x1xf32>
    %156 = arith.divf %154, %155 : vector<12x1xf32>
    %157 = arith.mulf %148, %148 : vector<12x32xf32>
    %cst_94 = arith.constant dense<0.000000e+00> : vector<12xf32>
    %158 = vector.multi_reduction <add>, %157, %cst_94 [1] : vector<12x32xf32> to vector<12xf32>
    %159 = vector.shape_cast %158 : vector<12xf32> to vector<12x1xf32>
    %cst_95 = arith.constant 3.200000e+01 : f32
    %160 = vector.broadcast %cst_95 : f32 to vector<12x1xf32>
    %161 = arith.divf %159, %160 : vector<12x1xf32>
    %162 = arith.mulf %156, %156 : vector<12x1xf32>
    %163 = arith.subf %161, %162 : vector<12x1xf32>
    %164 = vector.broadcast %156 : vector<12x1xf32> to vector<12x32xf32>
    %165 = arith.subf %148, %164 : vector<12x32xf32>
    %cst_96 = arith.constant 9.99999974E-6 : f32
    %166 = vector.broadcast %cst_96 : f32 to vector<12x1xf32>
    %167 = arith.addf %163, %166 : vector<12x1xf32>
    %168 = math.rsqrt %167 : vector<12x1xf32>
    %169 = vector.broadcast %168 : vector<12x1xf32> to vector<12x32xf32>
    %170 = arith.mulf %165, %169 : vector<12x32xf32>
    %171 = vector.broadcast %150 : vector<1x32xf32> to vector<12x32xf32>
    %172 = arith.mulf %170, %171 : vector<12x32xf32>
    %173 = vector.broadcast %152 : vector<1x32xf32> to vector<12x32xf32>
    %174 = arith.addf %172, %173 : vector<12x32xf32>
    %cst_97 = arith.constant 0.000000e+00 : f32
    %175 = vector.broadcast %cst_97 : f32 to vector<12x32xf32>
    %176 = arith.cmpf ogt, %174, %175 : vector<12x32xf32>
    %cst_98 = arith.constant 1.000000e-01 : f32
    %177 = vector.broadcast %cst_98 : f32 to vector<12x32xf32>
    %178 = arith.mulf %177, %174 : vector<12x32xf32>
    %179 = arith.select %176, %174, %178 : vector<12x32xi1>, vector<12x32xf32>
    %cst_99 = arith.constant dense<0.000000e+00> : vector<12x32xf32>
    %180 = tpu.matmul %71, %179, %cst_99 {dimension_numbers = #tpu.dot_dimension_numbers<[1], [0], [0], [1], [0, 0, 1, 1], [], []>} : vector<12x12xf32>, vector<12x32xf32>, vector<12x32xf32> -> vector<12x32xf32>
    %181 = arith.subf %180, %70 : vector<12x32xf32>
    %182 = tpu.concatenate %181, %179 in 1 : vector<12x32xf32>, vector<12x32xf32> -> vector<12x64xf32>
    %c2 = arith.constant 2 : index
    %c0_100 = arith.constant 0 : index
    %c0_101 = arith.constant 0 : index
    %183 = vector.load %arg19[%c2, %c0_100, %c0_101] : memref<3x64x32xf32, #tpu.memory_space<vmem>>, vector<1x64x32xf32>
    %184 = vector.shape_cast %183 : vector<1x64x32xf32> to vector<64x32xf32>
    %cst_102 = arith.constant dense<0.000000e+00> : vector<12x32xf32>
    %185 = tpu.matmul %182, %184, %cst_102 {dimension_numbers = #tpu.dot_dimension_numbers<[1], [0], [0], [1], [0, 0, 1, 1], [], []>} : vector<12x64xf32>, vector<64x32xf32>, vector<12x32xf32> -> vector<12x32xf32>
    %c2_103 = arith.constant 2 : index
    %c0_104 = arith.constant 0 : index
    %c0_105 = arith.constant 0 : index
    %186 = vector.load %arg20[%c2_103, %c0_104, %c0_105] : memref<3x1x32xf32, #tpu.memory_space<vmem>>, vector<1x1x32xf32>
    %187 = vector.shape_cast %186 : vector<1x1x32xf32> to vector<1x32xf32>
    %188 = vector.broadcast %187 : vector<1x32xf32> to vector<12x32xf32>
    %189 = arith.addf %185, %188 : vector<12x32xf32>
    %c2_106 = arith.constant 2 : index
    %c0_107 = arith.constant 0 : index
    %c0_108 = arith.constant 0 : index
    %190 = vector.load %arg21[%c2_106, %c0_107, %c0_108] : memref<3x1x32xf32, #tpu.memory_space<vmem>>, vector<1x1x32xf32>
    %191 = vector.shape_cast %190 : vector<1x1x32xf32> to vector<1x32xf32>
    %192 = vector.broadcast %191 : vector<1x32xf32> to vector<12x32xf32>
    %193 = arith.mulf %189, %192 : vector<12x32xf32>
    %c2_109 = arith.constant 2 : index
    %c0_110 = arith.constant 0 : index
    %c0_111 = arith.constant 0 : index
    %194 = vector.load %arg22[%c2_109, %c0_110, %c0_111] : memref<3x1x32xf32, #tpu.memory_space<vmem>>, vector<1x1x32xf32>
    %195 = vector.shape_cast %194 : vector<1x1x32xf32> to vector<1x32xf32>
    %196 = vector.broadcast %195 : vector<1x32xf32> to vector<12x32xf32>
    %197 = arith.addf %193, %196 : vector<12x32xf32>
    %cst_112 = arith.constant 0.000000e+00 : f32
    %198 = vector.broadcast %cst_112 : f32 to vector<12x32xf32>
    %199 = arith.cmpf ogt, %197, %198 : vector<12x32xf32>
    %cst_113 = arith.constant 1.000000e-01 : f32
    %200 = vector.broadcast %cst_113 : f32 to vector<12x32xf32>
    %201 = arith.mulf %200, %197 : vector<12x32xf32>
    %202 = arith.select %199, %197, %201 : vector<12x32xi1>, vector<12x32xf32>
    %c2_114 = arith.constant 2 : index
    %c0_115 = arith.constant 0 : index
    %c0_116 = arith.constant 0 : index
    %203 = vector.load %arg23[%c2_114, %c0_115, %c0_116] : memref<3x1x32xf32, #tpu.memory_space<vmem>>, vector<1x1x32xf32>
    %204 = vector.shape_cast %203 : vector<1x1x32xf32> to vector<1x32xf32>
    %c2_117 = arith.constant 2 : index
    %c0_118 = arith.constant 0 : index
    %c0_119 = arith.constant 0 : index
    %205 = vector.load %arg24[%c2_117, %c0_118, %c0_119] : memref<3x1x32xf32, #tpu.memory_space<vmem>>, vector<1x1x32xf32>
    %206 = vector.shape_cast %205 : vector<1x1x32xf32> to vector<1x32xf32>
    %cst_120 = arith.constant dense<0.000000e+00> : vector<12xf32>
    %207 = vector.multi_reduction <add>, %202, %cst_120 [1] : vector<12x32xf32> to vector<12xf32>
    %208 = vector.shape_cast %207 : vector<12xf32> to vector<12x1xf32>
    %cst_121 = arith.constant 3.200000e+01 : f32
    %209 = vector.broadcast %cst_121 : f32 to vector<12x1xf32>
    %210 = arith.divf %208, %209 : vector<12x1xf32>
    %211 = arith.mulf %202, %202 : vector<12x32xf32>
    %cst_122 = arith.constant dense<0.000000e+00> : vector<12xf32>
    %212 = vector.multi_reduction <add>, %211, %cst_122 [1] : vector<12x32xf32> to vector<12xf32>
    %213 = vector.shape_cast %212 : vector<12xf32> to vector<12x1xf32>
    %cst_123 = arith.constant 3.200000e+01 : f32
    %214 = vector.broadcast %cst_123 : f32 to vector<12x1xf32>
    %215 = arith.divf %213, %214 : vector<12x1xf32>
    %216 = arith.mulf %210, %210 : vector<12x1xf32>
    %217 = arith.subf %215, %216 : vector<12x1xf32>
    %218 = vector.broadcast %210 : vector<12x1xf32> to vector<12x32xf32>
    %219 = arith.subf %202, %218 : vector<12x32xf32>
    %cst_124 = arith.constant 9.99999974E-6 : f32
    %220 = vector.broadcast %cst_124 : f32 to vector<12x1xf32>
    %221 = arith.addf %217, %220 : vector<12x1xf32>
    %222 = math.rsqrt %221 : vector<12x1xf32>
    %223 = vector.broadcast %222 : vector<12x1xf32> to vector<12x32xf32>
    %224 = arith.mulf %219, %223 : vector<12x32xf32>
    %225 = vector.broadcast %204 : vector<1x32xf32> to vector<12x32xf32>
    %226 = arith.mulf %224, %225 : vector<12x32xf32>
    %227 = vector.broadcast %206 : vector<1x32xf32> to vector<12x32xf32>
    %228 = arith.addf %226, %227 : vector<12x32xf32>
    %c0_125 = arith.constant 0 : index
    %c0_126 = arith.constant 0 : index
    %229 = vector.load %arg6[%c0_125, %c0_126] : memref<12x3xf32, #tpu.memory_space<vmem>>, vector<12x3xf32>
    %c0_127 = arith.constant 0 : index
    %c0_128 = arith.constant 0 : index
    %230 = vector.load %arg25[%c0_127, %c0_128] : memref<32x64xf32, #tpu.memory_space<vmem>>, vector<32x64xf32>
    %cst_129 = arith.constant dense<0.000000e+00> : vector<12x64xf32>
    %231 = tpu.matmul %228, %230, %cst_129 {dimension_numbers = #tpu.dot_dimension_numbers<[1], [0], [0], [1], [0, 0, 1, 1], [], []>} : vector<12x32xf32>, vector<32x64xf32>, vector<12x64xf32> -> vector<12x64xf32>
    %c0_130 = arith.constant 0 : index
    %c0_131 = arith.constant 0 : index
    %232 = vector.load %arg26[%c0_130, %c0_131] : memref<1x64xf32, #tpu.memory_space<vmem>>, vector<1x64xf32>
    %233 = vector.broadcast %232 : vector<1x64xf32> to vector<12x64xf32>
    %234 = arith.mulf %231, %233 : vector<12x64xf32>
    %c0_132 = arith.constant 0 : index
    %c0_133 = arith.constant 0 : index
    %235 = vector.load %arg27[%c0_132, %c0_133] : memref<64x4xf32, #tpu.memory_space<vmem>>, vector<64x4xf32>
    %cst_134 = arith.constant dense<0.000000e+00> : vector<12x4xf32>
    %236 = tpu.matmul %234, %235, %cst_134 {dimension_numbers = #tpu.dot_dimension_numbers<[1], [0], [0], [1], [0, 0, 1, 1], [], []>} : vector<12x64xf32>, vector<64x4xf32>, vector<12x4xf32> -> vector<12x4xf32>
    %237 = vector.shape_cast %229 : vector<12x3xf32> to vector<12x3x1xf32>
    %cst_135 = arith.constant 5.000000e-01 : f32
    %238 = vector.broadcast %cst_135 : f32 to vector<12x3x1xf32>
    %239 = arith.cmpf ogt, %237, %238 : vector<12x3x1xf32>
    %240 = vector.shape_cast %236 : vector<12x4xf32> to vector<12x1x4xf32>
    %cst_136 = arith.constant -1.000000e+30 : f32
    %241 = vector.shape_cast %239 : vector<12x3x1xi1> to vector<12x3x1xi1>
    %242 = vector.broadcast %241 : vector<12x3x1xi1> to vector<12x3x4xi1>
    %243 = vector.shape_cast %240 : vector<12x1x4xf32> to vector<12x1x4xf32>
    %244 = vector.broadcast %243 : vector<12x1x4xf32> to vector<12x3x4xf32>
    %245 = vector.broadcast %cst_136 : f32 to vector<12x3x4xf32>
    %246 = arith.select %242, %244, %245 : vector<12x3x4xi1>, vector<12x3x4xf32>
    %cst_137 = arith.constant dense<0xFF800000> : vector<3x4xf32>
    %247 = vector.multi_reduction <maximumf>, %246, %cst_137 [0] : vector<12x3x4xf32> to vector<3x4xf32>
    %cst_138 = arith.constant dense<0.000000e+00> : vector<12x4xf32>
    %248 = tpu.matmul %229, %247, %cst_138 {dimension_numbers = #tpu.dot_dimension_numbers<[1], [0], [0], [1], [0, 0, 1, 1], [], []>} : vector<12x3xf32>, vector<3x4xf32>, vector<12x4xf32> -> vector<12x4xf32>
    %249 = arith.subf %236, %248 : vector<12x4xf32>
    %250 = math.exp %249 : vector<12x4xf32>
    %c0_139 = arith.constant 0 : index
    %c0_140 = arith.constant 0 : index
    %251 = vector.load %arg5[%c0_139, %c0_140] : memref<3x12xf32, #tpu.memory_space<vmem>>, vector<3x12xf32>
    %cst_141 = arith.constant dense<0.000000e+00> : vector<3x4xf32>
    %252 = tpu.matmul %251, %250, %cst_141 {dimension_numbers = #tpu.dot_dimension_numbers<[1], [0], [0], [1], [0, 0, 1, 1], [], []>} : vector<3x12xf32>, vector<12x4xf32>, vector<3x4xf32> -> vector<3x4xf32>
    %cst_142 = arith.constant dense<0.000000e+00> : vector<12x4xf32>
    %253 = tpu.matmul %229, %252, %cst_142 {dimension_numbers = #tpu.dot_dimension_numbers<[1], [0], [0], [1], [0, 0, 1, 1], [], []>} : vector<12x3xf32>, vector<3x4xf32>, vector<12x4xf32> -> vector<12x4xf32>
    %254 = tpu.reciprocal %253 {approx = true} : vector<12x4xf32> -> vector<12x4xf32>
    %255 = arith.mulf %250, %254 : vector<12x4xf32>
    %c0_143 = arith.constant 0 : index
    %c0_144 = arith.constant 0 : index
    %256 = vector.load %arg28[%c0_143, %c0_144] : memref<4x64xf32, #tpu.memory_space<vmem>>, vector<4x64xf32>
    %cst_145 = arith.constant dense<0.000000e+00> : vector<12x64xf32>
    %257 = tpu.matmul %255, %256, %cst_145 {dimension_numbers = #tpu.dot_dimension_numbers<[1], [0], [0], [1], [0, 0, 1, 1], [], []>} : vector<12x4xf32>, vector<4x64xf32>, vector<12x64xf32> -> vector<12x64xf32>
    %c0_146 = arith.constant 0 : index
    %c0_147 = arith.constant 0 : index
    %258 = vector.load %arg5[%c0_146, %c0_147] : memref<3x12xf32, #tpu.memory_space<vmem>>, vector<3x12xf32>
    %259 = arith.mulf %231, %257 : vector<12x64xf32>
    %cst_148 = arith.constant dense<0.000000e+00> : vector<3x64xf32>
    %260 = tpu.matmul %258, %259, %cst_148 {dimension_numbers = #tpu.dot_dimension_numbers<[1], [0], [0], [1], [0, 0, 1, 1], [], []>} : vector<3x12xf32>, vector<12x64xf32>, vector<3x64xf32> -> vector<3x64xf32>
    %c0_149 = arith.constant 0 : index
    %c0_150 = arith.constant 0 : index
    %261 = vector.load %arg29[%c0_149, %c0_150] : memref<1x64xf32, #tpu.memory_space<vmem>>, vector<1x64xf32>
    %c0_151 = arith.constant 0 : index
    %c0_152 = arith.constant 0 : index
    %262 = vector.load %arg30[%c0_151, %c0_152] : memref<1x64xf32, #tpu.memory_space<vmem>>, vector<1x64xf32>
    %cst_153 = arith.constant dense<0.000000e+00> : vector<3xf32>
    %263 = vector.multi_reduction <add>, %260, %cst_153 [1] : vector<3x64xf32> to vector<3xf32>
    %264 = vector.shape_cast %263 : vector<3xf32> to vector<3x1xf32>
    %cst_154 = arith.constant 6.400000e+01 : f32
    %265 = vector.broadcast %cst_154 : f32 to vector<3x1xf32>
    %266 = arith.divf %264, %265 : vector<3x1xf32>
    %267 = arith.mulf %260, %260 : vector<3x64xf32>
    %cst_155 = arith.constant dense<0.000000e+00> : vector<3xf32>
    %268 = vector.multi_reduction <add>, %267, %cst_155 [1] : vector<3x64xf32> to vector<3xf32>
    %269 = vector.shape_cast %268 : vector<3xf32> to vector<3x1xf32>
    %cst_156 = arith.constant 6.400000e+01 : f32
    %270 = vector.broadcast %cst_156 : f32 to vector<3x1xf32>
    %271 = arith.divf %269, %270 : vector<3x1xf32>
    %272 = arith.mulf %266, %266 : vector<3x1xf32>
    %273 = arith.subf %271, %272 : vector<3x1xf32>
    %274 = vector.broadcast %266 : vector<3x1xf32> to vector<3x64xf32>
    %275 = arith.subf %260, %274 : vector<3x64xf32>
    %cst_157 = arith.constant 9.99999974E-6 : f32
    %276 = vector.broadcast %cst_157 : f32 to vector<3x1xf32>
    %277 = arith.addf %273, %276 : vector<3x1xf32>
    %278 = math.rsqrt %277 : vector<3x1xf32>
    %279 = vector.broadcast %278 : vector<3x1xf32> to vector<3x64xf32>
    %280 = arith.mulf %275, %279 : vector<3x64xf32>
    %281 = vector.broadcast %261 : vector<1x64xf32> to vector<3x64xf32>
    %282 = arith.mulf %280, %281 : vector<3x64xf32>
    %283 = vector.broadcast %262 : vector<1x64xf32> to vector<3x64xf32>
    %284 = arith.addf %282, %283 : vector<3x64xf32>
    %c0_158 = arith.constant 0 : index
    %c0_159 = arith.constant 0 : index
    %285 = vector.load %arg7[%c0_158, %c0_159] : memref<3x12xf32, #tpu.memory_space<vmem>>, vector<3x12xf32>
    %cst_160 = arith.constant dense<0.000000e+00> : vector<3x32xf32>
    %286 = tpu.matmul %285, %228, %cst_160 {dimension_numbers = #tpu.dot_dimension_numbers<[1], [0], [0], [1], [0, 0, 1, 1], [], []>} : vector<3x12xf32>, vector<12x32xf32>, vector<3x32xf32> -> vector<3x32xf32>
    %c0_161 = arith.constant 0 : index
    %c0_162 = arith.constant 0 : index
    %287 = vector.load %arg8[%c0_161, %c0_162] : memref<3x12xf32, #tpu.memory_space<vmem>>, vector<3x12xf32>
    %cst_163 = arith.constant dense<0.000000e+00> : vector<3x32xf32>
    %288 = tpu.matmul %287, %228, %cst_163 {dimension_numbers = #tpu.dot_dimension_numbers<[1], [0], [0], [1], [0, 0, 1, 1], [], []>} : vector<3x12xf32>, vector<12x32xf32>, vector<3x32xf32> -> vector<3x32xf32>
    %c0_164 = arith.constant 0 : index
    %c0_165 = arith.constant 0 : index
    %289 = vector.load %arg31[%c0_164, %c0_165] : memref<64x32xf32, #tpu.memory_space<vmem>>, vector<64x32xf32>
    %cst_166 = arith.constant dense<0.000000e+00> : vector<3x32xf32>
    %290 = tpu.matmul %284, %289, %cst_166 {dimension_numbers = #tpu.dot_dimension_numbers<[1], [0], [0], [1], [0, 0, 1, 1], [], []>} : vector<3x64xf32>, vector<64x32xf32>, vector<3x32xf32> -> vector<3x32xf32>
    %c0_167 = arith.constant 0 : index
    %c0_168 = arith.constant 0 : index
    %291 = vector.load %arg32[%c0_167, %c0_168] : memref<32x32xf32, #tpu.memory_space<vmem>>, vector<32x32xf32>
    %cst_169 = arith.constant dense<0.000000e+00> : vector<3x32xf32>
    %292 = tpu.matmul %286, %291, %cst_169 {dimension_numbers = #tpu.dot_dimension_numbers<[1], [0], [0], [1], [0, 0, 1, 1], [], []>} : vector<3x32xf32>, vector<32x32xf32>, vector<3x32xf32> -> vector<3x32xf32>
    %293 = arith.addf %290, %292 : vector<3x32xf32>
    %c0_170 = arith.constant 0 : index
    %c0_171 = arith.constant 0 : index
    %294 = vector.load %arg33[%c0_170, %c0_171] : memref<32x32xf32, #tpu.memory_space<vmem>>, vector<32x32xf32>
    %cst_172 = arith.constant dense<0.000000e+00> : vector<3x32xf32>
    %295 = tpu.matmul %288, %294, %cst_172 {dimension_numbers = #tpu.dot_dimension_numbers<[1], [0], [0], [1], [0, 0, 1, 1], [], []>} : vector<3x32xf32>, vector<32x32xf32>, vector<3x32xf32> -> vector<3x32xf32>
    %296 = arith.addf %293, %295 : vector<3x32xf32>
    %c0_173 = arith.constant 0 : index
    %c0_174 = arith.constant 0 : index
    %297 = vector.load %arg34[%c0_173, %c0_174] : memref<1x32xf32, #tpu.memory_space<vmem>>, vector<1x32xf32>
    %298 = vector.broadcast %297 : vector<1x32xf32> to vector<3x32xf32>
    %299 = arith.addf %296, %298 : vector<3x32xf32>
    %cst_175 = arith.constant 0.000000e+00 : f32
    %300 = vector.broadcast %cst_175 : f32 to vector<3x32xf32>
    %301 = arith.cmpf ogt, %299, %300 : vector<3x32xf32>
    %cst_176 = arith.constant 1.000000e-01 : f32
    %302 = vector.broadcast %cst_176 : f32 to vector<3x32xf32>
    %303 = arith.mulf %302, %299 : vector<3x32xf32>
    %304 = arith.select %301, %299, %303 : vector<3x32xi1>, vector<3x32xf32>
    %c0_177 = arith.constant 0 : index
    %c0_178 = arith.constant 0 : index
    %305 = vector.load %arg35[%c0_177, %c0_178] : memref<32x16xf32, #tpu.memory_space<vmem>>, vector<32x16xf32>
    %cst_179 = arith.constant dense<0.000000e+00> : vector<3x16xf32>
    %306 = tpu.matmul %304, %305, %cst_179 {dimension_numbers = #tpu.dot_dimension_numbers<[1], [0], [0], [1], [0, 0, 1, 1], [], []>} : vector<3x32xf32>, vector<32x16xf32>, vector<3x16xf32> -> vector<3x16xf32>
    %c0_180 = arith.constant 0 : index
    %c0_181 = arith.constant 0 : index
    %307 = vector.load %arg36[%c0_180, %c0_181] : memref<1x16xf32, #tpu.memory_space<vmem>>, vector<1x16xf32>
    %308 = vector.broadcast %307 : vector<1x16xf32> to vector<3x16xf32>
    %309 = arith.addf %306, %308 : vector<3x16xf32>
    %cst_182 = arith.constant 0.000000e+00 : f32
    %310 = vector.broadcast %cst_182 : f32 to vector<3x16xf32>
    %311 = arith.cmpf ogt, %309, %310 : vector<3x16xf32>
    %cst_183 = arith.constant 1.000000e-01 : f32
    %312 = vector.broadcast %cst_183 : f32 to vector<3x16xf32>
    %313 = arith.mulf %312, %309 : vector<3x16xf32>
    %314 = arith.select %311, %309, %313 : vector<3x16xi1>, vector<3x16xf32>
    %c0_184 = arith.constant 0 : index
    %c0_185 = arith.constant 0 : index
    %315 = vector.load %arg37[%c0_184, %c0_185] : memref<1x16xf32, #tpu.memory_space<vmem>>, vector<1x16xf32>
    %316 = vector.broadcast %315 : vector<1x16xf32> to vector<3x16xf32>
    %317 = arith.mulf %314, %316 : vector<3x16xf32>
    %cst_186 = arith.constant dense<0.000000e+00> : vector<3xf32>
    %318 = vector.multi_reduction <add>, %317, %cst_186 [1] : vector<3x16xf32> to vector<3xf32>
    %319 = vector.shape_cast %318 : vector<3xf32> to vector<3x1xf32>
    %c0_187 = arith.constant 0 : index
    %c0_188 = arith.constant 0 : index
    %320 = vector.load %arg38[%c0_187, %c0_188] : memref<1x1xf32, #tpu.memory_space<vmem>>, vector<1x1xf32>
    %321 = vector.broadcast %320 : vector<1x1xf32> to vector<3x1xf32>
    %322 = arith.addf %319, %321 : vector<3x1xf32>
    %323 = vector.shape_cast %322 : vector<3x1xf32> to vector<3x1xf32>
    %324 = vector.broadcast %323 : vector<3x1xf32> to vector<3x128xf32>
    %c0_189 = arith.constant 0 : index
    %c0_190 = arith.constant 0 : index
    %325 = vector.load %arg39[%c0_189, %c0_190] : memref<3x128xf32, #tpu.memory_space<vmem>>, vector<3x128xf32>
    tpu.vector_store %arg39[%c0_189, %c0_190], %324 {strides = array<i32>} : memref<3x128xf32, #tpu.memory_space<vmem>>, vector<3x128xf32>,
    return
  }
}

</mosaic_0001>

<llo_original>
// kernel: rasg_forward.1
$region0: #{rasg_forward.1}
  #allocation0 [shape = 'u32[]', space=smem, size = 0x4, offset = 0x4, fixed_abs, tag = 'smem constant byte address 0x4 - core index']
  #allocation1 [shape = 'u32[144,128]{1,0:T(1,128)}', space=vmem, size = 0x12000, scoped, tag = 'internal scratch']
  #allocation2 [shape = 'f32[1,1]{1,0:T(1,128)S(1)}', space=vmem, size = 0x200, scoped, tag = 'scoped memory for rasg_forward.1']
  %s0 = inlined_call_operand.smem [shape: u32[40], index: -1, kind: input, shape index: {}]
  %s1 = sld [smem:[%s0]]
  %s2 = scalar_lea.smem %s0, 1
  %s3 = sld [smem:[%s2]]
  %s4 = scalar_lea.smem %s0, 2
  %s5 = sld [smem:[%s4]]
  %s6 = scalar_lea.smem %s0, 3
  %s7 = sld [smem:[%s6]]
  %s8 = scalar_lea.smem %s0, 4
  %s9 = sld [smem:[%s8]]
  %s10 = scalar_lea.smem %s0, 5
  %s11 = sld [smem:[%s10]]
  %s12 = scalar_lea.smem %s0, 6
  %s13 = sld [smem:[%s12]]
  %s14 = scalar_lea.smem %s0, 7
  %s15 = sld [smem:[%s14]]
  %s16 = scalar_lea.smem %s0, 8
  %s17 = sld [smem:[%s16]]
  %s18 = scalar_lea.smem %s0, 9
  %s19 = sld [smem:[%s18]]
  %s20 = scalar_lea.smem %s0, 10
  %s21 = sld [smem:[%s20]]
  %s22 = scalar_lea.smem %s0, 11
  %s23 = sld [smem:[%s22]]
  %s24 = scalar_lea.smem %s0, 12
  %s25 = sld [smem:[%s24]]
  %s26 = scalar_lea.smem %s0, 13
  %s27 = sld [smem:[%s26]]
  %s28 = scalar_lea.smem %s0, 14
  %s29 = sld [smem:[%s28]]
  %s30 = scalar_lea.smem %s0, 15
  %s31 = sld [smem:[%s30]]
  %s32 = scalar_lea.smem %s0, 16
  %s33 = sld [smem:[%s32]]
  %s34 = scalar_lea.smem %s0, 17
  %s35 = sld [smem:[%s34]]
  %s36 = scalar_lea.smem %s0, 18
  %s37 = sld [smem:[%s36]]
  %s38 = scalar_lea.smem %s0, 19
  %s39 = sld [smem:[%s38]]
  %s40 = scalar_lea.smem %s0, 20
  %s41 = sld [smem:[%s40]]
  %s42 = scalar_lea.smem %s0, 21
  %s43 = sld [smem:[%s42]]
  %s44 = scalar_lea.smem %s0, 22
  %s45 = sld [smem:[%s44]]
  %s46 = scalar_lea.smem %s0, 23
  %s47 = sld [smem:[%s46]]
  %s48 = scalar_lea.smem %s0, 24
  %s49 = sld [smem:[%s48]]
  %s50 = scalar_lea.smem %s0, 25
  %s51 = sld [smem:[%s50]]
  %s52 = scalar_lea.smem %s0, 26
  %s53 = sld [smem:[%s52]]
  %s54 = scalar_lea.smem %s0, 27
  %s55 = sld [smem:[%s54]]
  %s56 = scalar_lea.smem %s0, 28
  %s57 = sld [smem:[%s56]]
  %s58 = scalar_lea.smem %s0, 29
  %s59 = sld [smem:[%s58]]
  %s60 = scalar_lea.smem %s0, 30
  %s61 = sld [smem:[%s60]]
  %s62 = scalar_lea.smem %s0, 31
  %s63 = sld [smem:[%s62]]
  %s64 = scalar_lea.smem %s0, 32
  %s65 = sld [smem:[%s64]]
  %s66 = scalar_lea.smem %s0, 33
  %s67 = sld [smem:[%s66]]
  %s68 = scalar_lea.smem %s0, 34
  %s69 = sld [smem:[%s68]]
  %s70 = scalar_lea.smem %s0, 35
  %s71 = sld [smem:[%s70]]
  %s72 = scalar_lea.smem %s0, 36
  %s73 = sld [smem:[%s72]]
  %s74 = scalar_lea.smem %s0, 37
  %s75 = sld [smem:[%s74]]
  %s76 = scalar_lea.smem %s0, 38
  %s77 = sld [smem:[%s76]]
  %s78 = scalar_lea.smem %s0, 39
  %s79 = sld [smem:[%s78]]
  %s80 = sld [smem:[#allocation0]]
  $region170: #{rasg_forward.1} parent=0
    _
  %s82 = ssub.s32 1, %s80
  %s83 = scalar_select 0, %s82, %s80
  %v84 = vstv %s77
  %85 = vst [vmem:[#allocation2] sm:$0x1] %v84
  $region1: #{rasg_forward.1} parent=0
    #allocation3 [shape = 'u8[8192]{0}', space=vmem, size = 0x2000, scoped, tag = 'input window, operand 4, single buffered']
    #allocation4 [shape = 's32[1]{0}', space=sflag, size = 0x4, scoped, tag = 'scoped memory for rasg_forward.1']
    %86 = vsyncpa [#allocation4], 0
    // Predicated region
    $region2: #{rasg_forward.1} parent=1 // pred_check
      _
    $region3: #{rasg_forward.1} parent=1 // pred_check_branch
      %88 = sbr.rel (0) target = $region5
    $region4: #{rasg_forward.1} parent=1 // pred_region
      _
    $region5: #{rasg_forward.1} parent=1 // pred_fallthru
      _
    // Predicated region
    $region6: #{rasg_forward.1} parent=1 // pred_check
      _
    $region7: #{rasg_forward.1} parent=1 // pred_check_branch
      %90 = sbr.rel (0) target = $region9
    $region8: #{rasg_forward.1} parent=1 // pred_region
      _
    $region9: #{rasg_forward.1} parent=1 // pred_fallthru
      _
    // Predicated region
    $region10: #{rasg_forward.1} parent=1 // pred_check
      _
    $region11: #{rasg_forward.1} parent=1 // pred_check_branch
      %92 = sbr.rel (0) target = $region13
    $region12: #{rasg_forward.1} parent=1 // pred_region
      _
    $region13: #{rasg_forward.1} parent=1 // pred_fallthru
      _
    // Predicated region
    $region14: #{rasg_forward.1} parent=1 // pred_check
      _
    $region15: #{rasg_forward.1} parent=1 // pred_check_branch
      %94 = sbr.rel (0) target = $region17
    $region16: #{rasg_forward.1} parent=1 // pred_region
      _
    $region17: #{rasg_forward.1} parent=1 // pred_fallthru
      _
    // Predicated region
    $region18: #{rasg_forward.1} parent=1 // pred_check
      _
    $region19: #{rasg_forward.1} parent=1 // pred_check_branch
      %96 = sbr.rel (0) target = $region21
    $region20: #{rasg_forward.1} parent=1 // pred_region
      %s98 = ssub.s32 256, 256
      %99 = vsyncadd [#allocation4], %s98
      %s100 = sshll.u32 [#allocation3], 4
      %s101 = int_to_ptr.vmem [resolvable:$true] %s100
      %106 = dma.hbm_to_vmem [thread:$0]  %s9, 256, %s101, [#allocation4], 128, 128, 8
    $region21: #{rasg_forward.1} parent=1 // pred_fallthru
      _
    // Predicated region
    $region22: #{rasg_forward.1} parent=1 // pred_check
      _
    $region23: #{rasg_forward.1} parent=1 // pred_check_branch
      %108 = sbr.rel (0) target = $region25
    $region24: #{rasg_forward.1} parent=1 // pred_region
      _
    $region25: #{rasg_forward.1} parent=1 // pred_fallthru
      _
    // Predicated region
    $region26: #{rasg_forward.1} parent=1 // pred_check
      _
    $region27: #{rasg_forward.1} parent=1 // pred_check_branch
      %110 = sbr.rel (0) target = $region29
    $region28: #{rasg_forward.1} parent=1 // pred_region
      _
    $region29: #{rasg_forward.1} parent=1 // pred_fallthru
      _
    // Predicated region
    $region30: #{rasg_forward.1} parent=1 // pred_check
      _
    $region31: #{rasg_forward.1} parent=1 // pred_check_branch
      %112 = sbr.rel (0) target = $region33
    $region32: #{rasg_forward.1} parent=1 // pred_region
      _
    $region33: #{rasg_forward.1} parent=1 // pred_fallthru
      _
    // Predicated region
    $region34: #{rasg_forward.1} parent=1 // pred_check
      _
    $region35: #{rasg_forward.1} parent=1 // pred_check_branch
      %114 = sbr.rel (0) target = $region37
    $region36: #{rasg_forward.1} parent=1 // pred_region
      _
    $region37: #{rasg_forward.1} parent=1 // pred_fallthru
      _
    // Predicated region
    $region38: #{rasg_forward.1} parent=1 // pred_check
      _
    $region39: #{rasg_forward.1} parent=1 // pred_check_branch
      %116 = sbr.rel (0) target = $region41
    $region40: #{rasg_forward.1} parent=1 // pred_region
      _
    $region41: #{rasg_forward.1} parent=1 // pred_fallthru
      _
    // Predicated region
    $region42: #{rasg_forward.1} parent=1 // pred_check
      _
    $region43: #{rasg_forward.1} parent=1 // pred_check_branch
      %118 = sbr.rel (0) target = $region45
    $region44: #{rasg_forward.1} parent=1 // pred_region
      _
    $region45: #{rasg_forward.1} parent=1 // pred_fallthru
      _
    // Predicated region
    $region46: #{rasg_forward.1} parent=1 // pred_check
      _
    $region47: #{rasg_forward.1} parent=1 // pred_check_branch
      %120 = sbr.rel (0) target = $region49
    $region48: #{rasg_forward.1} parent=1 // pred_region
      _
    $region49: #{rasg_forward.1} parent=1 // pred_fallthru
      _
    // Predicated region
    $region50: #{rasg_forward.1} parent=1 // pred_check
      _
    $region51: #{rasg_forward.1} parent=1 // pred_check_branch
      %122 = sbr.rel (0) target = $region53
    $region52: #{rasg_forward.1} parent=1 // pred_region
      _
    $region53: #{rasg_forward.1} parent=1 // pred_fallthru
      _
    // Predicated region
    $region54: #{rasg_forward.1} parent=1 // pred_check
      _
    $region55: #{rasg_forward.1} parent=1 // pred_check_branch
      %124 = sbr.rel (0) target = $region57
    $region56: #{rasg_forward.1} parent=1 // pred_region
      _
    $region57: #{rasg_forward.1} parent=1 // pred_fallthru
      _
    // Predicated region
    $region58: #{rasg_forward.1} parent=1 // pred_check
      _
    $region59: #{rasg_forward.1} parent=1 // pred_check_branch
      %126 = sbr.rel (0) target = $region61
    $region60: #{rasg_forward.1} parent=1 // pred_region
      _
    $region61: #{rasg_forward.1} parent=1 // pred_fallthru
      _
    // Predicated region
    $region62: #{rasg_forward.1} parent=1 // pred_check
      _
    $region63: #{rasg_forward.1} parent=1 // pred_check_branch
      %128 = sbr.rel (0) target = $region65
    $region64: #{rasg_forward.1} parent=1 // pred_region
      _
    $region65: #{rasg_forward.1} parent=1 // pred_fallthru
      _
    // Predicated region
    $region66: #{rasg_forward.1} parent=1 // pred_check
      _
    $region67: #{rasg_forward.1} parent=1 // pred_check_branch
      %130 = sbr.rel (0) target = $region69
    $region68: #{rasg_forward.1} parent=1 // pred_region
      _
    $region69: #{rasg_forward.1} parent=1 // pred_fallthru
      _
    // Predicated region
    $region70: #{rasg_forward.1} parent=1 // pred_check
      _
    $region71: #{rasg_forward.1} parent=1 // pred_check_branch
      %132 = sbr.rel (0) target = $region73
    $region72: #{rasg_forward.1} parent=1 // pred_region
      _
    $region73: #{rasg_forward.1} parent=1 // pred_fallthru
      _
    // Predicated region
    $region74: #{rasg_forward.1} parent=1 // pred_check
      _
    $region75: #{rasg_forward.1} parent=1 // pred_check_branch
      %134 = sbr.rel (0) target = $region77
    $region76: #{rasg_forward.1} parent=1 // pred_region
      _
    $region77: #{rasg_forward.1} parent=1 // pred_fallthru
      _
    // Predicated region
    $region78: #{rasg_forward.1} parent=1 // pred_check
      _
    $region79: #{rasg_forward.1} parent=1 // pred_check_branch
      %136 = sbr.rel (0) target = $region81
    $region80: #{rasg_forward.1} parent=1 // pred_region
      _
    $region81: #{rasg_forward.1} parent=1 // pred_fallthru
      _
    // Predicated region
    $region82: #{rasg_forward.1} parent=1 // pred_check
      _
    $region83: #{rasg_forward.1} parent=1 // pred_check_branch
      %138 = sbr.rel (0) target = $region85
    $region84: #{rasg_forward.1} parent=1 // pred_region
      _
    $region85: #{rasg_forward.1} parent=1 // pred_fallthru
      _
    // Predicated region
    $region86: #{rasg_forward.1} parent=1 // pred_check
      _
    $region87: #{rasg_forward.1} parent=1 // pred_check_branch
      %140 = sbr.rel (0) target = $region89
    $region88: #{rasg_forward.1} parent=1 // pred_region
      _
    $region89: #{rasg_forward.1} parent=1 // pred_fallthru
      _
    // Predicated region
    $region90: #{rasg_forward.1} parent=1 // pred_check
      _
    $region91: #{rasg_forward.1} parent=1 // pred_check_branch
      %142 = sbr.rel (0) target = $region93
    $region92: #{rasg_forward.1} parent=1 // pred_region
      _
    $region93: #{rasg_forward.1} parent=1 // pred_fallthru
      _
    // Predicated region
    $region94: #{rasg_forward.1} parent=1 // pred_check
      _
    $region95: #{rasg_forward.1} parent=1 // pred_check_branch
      %144 = sbr.rel (0) target = $region97
    $region96: #{rasg_forward.1} parent=1 // pred_region
      _
    $region97: #{rasg_forward.1} parent=1 // pred_fallthru
      _
    // Predicated region
    $region98: #{rasg_forward.1} parent=1 // pred_check
      _
    $region99: #{rasg_forward.1} parent=1 // pred_check_branch
      %146 = sbr.rel (0) target = $region101
    $region100: #{rasg_forward.1} parent=1 // pred_region
      _
    $region101: #{rasg_forward.1} parent=1 // pred_fallthru
      _
    // Predicated region
    $region102: #{rasg_forward.1} parent=1 // pred_check
      _
    $region103: #{rasg_forward.1} parent=1 // pred_check_branch
      %148 = sbr.rel (0) target = $region105
    $region104: #{rasg_forward.1} parent=1 // pred_region
      _
    $region105: #{rasg_forward.1} parent=1 // pred_fallthru
      _
    // Predicated region
    $region106: #{rasg_forward.1} parent=1 // pred_check
      _
    $region107: #{rasg_forward.1} parent=1 // pred_check_branch
      %150 = sbr.rel (0) target = $region109
    $region108: #{rasg_forward.1} parent=1 // pred_region
      _
    $region109: #{rasg_forward.1} parent=1 // pred_fallthru
      _
    // Predicated region
    $region110: #{rasg_forward.1} parent=1 // pred_check
      _
    $region111: #{rasg_forward.1} parent=1 // pred_check_branch
      %152 = sbr.rel (0) target = $region113
    $region112: #{rasg_forward.1} parent=1 // pred_region
      _
    $region113: #{rasg_forward.1} parent=1 // pred_fallthru
      _
    // Predicated region
    $region114: #{rasg_forward.1} parent=1 // pred_check
      _
    $region115: #{rasg_forward.1} parent=1 // pred_check_branch
      %154 = sbr.rel (0) target = $region117
    $region116: #{rasg_forward.1} parent=1 // pred_region
      _
    $region117: #{rasg_forward.1} parent=1 // pred_fallthru
      _
    // Predicated region
    $region118: #{rasg_forward.1} parent=1 // pred_check
      _
    $region119: #{rasg_forward.1} parent=1 // pred_check_branch
      %156 = sbr.rel (0) target = $region121
    $region120: #{rasg_forward.1} parent=1 // pred_region
      _
    $region121: #{rasg_forward.1} parent=1 // pred_fallthru
      _
    // Predicated region
    $region122: #{rasg_forward.1} parent=1 // pred_check
      _
    $region123: #{rasg_forward.1} parent=1 // pred_check_branch
      %158 = sbr.rel (0) target = $region125
    $region124: #{rasg_forward.1} parent=1 // pred_region
      _
    $region125: #{rasg_forward.1} parent=1 // pred_fallthru
      _
    // Predicated region
    $region126: #{rasg_forward.1} parent=1 // pred_check
      _
    $region127: #{rasg_forward.1} parent=1 // pred_check_branch
      %160 = sbr.rel (0) target = $region129
    $region128: #{rasg_forward.1} parent=1 // pred_region
      _
    $region129: #{rasg_forward.1} parent=1 // pred_fallthru
      _
    // Predicated region
    $region130: #{rasg_forward.1} parent=1 // pred_check
      _
    $region131: #{rasg_forward.1} parent=1 // pred_check_branch
      %162 = sbr.rel (0) target = $region133
    $region132: #{rasg_forward.1} parent=1 // pred_region
      _
    $region133: #{rasg_forward.1} parent=1 // pred_fallthru
      _
    // Predicated region
    $region134: #{rasg_forward.1} parent=1 // pred_check
      _
    $region135: #{rasg_forward.1} parent=1 // pred_check_branch
      %164 = sbr.rel (0) target = $region137
    $region136: #{rasg_forward.1} parent=1 // pred_region
      _
    $region137: #{rasg_forward.1} parent=1 // pred_fallthru
      _
    // Predicated region
    $region138: #{rasg_forward.1} parent=1 // pred_check
      _
    $region139: #{rasg_forward.1} parent=1 // pred_check_branch
      %166 = sbr.rel (0) target = $region141
    $region140: #{rasg_forward.1} parent=1 // pred_region
      _
    $region141: #{rasg_forward.1} parent=1 // pred_fallthru
      _
    // Predicated region
    $region142: #{rasg_forward.1} parent=1 // pred_check
      _
    $region143: #{rasg_forward.1} parent=1 // pred_check_branch
      %168 = sbr.rel (0) target = $region145
    $region144: #{rasg_forward.1} parent=1 // pred_region
      _
    $region145: #{rasg_forward.1} parent=1 // pred_fallthru
      _
    // Predicated region
    $region146: #{rasg_forward.1} parent=1 // pred_check
      _
    $region147: #{rasg_forward.1} parent=1 // pred_check_branch
      %170 = sbr.rel (0) target = $region149
    $region148: #{rasg_forward.1} parent=1 // pred_region
      _
    $region149: #{rasg_forward.1} parent=1 // pred_fallthru
      _
    // Predicated region
    $region150: #{rasg_forward.1} parent=1 // pred_check
      _
    $region151: #{rasg_forward.1} parent=1 // pred_check_branch
      %172 = sbr.rel (0) target = $region153
    $region152: #{rasg_forward.1} parent=1 // pred_region
      _
    $region153: #{rasg_forward.1} parent=1 // pred_fallthru
      _
    // Predicated region
    $region154: #{rasg_forward.1} parent=1 // pred_check
      _
    $region155: #{rasg_forward.1} parent=1 // pred_check_branch
      %174 = sbr.rel (0) target = $region157
    $region156: #{rasg_forward.1} parent=1 // pred_region
      _
    $region157: #{rasg_forward.1} parent=1 // pred_fallthru
      _
    // Predicated region
    $region158: #{rasg_forward.1} parent=1 // pred_check
      _
    $region159: #{rasg_forward.1} parent=1 // pred_check_branch
      %176 = sbr.rel (0) target = $region161
    $region160: #{rasg_forward.1} parent=1 // pred_region
      %177 = dma.done [#allocation4], 256
    $region161: #{rasg_forward.1} parent=1 // pred_fallthru
      _
    %v178 = vld [vmem:[%s1] sm:$0xff]
    %v179 = vld [vmem:[%s1 + $0x8] sm:$0xf]
    %v180 = vld [vmem:[%s19] sm:$0x3]
    %182 = vset.pattern.permute.xlu0 0
    %183 = vperm.xlu0 %182, %v178
    %v184 = vpop.permute.xlu0 %183
    %187 = vset.pattern.permute.xlu0 0
    %188 = vperm.xlu0 %187, %v179
    %v189 = vpop.permute.xlu0 %188
    %v191 = vlaneseq
    %v192 = vshrl.u32 %v191, 7
    %v193 = vsub.s32 0, %v192
    %v194 = vrot.slane %v180, %v193
    %v195 = vmul.f32 %v184, %v194
    %v196 = vmul.f32 %v189, %v194
    %197 = vset.pattern.permute.xlu0 1
    %198 = vperm.xlu0 %197, %v178
    %v199 = vpop.permute.xlu0 %198
    %201 = vset.pattern.permute.xlu0 1
    %202 = vperm.xlu0 %201, %v179
    %v203 = vpop.permute.xlu0 %202
    %v205 = vlaneseq
    %v206 = vshrl.u32 %v205, 7
    %v207 = vsub.s32 1, %v206
    %v208 = vrot.slane %v180, %v207
    %v209 = vmul.f32 %v199, %v208
    %v210 = vmul.f32 %v203, %v208
    %v211 = vadd.f32 %v195, %v209
    %v212 = vadd.f32 %v196, %v210
    %v213 = vld [vmem:[%s21] sm:$0x1]
    %v215 = vlaneseq
    %v216 = vshrl.u32 %v215, 7
    %v217 = vsub.s32 0, %v216
    %v218 = vrot.slane %v213, %v217
    %v220 = vadd.f32 %v211, %v218
    %v221 = vadd.f32 %v212, %v218
    %vm222 = vcmp.gt.f32.partialorder %v220, 0.0
    %vm223 = vcmp.gt.f32.partialorder %v221, 0.0
    %v224 = vmul.f32 %v220, 0.1
    %v225 = vmul.f32 %v221, 0.1
    %v226 = vsel %vm222, %v220, %v224
    %v227 = vsel %vm223, %v221, %v225
    %v228 = vld [vmem:[%s23] sm:$0xff]
    %v229 = vld [vmem:[%s23 + $0x8] sm:$0xff]
    %v230 = vld [vmem:[%s23 + $0x10] sm:$0xff]
    %v231 = vld [vmem:[%s23 + $0x18] sm:$0xff]
    %v232 = vld [vmem:[%s25] sm:$0x1]
    %v234 = vlaneseq
    %v235 = vshrl.u32 %v234, 7
    %v236 = vsub.s32 0, %v235
    %v237 = vrot.slane %v232, %v236
    %vm239 = vcmask 261120
    %v241 = vsel %vm239, %v226, 0
    %v244 = vsel %vm239, %v227, 0
    %246 = vmatprep.subr.mxu0 0.0
    %247 = vmatpush1.msra.mxu0 0.0
    %248 = vmatprep.subr.mxu0 0.0
    %249 = vmatpush1.msra.mxu0 0.0
    %250 = vmatprep.subr.mxu0 0.0
    %251 = vmatpush1.msra.mxu0 0.0
    %252 = vmatprep.subr.mxu0 0.0
    %253 = vmatpush1.msra.mxu0 0.0
    %254 = vmatprep.subr.mxu0 0.0
    %255 = vmatpush1.msra.mxu0 0.0
    %256 = vmatprep.subr.mxu0 0.0
    %257 = vmatpush1.msra.mxu0 0.0
    %258 = vmatprep.subr.mxu0 0.0
    %259 = vmatpush1.msra.mxu0 0.0
    %260 = vmatprep.subr.mxu0 0.0
    %261 = vmatpush1.msra.mxu0 0.0
    %262 = vmatprep.subr.mxu0 0.0
    %263 = vmatpush1.msra.mxu0 0.0
    %264 = vmatprep.subr.mxu0 0.0
    %265 = vmatpush1.msra.mxu0 0.0
    %266 = vmatprep.subr.mxu0 0.0
    %267 = vmatpush1.msra.mxu0 0.0
    %268 = vmatprep.subr.mxu0 0.0
    %269 = vmatpush1.msra.mxu0 0.0
    %270 = vmatprep.subr.mxu0 0.0
    %271 = vmatpush1.msra.mxu0 %v231
    %272 = vmatprep.subr.mxu0 0.0
    %273 = vmatpush1.msra.mxu0 %v230
    %274 = vmatprep.subr.mxu0 0.0
    %275 = vmatpush1.msra.mxu0 %v229
    %276 = vmatprep.subr.mxu0 0.0
    %277 = vmatpush1.msra.mxu0 %v228
    %278 = vmatprep.subr.mxu0 0.0
    %279 = vmatpush2.msra.mxu0 0.0
    %280 = vmatprep.subr.mxu0 0.0
    %281 = vmatpush2.msra.mxu0 0.0
    %282 = vmatprep.subr.mxu0 0.0
    %283 = vmatpush2.msra.mxu0 0.0
    %284 = vmatprep.subr.mxu0 0.0
    %285 = vmatpush2.msra.mxu0 0.0
    %286 = vmatprep.subr.mxu0 0.0
    %287 = vmatpush2.msra.mxu0 0.0
    %288 = vmatprep.subr.mxu0 0.0
    %289 = vmatpush2.msra.mxu0 0.0
    %290 = vmatprep.subr.mxu0 0.0
    %291 = vmatpush2.msra.mxu0 0.0
    %292 = vmatprep.subr.mxu0 0.0
    %293 = vmatpush2.msra.mxu0 0.0
    %294 = vmatprep.subr.mxu0 0.0
    %295 = vmatpush2.msra.mxu0 0.0
    %296 = vmatprep.subr.mxu0 0.0
    %297 = vmatpush2.msra.mxu0 0.0
    %298 = vmatprep.subr.mxu0 0.0
    %299 = vmatpush2.msra.mxu0 0.0
    %300 = vmatprep.subr.mxu0 0.0
    %301 = vmatpush2.msra.mxu0 0.0
    %302 = vmatprep.subr.mxu0 0.0
    %303 = vmatpush2.msra.mxu0 0.0
    %304 = vmatprep.subr.mxu0 0.0
    %305 = vmatpush2.msra.mxu0 0.0
    %306 = vmatprep.subr.mxu0 0.0
    %307 = vmatpush2.msra.mxu0 0.0
    %308 = vmatprep.subr.mxu0 0.0
    %309 = vmatpush2.msra.mxu0 0.0
    %310 = vmatprep.mubr.f32.mxu0 0.0
    %311 = vmatmul.mubr.f32.gmra.mxu0 %v241
    %v312 = vpop.f32.mrf.mxu0
    %v313 = vadd.f32 %v237, %v312
    %v314 = vpop.f32.mrf.mxu0
    %315 = vmatprep.mubr.f32.mxu0 0.0
    %316 = vmatmul.mubr.f32.gmra.mxu0 %v244
    %v317 = vpop.f32.mrf.mxu0
    %v318 = vadd.f32 %v237, %v317
    %v319 = vpop.f32.mrf.mxu0
    %320 = vdwg.mxu0
    %v321 = vld [vmem:[%s5] sm:$0x7f]
    %v322 = vld [vmem:[%s27] sm:$0xff]
    %v323 = vld [vmem:[%s27 + $0x8] sm:$0xff]
    %v324 = vld [vmem:[%s29] sm:$0x1]
    %v325 = vld [vmem:[%s31] sm:$0x1]
    %v326 = vld [vmem:[%s33] sm:$0x1]
    %v328 = vlaneseq
    %v329 = vshrl.u32 %v328, 7
    %v330 = vsub.s32 0, %v329
    %v331 = vrot.slane %v324, %v330
    %vm333 = vcmask 130048
    %v335 = vsel %vm333, %v321, 0
    %337 = vmatprep.subr.mxu0 0.0
    %338 = vmatpush1.msra.mxu0 0.0
    %339 = vmatprep.subr.mxu0 0.0
    %340 = vmatpush1.msra.mxu0 0.0
    %341 = vmatprep.subr.mxu0 0.0
    %342 = vmatpush1.msra.mxu0 0.0
    %343 = vmatprep.subr.mxu0 0.0
    %344 = vmatpush1.msra.mxu0 0.0
    %345 = vmatprep.subr.mxu0 0.0
    %346 = vmatpush1.msra.mxu0 0.0
    %347 = vmatprep.subr.mxu0 0.0
    %348 = vmatpush1.msra.mxu0 0.0
    %349 = vmatprep.subr.mxu0 0.0
    %350 = vmatpush1.msra.mxu0 0.0
    %351 = vmatprep.subr.mxu0 0.0
    %352 = vmatpush1.msra.mxu0 0.0
    %353 = vmatprep.subr.mxu0 0.0
    %354 = vmatpush1.msra.mxu0 0.0
    %355 = vmatprep.subr.mxu0 0.0
    %356 = vmatpush1.msra.mxu0 0.0
    %357 = vmatprep.subr.mxu0 0.0
    %358 = vmatpush1.msra.mxu0 0.0
    %359 = vmatprep.subr.mxu0 0.0
    %360 = vmatpush1.msra.mxu0 0.0
    %361 = vmatprep.subr.mxu0 0.0
    %362 = vmatpush1.msra.mxu0 0.0
    %363 = vmatprep.subr.mxu0 0.0
    %364 = vmatpush1.msra.mxu0 0.0
    %365 = vmatprep.subr.mxu0 0.0
    %366 = vmatpush1.msra.mxu0 %v323
    %367 = vmatprep.subr.mxu0 0.0
    %368 = vmatpush1.msra.mxu0 %v322
    %369 = vmatprep.subr.mxu0 0.0
    %370 = vmatpush2.msra.mxu0 0.0
    %371 = vmatprep.subr.mxu0 0.0
    %372 = vmatpush2.msra.mxu0 0.0
    %373 = vmatprep.subr.mxu0 0.0
    %374 = vmatpush2.msra.mxu0 0.0
    %375 = vmatprep.subr.mxu0 0.0
    %376 = vmatpush2.msra.mxu0 0.0
    %377 = vmatprep.subr.mxu0 0.0
    %378 = vmatpush2.msra.mxu0 0.0
    %379 = vmatprep.subr.mxu0 0.0
    %380 = vmatpush2.msra.mxu0 0.0
    %381 = vmatprep.subr.mxu0 0.0
    %382 = vmatpush2.msra.mxu0 0.0
    %383 = vmatprep.subr.mxu0 0.0
    %384 = vmatpush2.msra.mxu0 0.0
    %385 = vmatprep.subr.mxu0 0.0
    %386 = vmatpush2.msra.mxu0 0.0
    %387 = vmatprep.subr.mxu0 0.0
    %388 = vmatpush2.msra.mxu0 0.0
    %389 = vmatprep.subr.mxu0 0.0
    %390 = vmatpush2.msra.mxu0 0.0
    %391 = vmatprep.subr.mxu0 0.0
    %392 = vmatpush2.msra.mxu0 0.0
    %393 = vmatprep.subr.mxu0 0.0
    %394 = vmatpush2.msra.mxu0 0.0
    %395 = vmatprep.subr.mxu0 0.0
    %396 = vmatpush2.msra.mxu0 0.0
    %397 = vmatprep.subr.mxu0 0.0
    %398 = vmatpush2.msra.mxu0 0.0
    %399 = vmatprep.subr.mxu0 0.0
    %400 = vmatpush2.msra.mxu0 0.0
    %401 = vmatprep.mubr.f32.mxu0 0.0
    %402 = vmatmul.mubr.f32.gmra.mxu0 %v335
    %v403 = vpop.f32.mrf.mxu0
    %v404 = vadd.f32 %v331, %v403
    %v405 = vpop.f32.mrf.mxu0
    %406 = vdwg.mxu0
    %vm407 = vcmp.gt.f32.partialorder %v404, 0.0
    %v408 = vmul.f32 %v404, 0.1
    %v409 = vsel %vm407, %v404, %v408
    %vm410 = vcmask 129024
    %v411 = vsel %vm410, %v409, 0.0
    %412 = vadd.xlane.f32.xlu0 %v411
    %v413 = vpop.xlane.xlu0 %412
    %v414 = vrcp.pop 16.0
    %v415 = vmul.f32 %v413, %v414
    %v416 = vmul.f32 %v409, %v409
    %v417 = vsel %vm410, %v416, 0.0
    %418 = vadd.xlane.f32.xlu0 %v417
    %v419 = vpop.xlane.xlu0 %418
    %v420 = vmul.f32 %v419, %v414
    %v421 = vmul.f32 %v415, %v415
    %v422 = vsub.f32 %v420, %v421
    %v423 = vsub.f32 %v409, %v415
    %v424 = vadd.f32 %v422, 1e-05
    %v425 = vrsqrt.pop %v424
    %v426 = vmul.f32 %v423, %v425
    %v428 = vlaneseq
    %v429 = vshrl.u32 %v428, 7
    %v430 = vsub.s32 0, %v429
    %v431 = vrot.slane %v325, %v430
    %v433 = vmul.f32 %v426, %v431
    %v435 = vlaneseq
    %v436 = vshrl.u32 %v435, 7
    %v437 = vsub.s32 0, %v436
    %v438 = vrot.slane %v326, %v437
    %v440 = vadd.f32 %v433, %v438
    %v441 = vld [vmem:[%s3] sm:$0xff]
    %v442 = vld [vmem:[%s3 + $0x8] sm:$0xf]
    %vm443 = vcmask 56320
    %v445 = vsel %vm443, %v441, 0
    %v448 = vsel %vm443, %v442, 0
    %vm450 = vcmask 1046528
    %v452 = vsel %vm450, %v440, 0
    %454 = vmatprep.subr.mxu0 0.0
    %455 = vmatpush1.msra.mxu0 0.0
    %456 = vmatprep.subr.mxu0 0.0
    %457 = vmatpush1.msra.mxu0 0.0
    %458 = vmatprep.subr.mxu0 0.0
    %459 = vmatpush1.msra.mxu0 0.0
    %460 = vmatprep.subr.mxu0 0.0
    %461 = vmatpush1.msra.mxu0 0.0
    %462 = vmatprep.subr.mxu0 0.0
    %463 = vmatpush1.msra.mxu0 0.0
    %464 = vmatprep.subr.mxu0 0.0
    %465 = vmatpush1.msra.mxu0 0.0
    %466 = vmatprep.subr.mxu0 0.0
    %467 = vmatpush1.msra.mxu0 0.0
    %468 = vmatprep.subr.mxu0 0.0
    %469 = vmatpush1.msra.mxu0 0.0
    %470 = vmatprep.subr.mxu0 0.0
    %471 = vmatpush1.msra.mxu0 0.0
    %472 = vmatprep.subr.mxu0 0.0
    %473 = vmatpush1.msra.mxu0 0.0
    %474 = vmatprep.subr.mxu0 0.0
    %475 = vmatpush1.msra.mxu0 0.0
    %476 = vmatprep.subr.mxu0 0.0
    %477 = vmatpush1.msra.mxu0 0.0
    %478 = vmatprep.subr.mxu0 0.0
    %479 = vmatpush1.msra.mxu0 0.0
    %480 = vmatprep.subr.mxu0 0.0
    %481 = vmatpush1.msra.mxu0 0.0
    %482 = vmatprep.subr.mxu0 0.0
    %483 = vmatpush1.msra.mxu0 0.0
    %484 = vmatprep.subr.mxu0 0.0
    %485 = vmatpush1.msra.mxu0 %v452
    %486 = vmatprep.subr.mxu0 0.0
    %487 = vmatpush2.msra.mxu0 0.0
    %488 = vmatprep.subr.mxu0 0.0
    %489 = vmatpush2.msra.mxu0 0.0
    %490 = vmatprep.subr.mxu0 0.0
    %491 = vmatpush2.msra.mxu0 0.0
    %492 = vmatprep.subr.mxu0 0.0
    %493 = vmatpush2.msra.mxu0 0.0
    %494 = vmatprep.subr.mxu0 0.0
    %495 = vmatpush2.msra.mxu0 0.0
    %496 = vmatprep.subr.mxu0 0.0
    %497 = vmatpush2.msra.mxu0 0.0
    %498 = vmatprep.subr.mxu0 0.0
    %499 = vmatpush2.msra.mxu0 0.0
    %500 = vmatprep.subr.mxu0 0.0
    %501 = vmatpush2.msra.mxu0 0.0
    %502 = vmatprep.subr.mxu0 0.0
    %503 = vmatpush2.msra.mxu0 0.0
    %504 = vmatprep.subr.mxu0 0.0
    %505 = vmatpush2.msra.mxu0 0.0
    %506 = vmatprep.subr.mxu0 0.0
    %507 = vmatpush2.msra.mxu0 0.0
    %508 = vmatprep.subr.mxu0 0.0
    %509 = vmatpush2.msra.mxu0 0.0
    %510 = vmatprep.subr.mxu0 0.0
    %511 = vmatpush2.msra.mxu0 0.0
    %512 = vmatprep.subr.mxu0 0.0
    %513 = vmatpush2.msra.mxu0 0.0
    %514 = vmatprep.subr.mxu0 0.0
    %515 = vmatpush2.msra.mxu0 0.0
    %516 = vmatprep.subr.mxu0 0.0
    %517 = vmatpush2.msra.mxu0 0.0
    %518 = vmatprep.mubr.f32.mxu0 0.0
    %519 = vmatmul.mubr.f32.gmra.mxu0 %v445
    %v520 = vpop.f32.mrf.mxu0
    %v521 = vadd.f32 0.0, %v520
    %v522 = vpop.f32.mrf.mxu0
    %523 = vmatprep.mubr.f32.mxu0 0.0
    %524 = vmatmul.mubr.f32.gmra.mxu0 %v448
    %v525 = vpop.f32.mrf.mxu0
    %v526 = vadd.f32 0.0, %v525
    %v527 = vpop.f32.mrf.mxu0
    %528 = vdwg.mxu0
    %531 = vrot.lane.b32.xlu0 %v521, 16
    %v532 = vpop.permute.xlu0 %531
    %533 = vrot.lane.b32.xlu0 %v526, 16
    %v534 = vpop.permute.xlu0 %533
    %v537 = vsel %vm333, %v313, %v532
    %v538 = vsel %vm333, %v318, %v534
    %v539 = vld [vmem:[%s35] sm:$0xff]
    %v540 = vld [vmem:[%s35 + $0x8] sm:$0xff]
    %v541 = vld [vmem:[%s37] sm:$0x1]
    %v543 = vlaneseq
    %v544 = vshrl.u32 %v543, 7
    %v545 = vsub.s32 0, %v544
    %v546 = vrot.slane %v541, %v545
    %v548 = vsel %vm333, %v440, 0
    %550 = vmatprep.subr.mxu0 0.0
    %551 = vmatpush1.msra.mxu0 0.0
    %552 = vmatprep.subr.mxu0 0.0
    %553 = vmatpush1.msra.mxu0 0.0
    %554 = vmatprep.subr.mxu0 0.0
    %555 = vmatpush1.msra.mxu0 0.0
    %556 = vmatprep.subr.mxu0 0.0
    %557 = vmatpush1.msra.mxu0 0.0
    %558 = vmatprep.subr.mxu0 0.0
    %559 = vmatpush1.msra.mxu0 0.0
    %560 = vmatprep.subr.mxu0 0.0
    %561 = vmatpush1.msra.mxu0 0.0
    %562 = vmatprep.subr.mxu0 0.0
    %563 = vmatpush1.msra.mxu0 0.0
    %564 = vmatprep.subr.mxu0 0.0
    %565 = vmatpush1.msra.mxu0 0.0
    %566 = vmatprep.subr.mxu0 0.0
    %567 = vmatpush1.msra.mxu0 0.0
    %568 = vmatprep.subr.mxu0 0.0
    %569 = vmatpush1.msra.mxu0 0.0
    %570 = vmatprep.subr.mxu0 0.0
    %571 = vmatpush1.msra.mxu0 0.0
    %572 = vmatprep.subr.mxu0 0.0
    %573 = vmatpush1.msra.mxu0 0.0
    %574 = vmatprep.subr.mxu0 0.0
    %575 = vmatpush1.msra.mxu0 0.0
    %576 = vmatprep.subr.mxu0 0.0
    %577 = vmatpush1.msra.mxu0 0.0
    %578 = vmatprep.subr.mxu0 0.0
    %579 = vmatpush1.msra.mxu0 %v540
    %580 = vmatprep.subr.mxu0 0.0
    %581 = vmatpush1.msra.mxu0 %v539
    %582 = vmatprep.subr.mxu0 0.0
    %583 = vmatpush2.msra.mxu0 0.0
    %584 = vmatprep.subr.mxu0 0.0
    %585 = vmatpush2.msra.mxu0 0.0
    %586 = vmatprep.subr.mxu0 0.0
    %587 = vmatpush2.msra.mxu0 0.0
    %588 = vmatprep.subr.mxu0 0.0
    %589 = vmatpush2.msra.mxu0 0.0
    %590 = vmatprep.subr.mxu0 0.0
    %591 = vmatpush2.msra.mxu0 0.0
    %592 = vmatprep.subr.mxu0 0.0
    %593 = vmatpush2.msra.mxu0 0.0
    %594 = vmatprep.subr.mxu0 0.0
    %595 = vmatpush2.msra.mxu0 0.0
    %596 = vmatprep.subr.mxu0 0.0
    %597 = vmatpush2.msra.mxu0 0.0
    %598 = vmatprep.subr.mxu0 0.0
    %599 = vmatpush2.msra.mxu0 0.0
    %600 = vmatprep.subr.mxu0 0.0
    %601 = vmatpush2.msra.mxu0 0.0
    %602 = vmatprep.subr.mxu0 0.0
    %603 = vmatpush2.msra.mxu0 0.0
    %604 = vmatprep.subr.mxu0 0.0
    %605 = vmatpush2.msra.mxu0 0.0
    %606 = vmatprep.subr.mxu0 0.0
    %607 = vmatpush2.msra.mxu0 0.0
    %608 = vmatprep.subr.mxu0 0.0
    %609 = vmatpush2.msra.mxu0 0.0
    %610 = vmatprep.subr.mxu0 0.0
    %611 = vmatpush2.msra.mxu0 0.0
    %612 = vmatprep.subr.mxu0 0.0
    %613 = vmatpush2.msra.mxu0 0.0
    %614 = vmatprep.mubr.f32.mxu0 0.0
    %615 = vmatmul.mubr.f32.gmra.mxu0 %v548
    %v616 = vpop.f32.mrf.mxu0
    %v617 = vadd.f32 %v546, %v616
    %v618 = vpop.f32.mrf.mxu0
    %619 = vdwg.mxu0
    %v620 = vld [vmem:[%s7] sm:$0xff]
    %v621 = vld [vmem:[%s7 + $0x8] sm:$0xf]
    %v623 = vsel %vm443, %v620, 0
    %v626 = vsel %vm443, %v621, 0
    %v629 = vsel %vm450, %v617, 0
    %631 = vmatprep.subr.mxu0 0.0
    %632 = vmatpush1.msra.mxu0 0.0
    %633 = vmatprep.subr.mxu0 0.0
    %634 = vmatpush1.msra.mxu0 0.0
    %635 = vmatprep.subr.mxu0 0.0
    %636 = vmatpush1.msra.mxu0 0.0
    %637 = vmatprep.subr.mxu0 0.0
    %638 = vmatpush1.msra.mxu0 0.0
    %639 = vmatprep.subr.mxu0 0.0
    %640 = vmatpush1.msra.mxu0 0.0
    %641 = vmatprep.subr.mxu0 0.0
    %642 = vmatpush1.msra.mxu0 0.0
    %643 = vmatprep.subr.mxu0 0.0
    %644 = vmatpush1.msra.mxu0 0.0
    %645 = vmatprep.subr.mxu0 0.0
    %646 = vmatpush1.msra.mxu0 0.0
    %647 = vmatprep.subr.mxu0 0.0
    %648 = vmatpush1.msra.mxu0 0.0
    %649 = vmatprep.subr.mxu0 0.0
    %650 = vmatpush1.msra.mxu0 0.0
    %651 = vmatprep.subr.mxu0 0.0
    %652 = vmatpush1.msra.mxu0 0.0
    %653 = vmatprep.subr.mxu0 0.0
    %654 = vmatpush1.msra.mxu0 0.0
    %655 = vmatprep.subr.mxu0 0.0
    %656 = vmatpush1.msra.mxu0 0.0
    %657 = vmatprep.subr.mxu0 0.0
    %658 = vmatpush1.msra.mxu0 0.0
    %659 = vmatprep.subr.mxu0 0.0
    %660 = vmatpush1.msra.mxu0 0.0
    %661 = vmatprep.subr.mxu0 0.0
    %662 = vmatpush1.msra.mxu0 %v629
    %663 = vmatprep.subr.mxu0 0.0
    %664 = vmatpush2.msra.mxu0 0.0
    %665 = vmatprep.subr.mxu0 0.0
    %666 = vmatpush2.msra.mxu0 0.0
    %667 = vmatprep.subr.mxu0 0.0
    %668 = vmatpush2.msra.mxu0 0.0
    %669 = vmatprep.subr.mxu0 0.0
    %670 = vmatpush2.msra.mxu0 0.0
    %671 = vmatprep.subr.mxu0 0.0
    %672 = vmatpush2.msra.mxu0 0.0
    %673 = vmatprep.subr.mxu0 0.0
    %674 = vmatpush2.msra.mxu0 0.0
    %675 = vmatprep.subr.mxu0 0.0
    %676 = vmatpush2.msra.mxu0 0.0
    %677 = vmatprep.subr.mxu0 0.0
    %678 = vmatpush2.msra.mxu0 0.0
    %679 = vmatprep.subr.mxu0 0.0
    %680 = vmatpush2.msra.mxu0 0.0
    %681 = vmatprep.subr.mxu0 0.0
    %682 = vmatpush2.msra.mxu0 0.0
    %683 = vmatprep.subr.mxu0 0.0
    %684 = vmatpush2.msra.mxu0 0.0
    %685 = vmatprep.subr.mxu0 0.0
    %686 = vmatpush2.msra.mxu0 0.0
    %687 = vmatprep.subr.mxu0 0.0
    %688 = vmatpush2.msra.mxu0 0.0
    %689 = vmatprep.subr.mxu0 0.0
    %690 = vmatpush2.msra.mxu0 0.0
    %691 = vmatprep.subr.mxu0 0.0
    %692 = vmatpush2.msra.mxu0 0.0
    %693 = vmatprep.subr.mxu0 0.0
    %694 = vmatpush2.msra.mxu0 0.0
    %695 = vmatprep.mubr.f32.mxu0 0.0
    %696 = vmatmul.mubr.f32.gmra.mxu0 %v623
    %v697 = vpop.f32.mrf.mxu0
    %v698 = vadd.f32 0.0, %v697
    %v699 = vpop.f32.mrf.mxu0
    %700 = vmatprep.mubr.f32.mxu0 0.0
    %701 = vmatmul.mubr.f32.gmra.mxu0 %v626
    %v702 = vpop.f32.mrf.mxu0
    %v703 = vadd.f32 0.0, %v702
    %v704 = vpop.f32.mrf.mxu0
    %705 = vdwg.mxu0
    %v706 = vld [vmem:[#allocation3] sm:$0xff]
    %v707 = vld [vmem:[#allocation3 + $0x8] sm:$0xf]
    %vm708 = vcmask 97280
    %v710 = vsel %vm708, %v706, 0
    %v713 = vsel %vm708, %v707, 0
    %vm715 = vcmask 1043456
    %v717 = vsel %vm715, %v538, 0
    %719 = vmatprep.subr.mxu0 0.0
    %720 = vmatpush1.msra.mxu0 0.0
    %721 = vmatprep.subr.mxu0 0.0
    %722 = vmatpush1.msra.mxu0 0.0
    %723 = vmatprep.subr.mxu0 0.0
    %724 = vmatpush1.msra.mxu0 0.0
    %725 = vmatprep.subr.mxu0 0.0
    %726 = vmatpush1.msra.mxu0 0.0
    %727 = vmatprep.subr.mxu0 0.0
    %728 = vmatpush1.msra.mxu0 0.0
    %729 = vmatprep.subr.mxu0 0.0
    %730 = vmatpush1.msra.mxu0 0.0
    %731 = vmatprep.subr.mxu0 0.0
    %732 = vmatpush1.msra.mxu0 0.0
    %733 = vmatprep.subr.mxu0 0.0
    %734 = vmatpush1.msra.mxu0 0.0
    %735 = vmatprep.subr.mxu0 0.0
    %736 = vmatpush1.msra.mxu0 0.0
    %737 = vmatprep.subr.mxu0 0.0
    %738 = vmatpush1.msra.mxu0 0.0
    %739 = vmatprep.subr.mxu0 0.0
    %740 = vmatpush1.msra.mxu0 0.0
    %741 = vmatprep.subr.mxu0 0.0
    %742 = vmatpush1.msra.mxu0 0.0
    %743 = vmatprep.subr.mxu0 0.0
    %744 = vmatpush1.msra.mxu0 0.0
    %745 = vmatprep.subr.mxu0 0.0
    %746 = vmatpush1.msra.mxu0 0.0
    %747 = vmatprep.subr.mxu0 0.0
    %748 = vmatpush1.msra.mxu0 %v717
    %749 = vmatprep.subr.mxu0 0.0
    %750 = vmatpush1.msra.mxu0 %v537
    %751 = vmatprep.subr.mxu0 0.0
    %752 = vmatpush2.msra.mxu0 0.0
    %753 = vmatprep.subr.mxu0 0.0
    %754 = vmatpush2.msra.mxu0 0.0
    %755 = vmatprep.subr.mxu0 0.0
    %756 = vmatpush2.msra.mxu0 0.0
    %757 = vmatprep.subr.mxu0 0.0
    %758 = vmatpush2.msra.mxu0 0.0
    %759 = vmatprep.subr.mxu0 0.0
    %760 = vmatpush2.msra.mxu0 0.0
    %761 = vmatprep.subr.mxu0 0.0
    %762 = vmatpush2.msra.mxu0 0.0
    %763 = vmatprep.subr.mxu0 0.0
    %764 = vmatpush2.msra.mxu0 0.0
    %765 = vmatprep.subr.mxu0 0.0
    %766 = vmatpush2.msra.mxu0 0.0
    %767 = vmatprep.subr.mxu0 0.0
    %768 = vmatpush2.msra.mxu0 0.0
    %769 = vmatprep.subr.mxu0 0.0
    %770 = vmatpush2.msra.mxu0 0.0
    %771 = vmatprep.subr.mxu0 0.0
    %772 = vmatpush2.msra.mxu0 0.0
    %773 = vmatprep.subr.mxu0 0.0
    %774 = vmatpush2.msra.mxu0 0.0
    %775 = vmatprep.subr.mxu0 0.0
    %776 = vmatpush2.msra.mxu0 0.0
    %777 = vmatprep.subr.mxu0 0.0
    %778 = vmatpush2.msra.mxu0 0.0
    %779 = vmatprep.subr.mxu0 0.0
    %780 = vmatpush2.msra.mxu0 0.0
    %781 = vmatprep.subr.mxu0 0.0
    %782 = vmatpush2.msra.mxu0 0.0
    %783 = vmatprep.mubr.f32.mxu0 0.0
    %784 = vmatmul.mubr.f32.gmra.mxu0 %v710
    %v785 = vpop.f32.mrf.mxu0
    %v786 = vadd.f32 0.0, %v785
    %v787 = vpop.f32.mrf.mxu0
    %788 = vmatprep.mubr.f32.mxu0 0.0
    %789 = vmatmul.mubr.f32.gmra.mxu0 %v713
    %v790 = vpop.f32.mrf.mxu0
    %v791 = vadd.f32 0.0, %v790
    %v792 = vpop.f32.mrf.mxu0
    %793 = vdwg.mxu0
    %v794 = vsub.f32 %v786, %v698
    %v795 = vsub.f32 %v791, %v703
    %797 = vrot.lane.b32.xlu0 %v537, 32
    %v798 = vpop.permute.xlu0 %797
    %799 = vrot.lane.b32.xlu0 %v538, 32
    %v800 = vpop.permute.xlu0 %799
    %v803 = vsel %vm239, %v794, %v798
    %v804 = vsel %vm239, %v795, %v800
    %v805 = vld [vmem:[%s39] sm:$0xff]
    %v806 = vld [vmem:[%s39 + $0x8] sm:$0xff]
    %v807 = vld [vmem:[%s39 + $0x10] sm:$0xff]
    %v808 = vld [vmem:[%s39 + $0x18] sm:$0xff]
    %v809 = vld [vmem:[%s39 + $0x20] sm:$0xff]
    %v810 = vld [vmem:[%s39 + $0x28] sm:$0xff]
    %v811 = vld [vmem:[%s39 + $0x30] sm:$0xff]
    %v812 = vld [vmem:[%s39 + $0x38] sm:$0xff]
    %v813 = vld [vmem:[%s41] sm:$0x1]
    %v815 = vlaneseq
    %v816 = vshrl.u32 %v815, 7
    %v817 = vsub.s32 0, %v816
    %v818 = vrot.slane %v813, %v817
    %vm820 = vcmask 523264
    %v822 = vsel %vm820, %v803, 0
    %v825 = vsel %vm820, %v804, 0
    %827 = vmatprep.subr.mxu0 0.0
    %828 = vmatpush1.msra.mxu0 0.0
    %829 = vmatprep.subr.mxu0 0.0
    %830 = vmatpush1.msra.mxu0 0.0
    %831 = vmatprep.subr.mxu0 0.0
    %832 = vmatpush1.msra.mxu0 0.0
    %833 = vmatprep.subr.mxu0 0.0
    %834 = vmatpush1.msra.mxu0 0.0
    %835 = vmatprep.subr.mxu0 0.0
    %836 = vmatpush1.msra.mxu0 0.0
    %837 = vmatprep.subr.mxu0 0.0
    %838 = vmatpush1.msra.mxu0 0.0
    %839 = vmatprep.subr.mxu0 0.0
    %840 = vmatpush1.msra.mxu0 0.0
    %841 = vmatprep.subr.mxu0 0.0
    %842 = vmatpush1.msra.mxu0 0.0
    %843 = vmatprep.subr.mxu0 0.0
    %844 = vmatpush1.msra.mxu0 %v812
    %845 = vmatprep.subr.mxu0 0.0
    %846 = vmatpush1.msra.mxu0 %v811
    %847 = vmatprep.subr.mxu0 0.0
    %848 = vmatpush1.msra.mxu0 %v810
    %849 = vmatprep.subr.mxu0 0.0
    %850 = vmatpush1.msra.mxu0 %v809
    %851 = vmatprep.subr.mxu0 0.0
    %852 = vmatpush1.msra.mxu0 %v808
    %853 = vmatprep.subr.mxu0 0.0
    %854 = vmatpush1.msra.mxu0 %v807
    %855 = vmatprep.subr.mxu0 0.0
    %856 = vmatpush1.msra.mxu0 %v806
    %857 = vmatprep.subr.mxu0 0.0
    %858 = vmatpush1.msra.mxu0 %v805
    %859 = vmatprep.subr.mxu0 0.0
    %860 = vmatpush2.msra.mxu0 0.0
    %861 = vmatprep.subr.mxu0 0.0
    %862 = vmatpush2.msra.mxu0 0.0
    %863 = vmatprep.subr.mxu0 0.0
    %864 = vmatpush2.msra.mxu0 0.0
    %865 = vmatprep.subr.mxu0 0.0
    %866 = vmatpush2.msra.mxu0 0.0
    %867 = vmatprep.subr.mxu0 0.0
    %868 = vmatpush2.msra.mxu0 0.0
    %869 = vmatprep.subr.mxu0 0.0
    %870 = vmatpush2.msra.mxu0 0.0
    %871 = vmatprep.subr.mxu0 0.0
    %872 = vmatpush2.msra.mxu0 0.0
    %873 = vmatprep.subr.mxu0 0.0
    %874 = vmatpush2.msra.mxu0 0.0
    %875 = vmatprep.subr.mxu0 0.0
    %876 = vmatpush2.msra.mxu0 0.0
    %877 = vmatprep.subr.mxu0 0.0
    %878 = vmatpush2.msra.mxu0 0.0
    %879 = vmatprep.subr.mxu0 0.0
    %880 = vmatpush2.msra.mxu0 0.0
    %881 = vmatprep.subr.mxu0 0.0
    %882 = vmatpush2.msra.mxu0 0.0
    %883 = vmatprep.subr.mxu0 0.0
    %884 = vmatpush2.msra.mxu0 0.0
    %885 = vmatprep.subr.mxu0 0.0
    %886 = vmatpush2.msra.mxu0 0.0
    %887 = vmatprep.subr.mxu0 0.0
    %888 = vmatpush2.msra.mxu0 0.0
    %889 = vmatprep.subr.mxu0 0.0
    %890 = vmatpush2.msra.mxu0 0.0
    %891 = vmatprep.mubr.f32.mxu0 0.0
    %892 = vmatmul.mubr.f32.gmra.mxu0 %v822
    %v893 = vpop.f32.mrf.mxu0
    %v894 = vadd.f32 %v818, %v893
    %v895 = vpop.f32.mrf.mxu0
    %896 = vmatprep.mubr.f32.mxu0 0.0
    %897 = vmatmul.mubr.f32.gmra.mxu0 %v825
    %v898 = vpop.f32.mrf.mxu0
    %v899 = vadd.f32 %v818, %v898
    %v900 = vpop.f32.mrf.mxu0
    %901 = vdwg.mxu0
    %v902 = vld [vmem:[%s43] sm:$0x1]
    %v904 = vlaneseq
    %v905 = vshrl.u32 %v904, 7
    %v906 = vsub.s32 0, %v905
    %v907 = vrot.slane %v902, %v906
    %v909 = vmul.f32 %v894, %v907
    %v910 = vmul.f32 %v899, %v907
    %v911 = vld [vmem:[%s45] sm:$0x1]
    %v913 = vlaneseq
    %v914 = vshrl.u32 %v913, 7
    %v915 = vsub.s32 0, %v914
    %v916 = vrot.slane %v911, %v915
    %v918 = vadd.f32 %v909, %v916
    %v919 = vadd.f32 %v910, %v916
    %vm920 = vcmp.gt.f32.partialorder %v918, 0.0
    %vm921 = vcmp.gt.f32.partialorder %v919, 0.0
    %v922 = vmul.f32 %v918, 0.1
    %v923 = vmul.f32 %v919, 0.1
    %v924 = vsel %vm920, %v918, %v922
    %v925 = vsel %vm921, %v919, %v923
    %v926 = vld [vmem:[%s47] sm:$0x1]
    %v927 = vld [vmem:[%s49] sm:$0x1]
    %v928 = vsel %vm239, %v924, 0.0
    %929 = vadd.xlane.f32.xlu0 %v928
    %v930 = vpop.xlane.xlu0 %929
    %vm931 = vcmask 257024
    %v932 = vsel %vm931, %v925, 0.0
    %933 = vadd.xlane.f32.xlu0 %v932
    %v934 = vpop.xlane.xlu0 %933
    %v935 = vrcp.pop 32.0
    %v936 = vmul.f32 %v930, %v935
    %v937 = vmul.f32 %v934, %v935
    %v938 = vmul.f32 %v924, %v924
    %v939 = vmul.f32 %v925, %v925
    %v940 = vsel %vm239, %v938, 0.0
    %941 = vadd.xlane.f32.xlu0 %v940
    %v942 = vpop.xlane.xlu0 %941
    %v943 = vsel %vm931, %v939, 0.0
    %944 = vadd.xlane.f32.xlu0 %v943
    %v945 = vpop.xlane.xlu0 %944
    %v946 = vmul.f32 %v942, %v935
    %v947 = vmul.f32 %v945, %v935
    %v948 = vmul.f32 %v936, %v936
    %v949 = vmul.f32 %v937, %v937
    %v950 = vsub.f32 %v946, %v948
    %v951 = vsub.f32 %v947, %v949
    %v952 = vsub.f32 %v924, %v936
    %v953 = vsub.f32 %v925, %v937
    %v954 = vadd.f32 %v950, 1e-05
    %v955 = vadd.f32 %v951, 1e-05
    %v956 = vrsqrt.pop %v954
    %v957 = vrsqrt.pop %v955
    %v958 = vmul.f32 %v952, %v956
    %v959 = vmul.f32 %v953, %v957
    %v961 = vlaneseq
    %v962 = vshrl.u32 %v961, 7
    %v963 = vsub.s32 0, %v962
    %v964 = vrot.slane %v926, %v963
    %v966 = vmul.f32 %v958, %v964
    %v967 = vmul.f32 %v959, %v964
    %v969 = vlaneseq
    %v970 = vshrl.u32 %v969, 7
    %v971 = vsub.s32 0, %v970
    %v972 = vrot.slane %v927, %v971
    %v974 = vadd.f32 %v966, %v972
    %v975 = vadd.f32 %v967, %v972
    %vm976 = vcmp.gt.f32.partialorder %v974, 0.0
    %vm977 = vcmp.gt.f32.partialorder %v975, 0.0
    %v978 = vmul.f32 %v974, 0.1
    %v979 = vmul.f32 %v975, 0.1
    %v980 = vsel %vm976, %v974, %v978
    %v981 = vsel %vm977, %v975, %v979
    %v983 = vsel %vm715, %v981, 0
    %985 = vmatprep.subr.mxu0 0.0
    %986 = vmatpush1.msra.mxu0 0.0
    %987 = vmatprep.subr.mxu0 0.0
    %988 = vmatpush1.msra.mxu0 0.0
    %989 = vmatprep.subr.mxu0 0.0
    %990 = vmatpush1.msra.mxu0 0.0
    %991 = vmatprep.subr.mxu0 0.0
    %992 = vmatpush1.msra.mxu0 0.0
    %993 = vmatprep.subr.mxu0 0.0
    %994 = vmatpush1.msra.mxu0 0.0
    %995 = vmatprep.subr.mxu0 0.0
    %996 = vmatpush1.msra.mxu0 0.0
    %997 = vmatprep.subr.mxu0 0.0
    %998 = vmatpush1.msra.mxu0 0.0
    %999 = vmatprep.subr.mxu0 0.0
    %1000 = vmatpush1.msra.mxu0 0.0
    %1001 = vmatprep.subr.mxu0 0.0
    %1002 = vmatpush1.msra.mxu0 0.0
    %1003 = vmatprep.subr.mxu0 0.0
    %1004 = vmatpush1.msra.mxu0 0.0
    %1005 = vmatprep.subr.mxu0 0.0
    %1006 = vmatpush1.msra.mxu0 0.0
    %1007 = vmatprep.subr.mxu0 0.0
    %1008 = vmatpush1.msra.mxu0 0.0
    %1009 = vmatprep.subr.mxu0 0.0
    %1010 = vmatpush1.msra.mxu0 0.0
    %1011 = vmatprep.subr.mxu0 0.0
    %1012 = vmatpush1.msra.mxu0 0.0
    %1013 = vmatprep.subr.mxu0 0.0
    %1014 = vmatpush1.msra.mxu0 %v983
    %1015 = vmatprep.subr.mxu0 0.0
    %1016 = vmatpush1.msra.mxu0 %v980
    %1017 = vmatprep.subr.mxu0 0.0
    %1018 = vmatpush2.msra.mxu0 0.0
    %1019 = vmatprep.subr.mxu0 0.0
    %1020 = vmatpush2.msra.mxu0 0.0
    %1021 = vmatprep.subr.mxu0 0.0
    %1022 = vmatpush2.msra.mxu0 0.0
    %1023 = vmatprep.subr.mxu0 0.0
    %1024 = vmatpush2.msra.mxu0 0.0
    %1025 = vmatprep.subr.mxu0 0.0
    %1026 = vmatpush2.msra.mxu0 0.0
    %1027 = vmatprep.subr.mxu0 0.0
    %1028 = vmatpush2.msra.mxu0 0.0
    %1029 = vmatprep.subr.mxu0 0.0
    %1030 = vmatpush2.msra.mxu0 0.0
    %1031 = vmatprep.subr.mxu0 0.0
    %1032 = vmatpush2.msra.mxu0 0.0
    %1033 = vmatprep.subr.mxu0 0.0
    %1034 = vmatpush2.msra.mxu0 0.0
    %1035 = vmatprep.subr.mxu0 0.0
    %1036 = vmatpush2.msra.mxu0 0.0
    %1037 = vmatprep.subr.mxu0 0.0
    %1038 = vmatpush2.msra.mxu0 0.0
    %1039 = vmatprep.subr.mxu0 0.0
    %1040 = vmatpush2.msra.mxu0 0.0
    %1041 = vmatprep.subr.mxu0 0.0
    %1042 = vmatpush2.msra.mxu0 0.0
    %1043 = vmatprep.subr.mxu0 0.0
    %1044 = vmatpush2.msra.mxu0 0.0
    %1045 = vmatprep.subr.mxu0 0.0
    %1046 = vmatpush2.msra.mxu0 0.0
    %1047 = vmatprep.subr.mxu0 0.0
    %1048 = vmatpush2.msra.mxu0 0.0
    %1049 = vmatprep.mubr.f32.mxu0 0.0
    %1050 = vmatmul.mubr.f32.gmra.mxu0 %v710
    %v1051 = vpop.f32.mrf.mxu0
    %v1052 = vadd.f32 0.0, %v1051
    %v1053 = vpop.f32.mrf.mxu0
    %1054 = vmatprep.mubr.f32.mxu0 0.0
    %1055 = vmatmul.mubr.f32.gmra.mxu0 %v713
    %v1056 = vpop.f32.mrf.mxu0
    %v1057 = vadd.f32 0.0, %v1056
    %v1058 = vpop.f32.mrf.mxu0
    %1059 = vdwg.mxu0
    %v1060 = vsub.f32 %v1052, %v698
    %v1061 = vsub.f32 %v1057, %v703
    %1063 = vrot.lane.b32.xlu0 %v980, 32
    %v1064 = vpop.permute.xlu0 %1063
    %1065 = vrot.lane.b32.xlu0 %v981, 32
    %v1066 = vpop.permute.xlu0 %1065
    %v1069 = vsel %vm239, %v1060, %v1064
    %v1070 = vsel %vm239, %v1061, %v1066
    %s1071 = scalar_lea.vmem %s39, 64
    %v1072 = vld [vmem:[%s1071] sm:$0xff]
    %v1073 = vld [vmem:[%s1071 + $0x8] sm:$0xff]
    %v1074 = vld [vmem:[%s1071 + $0x10] sm:$0xff]
    %v1075 = vld [vmem:[%s1071 + $0x18] sm:$0xff]
    %v1076 = vld [vmem:[%s1071 + $0x20] sm:$0xff]
    %v1077 = vld [vmem:[%s1071 + $0x28] sm:$0xff]
    %v1078 = vld [vmem:[%s1071 + $0x30] sm:$0xff]
    %v1079 = vld [vmem:[%s1071 + $0x38] sm:$0xff]
    %s1080 = scalar_lea.vmem %s41, 1
    %v1081 = vld [vmem:[%s1080] sm:$0x1]
    %v1083 = vlaneseq
    %v1084 = vshrl.u32 %v1083, 7
    %v1085 = vsub.s32 0, %v1084
    %v1086 = vrot.slane %v1081, %v1085
    %v1089 = vsel %vm820, %v1069, 0
    %v1092 = vsel %vm820, %v1070, 0
    %1094 = vmatprep.subr.mxu0 0.0
    %1095 = vmatpush1.msra.mxu0 0.0
    %1096 = vmatprep.subr.mxu0 0.0
    %1097 = vmatpush1.msra.mxu0 0.0
    %1098 = vmatprep.subr.mxu0 0.0
    %1099 = vmatpush1.msra.mxu0 0.0
    %1100 = vmatprep.subr.mxu0 0.0
    %1101 = vmatpush1.msra.mxu0 0.0
    %1102 = vmatprep.subr.mxu0 0.0
    %1103 = vmatpush1.msra.mxu0 0.0
    %1104 = vmatprep.subr.mxu0 0.0
    %1105 = vmatpush1.msra.mxu0 0.0
    %1106 = vmatprep.subr.mxu0 0.0
    %1107 = vmatpush1.msra.mxu0 0.0
    %1108 = vmatprep.subr.mxu0 0.0
    %1109 = vmatpush1.msra.mxu0 0.0
    %1110 = vmatprep.subr.mxu0 0.0
    %1111 = vmatpush1.msra.mxu0 %v1079
    %1112 = vmatprep.subr.mxu0 0.0
    %1113 = vmatpush1.msra.mxu0 %v1078
    %1114 = vmatprep.subr.mxu0 0.0
    %1115 = vmatpush1.msra.mxu0 %v1077
    %1116 = vmatprep.subr.mxu0 0.0
    %1117 = vmatpush1.msra.mxu0 %v1076
    %1118 = vmatprep.subr.mxu0 0.0
    %1119 = vmatpush1.msra.mxu0 %v1075
    %1120 = vmatprep.subr.mxu0 0.0
    %1121 = vmatpush1.msra.mxu0 %v1074
    %1122 = vmatprep.subr.mxu0 0.0
    %1123 = vmatpush1.msra.mxu0 %v1073
    %1124 = vmatprep.subr.mxu0 0.0
    %1125 = vmatpush1.msra.mxu0 %v1072
    %1126 = vmatprep.subr.mxu0 0.0
    %1127 = vmatpush2.msra.mxu0 0.0
    %1128 = vmatprep.subr.mxu0 0.0
    %1129 = vmatpush2.msra.mxu0 0.0
    %1130 = vmatprep.subr.mxu0 0.0
    %1131 = vmatpush2.msra.mxu0 0.0
    %1132 = vmatprep.subr.mxu0 0.0
    %1133 = vmatpush2.msra.mxu0 0.0
    %1134 = vmatprep.subr.mxu0 0.0
    %1135 = vmatpush2.msra.mxu0 0.0
    %1136 = vmatprep.subr.mxu0 0.0
    %1137 = vmatpush2.msra.mxu0 0.0
    %1138 = vmatprep.subr.mxu0 0.0
    %1139 = vmatpush2.msra.mxu0 0.0
    %1140 = vmatprep.subr.mxu0 0.0
    %1141 = vmatpush2.msra.mxu0 0.0
    %1142 = vmatprep.subr.mxu0 0.0
    %1143 = vmatpush2.msra.mxu0 0.0
    %1144 = vmatprep.subr.mxu0 0.0
    %1145 = vmatpush2.msra.mxu0 0.0
    %1146 = vmatprep.subr.mxu0 0.0
    %1147 = vmatpush2.msra.mxu0 0.0
    %1148 = vmatprep.subr.mxu0 0.0
    %1149 = vmatpush2.msra.mxu0 0.0
    %1150 = vmatprep.subr.mxu0 0.0
    %1151 = vmatpush2.msra.mxu0 0.0
    %1152 = vmatprep.subr.mxu0 0.0
    %1153 = vmatpush2.msra.mxu0 0.0
    %1154 = vmatprep.subr.mxu0 0.0
    %1155 = vmatpush2.msra.mxu0 0.0
    %1156 = vmatprep.subr.mxu0 0.0
    %1157 = vmatpush2.msra.mxu0 0.0
    %1158 = vmatprep.mubr.f32.mxu0 0.0
    %1159 = vmatmul.mubr.f32.gmra.mxu0 %v1089
    %v1160 = vpop.f32.mrf.mxu0
    %v1161 = vadd.f32 %v1086, %v1160
    %v1162 = vpop.f32.mrf.mxu0
    %1163 = vmatprep.mubr.f32.mxu0 0.0
    %1164 = vmatmul.mubr.f32.gmra.mxu0 %v1092
    %v1165 = vpop.f32.mrf.mxu0
    %v1166 = vadd.f32 %v1086, %v1165
    %v1167 = vpop.f32.mrf.mxu0
    %1168 = vdwg.mxu0
    %s1169 = scalar_lea.vmem %s43, 1
    %v1170 = vld [vmem:[%s1169] sm:$0x1]
    %v1172 = vlaneseq
    %v1173 = vshrl.u32 %v1172, 7
    %v1174 = vsub.s32 0, %v1173
    %v1175 = vrot.slane %v1170, %v1174
    %v1177 = vmul.f32 %v1161, %v1175
    %v1178 = vmul.f32 %v1166, %v1175
    %s1179 = scalar_lea.vmem %s45, 1
    %v1180 = vld [vmem:[%s1179] sm:$0x1]
    %v1182 = vlaneseq
    %v1183 = vshrl.u32 %v1182, 7
    %v1184 = vsub.s32 0, %v1183
    %v1185 = vrot.slane %v1180, %v1184
    %v1187 = vadd.f32 %v1177, %v1185
    %v1188 = vadd.f32 %v1178, %v1185
    %vm1189 = vcmp.gt.f32.partialorder %v1187, 0.0
    %vm1190 = vcmp.gt.f32.partialorder %v1188, 0.0
    %v1191 = vmul.f32 %v1187, 0.1
    %v1192 = vmul.f32 %v1188, 0.1
    %v1193 = vsel %vm1189, %v1187, %v1191
    %v1194 = vsel %vm1190, %v1188, %v1192
    %s1195 = scalar_lea.vmem %s47, 1
    %v1196 = vld [vmem:[%s1195] sm:$0x1]
    %s1197 = scalar_lea.vmem %s49, 1
    %v1198 = vld [vmem:[%s1197] sm:$0x1]
    %v1199 = vsel %vm239, %v1193, 0.0
    %1200 = vadd.xlane.f32.xlu0 %v1199
    %v1201 = vpop.xlane.xlu0 %1200
    %v1202 = vsel %vm931, %v1194, 0.0
    %1203 = vadd.xlane.f32.xlu0 %v1202
    %v1204 = vpop.xlane.xlu0 %1203
    %v1205 = vmul.f32 %v1201, %v935
    %v1206 = vmul.f32 %v1204, %v935
    %v1207 = vmul.f32 %v1193, %v1193
    %v1208 = vmul.f32 %v1194, %v1194
    %v1209 = vsel %vm239, %v1207, 0.0
    %1210 = vadd.xlane.f32.xlu0 %v1209
    %v1211 = vpop.xlane.xlu0 %1210
    %v1212 = vsel %vm931, %v1208, 0.0
    %1213 = vadd.xlane.f32.xlu0 %v1212
    %v1214 = vpop.xlane.xlu0 %1213
    %v1215 = vmul.f32 %v1211, %v935
    %v1216 = vmul.f32 %v1214, %v935
    %v1217 = vmul.f32 %v1205, %v1205
    %v1218 = vmul.f32 %v1206, %v1206
    %v1219 = vsub.f32 %v1215, %v1217
    %v1220 = vsub.f32 %v1216, %v1218
    %v1221 = vsub.f32 %v1193, %v1205
    %v1222 = vsub.f32 %v1194, %v1206
    %v1223 = vadd.f32 %v1219, 1e-05
    %v1224 = vadd.f32 %v1220, 1e-05
    %v1225 = vrsqrt.pop %v1223
    %v1226 = vrsqrt.pop %v1224
    %v1227 = vmul.f32 %v1221, %v1225
    %v1228 = vmul.f32 %v1222, %v1226
    %v1230 = vlaneseq
    %v1231 = vshrl.u32 %v1230, 7
    %v1232 = vsub.s32 0, %v1231
    %v1233 = vrot.slane %v1196, %v1232
    %v1235 = vmul.f32 %v1227, %v1233
    %v1236 = vmul.f32 %v1228, %v1233
    %v1238 = vlaneseq
    %v1239 = vshrl.u32 %v1238, 7
    %v1240 = vsub.s32 0, %v1239
    %v1241 = vrot.slane %v1198, %v1240
    %v1243 = vadd.f32 %v1235, %v1241
    %v1244 = vadd.f32 %v1236, %v1241
    %vm1245 = vcmp.gt.f32.partialorder %v1243, 0.0
    %vm1246 = vcmp.gt.f32.partialorder %v1244, 0.0
    %v1247 = vmul.f32 %v1243, 0.1
    %v1248 = vmul.f32 %v1244, 0.1
    %v1249 = vsel %vm1245, %v1243, %v1247
    %v1250 = vsel %vm1246, %v1244, %v1248
    %v1252 = vsel %vm715, %v1250, 0
    %1254 = vmatprep.subr.mxu0 0.0
    %1255 = vmatpush1.msra.mxu0 0.0
    %1256 = vmatprep.subr.mxu0 0.0
    %1257 = vmatpush1.msra.mxu0 0.0
    %1258 = vmatprep.subr.mxu0 0.0
    %1259 = vmatpush1.msra.mxu0 0.0
    %1260 = vmatprep.subr.mxu0 0.0
    %1261 = vmatpush1.msra.mxu0 0.0
    %1262 = vmatprep.subr.mxu0 0.0
    %1263 = vmatpush1.msra.mxu0 0.0
    %1264 = vmatprep.subr.mxu0 0.0
    %1265 = vmatpush1.msra.mxu0 0.0
    %1266 = vmatprep.subr.mxu0 0.0
    %1267 = vmatpush1.msra.mxu0 0.0
    %1268 = vmatprep.subr.mxu0 0.0
    %1269 = vmatpush1.msra.mxu0 0.0
    %1270 = vmatprep.subr.mxu0 0.0
    %1271 = vmatpush1.msra.mxu0 0.0
    %1272 = vmatprep.subr.mxu0 0.0
    %1273 = vmatpush1.msra.mxu0 0.0
    %1274 = vmatprep.subr.mxu0 0.0
    %1275 = vmatpush1.msra.mxu0 0.0
    %1276 = vmatprep.subr.mxu0 0.0
    %1277 = vmatpush1.msra.mxu0 0.0
    %1278 = vmatprep.subr.mxu0 0.0
    %1279 = vmatpush1.msra.mxu0 0.0
    %1280 = vmatprep.subr.mxu0 0.0
    %1281 = vmatpush1.msra.mxu0 0.0
    %1282 = vmatprep.subr.mxu0 0.0
    %1283 = vmatpush1.msra.mxu0 %v1252
    %1284 = vmatprep.subr.mxu0 0.0
    %1285 = vmatpush1.msra.mxu0 %v1249
    %1286 = vmatprep.subr.mxu0 0.0
    %1287 = vmatpush2.msra.mxu0 0.0
    %1288 = vmatprep.subr.mxu0 0.0
    %1289 = vmatpush2.msra.mxu0 0.0
    %1290 = vmatprep.subr.mxu0 0.0
    %1291 = vmatpush2.msra.mxu0 0.0
    %1292 = vmatprep.subr.mxu0 0.0
    %1293 = vmatpush2.msra.mxu0 0.0
    %1294 = vmatprep.subr.mxu0 0.0
    %1295 = vmatpush2.msra.mxu0 0.0
    %1296 = vmatprep.subr.mxu0 0.0
    %1297 = vmatpush2.msra.mxu0 0.0
    %1298 = vmatprep.subr.mxu0 0.0
    %1299 = vmatpush2.msra.mxu0 0.0
    %1300 = vmatprep.subr.mxu0 0.0
    %1301 = vmatpush2.msra.mxu0 0.0
    %1302 = vmatprep.subr.mxu0 0.0
    %1303 = vmatpush2.msra.mxu0 0.0
    %1304 = vmatprep.subr.mxu0 0.0
    %1305 = vmatpush2.msra.mxu0 0.0
    %1306 = vmatprep.subr.mxu0 0.0
    %1307 = vmatpush2.msra.mxu0 0.0
    %1308 = vmatprep.subr.mxu0 0.0
    %1309 = vmatpush2.msra.mxu0 0.0
    %1310 = vmatprep.subr.mxu0 0.0
    %1311 = vmatpush2.msra.mxu0 0.0
    %1312 = vmatprep.subr.mxu0 0.0
    %1313 = vmatpush2.msra.mxu0 0.0
    %1314 = vmatprep.subr.mxu0 0.0
    %1315 = vmatpush2.msra.mxu0 0.0
    %1316 = vmatprep.subr.mxu0 0.0
    %1317 = vmatpush2.msra.mxu0 0.0
    %1318 = vmatprep.mubr.f32.mxu0 0.0
    %1319 = vmatmul.mubr.f32.gmra.mxu0 %v710
    %v1320 = vpop.f32.mrf.mxu0
    %v1321 = vadd.f32 0.0, %v1320
    %v1322 = vpop.f32.mrf.mxu0
    %1323 = vmatprep.mubr.f32.mxu0 0.0
    %1324 = vmatmul.mubr.f32.gmra.mxu0 %v713
    %v1325 = vpop.f32.mrf.mxu0
    %v1326 = vadd.f32 0.0, %v1325
    %v1327 = vpop.f32.mrf.mxu0
    %1328 = vdwg.mxu0
    %v1329 = vsub.f32 %v1321, %v698
    %v1330 = vsub.f32 %v1326, %v703
    %1332 = vrot.lane.b32.xlu0 %v1249, 32
    %v1333 = vpop.permute.xlu0 %1332
    %1334 = vrot.lane.b32.xlu0 %v1250, 32
    %v1335 = vpop.permute.xlu0 %1334
    %v1338 = vsel %vm239, %v1329, %v1333
    %v1339 = vsel %vm239, %v1330, %v1335
    %s1340 = scalar_lea.vmem %s39, 128
    %v1341 = vld [vmem:[%s1340] sm:$0xff]
    %v1342 = vld [vmem:[%s1340 + $0x8] sm:$0xff]
    %v1343 = vld [vmem:[%s1340 + $0x10] sm:$0xff]
    %v1344 = vld [vmem:[%s1340 + $0x18] sm:$0xff]
    %v1345 = vld [vmem:[%s1340 + $0x20] sm:$0xff]
    %v1346 = vld [vmem:[%s1340 + $0x28] sm:$0xff]
    %v1347 = vld [vmem:[%s1340 + $0x30] sm:$0xff]
    %v1348 = vld [vmem:[%s1340 + $0x38] sm:$0xff]
    %s1349 = scalar_lea.vmem %s41, 2
    %v1350 = vld [vmem:[%s1349] sm:$0x1]
    %v1352 = vlaneseq
    %v1353 = vshrl.u32 %v1352, 7
    %v1354 = vsub.s32 0, %v1353
    %v1355 = vrot.slane %v1350, %v1354
    %v1358 = vsel %vm820, %v1338, 0
    %v1361 = vsel %vm820, %v1339, 0
    %1363 = vmatprep.subr.mxu0 0.0
    %1364 = vmatpush1.msra.mxu0 0.0
    %1365 = vmatprep.subr.mxu0 0.0
    %1366 = vmatpush1.msra.mxu0 0.0
    %1367 = vmatprep.subr.mxu0 0.0
    %1368 = vmatpush1.msra.mxu0 0.0
    %1369 = vmatprep.subr.mxu0 0.0
    %1370 = vmatpush1.msra.mxu0 0.0
    %1371 = vmatprep.subr.mxu0 0.0
    %1372 = vmatpush1.msra.mxu0 0.0
    %1373 = vmatprep.subr.mxu0 0.0
    %1374 = vmatpush1.msra.mxu0 0.0
    %1375 = vmatprep.subr.mxu0 0.0
    %1376 = vmatpush1.msra.mxu0 0.0
    %1377 = vmatprep.subr.mxu0 0.0
    %1378 = vmatpush1.msra.mxu0 0.0
    %1379 = vmatprep.subr.mxu0 0.0
    %1380 = vmatpush1.msra.mxu0 %v1348
    %1381 = vmatprep.subr.mxu0 0.0
    %1382 = vmatpush1.msra.mxu0 %v1347
    %1383 = vmatprep.subr.mxu0 0.0
    %1384 = vmatpush1.msra.mxu0 %v1346
    %1385 = vmatprep.subr.mxu0 0.0
    %1386 = vmatpush1.msra.mxu0 %v1345
    %1387 = vmatprep.subr.mxu0 0.0
    %1388 = vmatpush1.msra.mxu0 %v1344
    %1389 = vmatprep.subr.mxu0 0.0
    %1390 = vmatpush1.msra.mxu0 %v1343
    %1391 = vmatprep.subr.mxu0 0.0
    %1392 = vmatpush1.msra.mxu0 %v1342
    %1393 = vmatprep.subr.mxu0 0.0
    %1394 = vmatpush1.msra.mxu0 %v1341
    %1395 = vmatprep.subr.mxu0 0.0
    %1396 = vmatpush2.msra.mxu0 0.0
    %1397 = vmatprep.subr.mxu0 0.0
    %1398 = vmatpush2.msra.mxu0 0.0
    %1399 = vmatprep.subr.mxu0 0.0
    %1400 = vmatpush2.msra.mxu0 0.0
    %1401 = vmatprep.subr.mxu0 0.0
    %1402 = vmatpush2.msra.mxu0 0.0
    %1403 = vmatprep.subr.mxu0 0.0
    %1404 = vmatpush2.msra.mxu0 0.0
    %1405 = vmatprep.subr.mxu0 0.0
    %1406 = vmatpush2.msra.mxu0 0.0
    %1407 = vmatprep.subr.mxu0 0.0
    %1408 = vmatpush2.msra.mxu0 0.0
    %1409 = vmatprep.subr.mxu0 0.0
    %1410 = vmatpush2.msra.mxu0 0.0
    %1411 = vmatprep.subr.mxu0 0.0
    %1412 = vmatpush2.msra.mxu0 0.0
    %1413 = vmatprep.subr.mxu0 0.0
    %1414 = vmatpush2.msra.mxu0 0.0
    %1415 = vmatprep.subr.mxu0 0.0
    %1416 = vmatpush2.msra.mxu0 0.0
    %1417 = vmatprep.subr.mxu0 0.0
    %1418 = vmatpush2.msra.mxu0 0.0
    %1419 = vmatprep.subr.mxu0 0.0
    %1420 = vmatpush2.msra.mxu0 0.0
    %1421 = vmatprep.subr.mxu0 0.0
    %1422 = vmatpush2.msra.mxu0 0.0
    %1423 = vmatprep.subr.mxu0 0.0
    %1424 = vmatpush2.msra.mxu0 0.0
    %1425 = vmatprep.subr.mxu0 0.0
    %1426 = vmatpush2.msra.mxu0 0.0
    %1427 = vmatprep.mubr.f32.mxu0 0.0
    %1428 = vmatmul.mubr.f32.gmra.mxu0 %v1358
    %v1429 = vpop.f32.mrf.mxu0
    %v1430 = vadd.f32 %v1355, %v1429
    %v1431 = vpop.f32.mrf.mxu0
    %1432 = vmatprep.mubr.f32.mxu0 0.0
    %1433 = vmatmul.mubr.f32.gmra.mxu0 %v1361
    %v1434 = vpop.f32.mrf.mxu0
    %v1435 = vadd.f32 %v1355, %v1434
    %v1436 = vpop.f32.mrf.mxu0
    %1437 = vdwg.mxu0
    %s1438 = scalar_lea.vmem %s43, 2
    %v1439 = vld [vmem:[%s1438] sm:$0x1]
    %v1441 = vlaneseq
    %v1442 = vshrl.u32 %v1441, 7
    %v1443 = vsub.s32 0, %v1442
    %v1444 = vrot.slane %v1439, %v1443
    %v1446 = vmul.f32 %v1430, %v1444
    %v1447 = vmul.f32 %v1435, %v1444
    %s1448 = scalar_lea.vmem %s45, 2
    %v1449 = vld [vmem:[%s1448] sm:$0x1]
    %v1451 = vlaneseq
    %v1452 = vshrl.u32 %v1451, 7
    %v1453 = vsub.s32 0, %v1452
    %v1454 = vrot.slane %v1449, %v1453
    %v1456 = vadd.f32 %v1446, %v1454
    %v1457 = vadd.f32 %v1447, %v1454
    %vm1458 = vcmp.gt.f32.partialorder %v1456, 0.0
    %vm1459 = vcmp.gt.f32.partialorder %v1457, 0.0
    %v1460 = vmul.f32 %v1456, 0.1
    %v1461 = vmul.f32 %v1457, 0.1
    %v1462 = vsel %vm1458, %v1456, %v1460
    %v1463 = vsel %vm1459, %v1457, %v1461
    %s1464 = scalar_lea.vmem %s47, 2
    %v1465 = vld [vmem:[%s1464] sm:$0x1]
    %s1466 = scalar_lea.vmem %s49, 2
    %v1467 = vld [vmem:[%s1466] sm:$0x1]
    %v1468 = vsel %vm239, %v1462, 0.0
    %1469 = vadd.xlane.f32.xlu0 %v1468
    %v1470 = vpop.xlane.xlu0 %1469
    %v1471 = vsel %vm931, %v1463, 0.0
    %1472 = vadd.xlane.f32.xlu0 %v1471
    %v1473 = vpop.xlane.xlu0 %1472
    %v1474 = vmul.f32 %v1470, %v935
    %v1475 = vmul.f32 %v1473, %v935
    %v1476 = vmul.f32 %v1462, %v1462
    %v1477 = vmul.f32 %v1463, %v1463
    %v1478 = vsel %vm239, %v1476, 0.0
    %1479 = vadd.xlane.f32.xlu0 %v1478
    %v1480 = vpop.xlane.xlu0 %1479
    %v1481 = vsel %vm931, %v1477, 0.0
    %1482 = vadd.xlane.f32.xlu0 %v1481
    %v1483 = vpop.xlane.xlu0 %1482
    %v1484 = vmul.f32 %v1480, %v935
    %v1485 = vmul.f32 %v1483, %v935
    %v1486 = vmul.f32 %v1474, %v1474
    %v1487 = vmul.f32 %v1475, %v1475
    %v1488 = vsub.f32 %v1484, %v1486
    %v1489 = vsub.f32 %v1485, %v1487
    %v1490 = vsub.f32 %v1462, %v1474
    %v1491 = vsub.f32 %v1463, %v1475
    %v1492 = vadd.f32 %v1488, 1e-05
    %v1493 = vadd.f32 %v1489, 1e-05
    %v1494 = vrsqrt.pop %v1492
    %v1495 = vrsqrt.pop %v1493
    %v1496 = vmul.f32 %v1490, %v1494
    %v1497 = vmul.f32 %v1491, %v1495
    %v1499 = vlaneseq
    %v1500 = vshrl.u32 %v1499, 7
    %v1501 = vsub.s32 0, %v1500
    %v1502 = vrot.slane %v1465, %v1501
    %v1504 = vmul.f32 %v1496, %v1502
    %v1505 = vmul.f32 %v1497, %v1502
    %v1507 = vlaneseq
    %v1508 = vshrl.u32 %v1507, 7
    %v1509 = vsub.s32 0, %v1508
    %v1510 = vrot.slane %v1467, %v1509
    %v1512 = vadd.f32 %v1504, %v1510
    %v1513 = vadd.f32 %v1505, %v1510
    %v1514 = vld [vmem:[%s13] sm:$0xff]
    %v1515 = vld [vmem:[%s13 + $0x8] sm:$0xf]
    %v1516 = vld [vmem:[%s51] sm:$0xff]
    %v1517 = vld [vmem:[%s51 + $0x8] sm:$0xff]
    %v1518 = vld [vmem:[%s51 + $0x10] sm:$0xff]
    %v1519 = vld [vmem:[%s51 + $0x18] sm:$0xff]
    %v1521 = vsel %vm239, %v1512, 0
    %v1524 = vsel %vm239, %v1513, 0
    %1526 = vmatprep.subr.mxu0 0.0
    %1527 = vmatpush1.msra.mxu0 0.0
    %1528 = vmatprep.subr.mxu0 0.0
    %1529 = vmatpush1.msra.mxu0 0.0
    %1530 = vmatprep.subr.mxu0 0.0
    %1531 = vmatpush1.msra.mxu0 0.0
    %1532 = vmatprep.subr.mxu0 0.0
    %1533 = vmatpush1.msra.mxu0 0.0
    %1534 = vmatprep.subr.mxu0 0.0
    %1535 = vmatpush1.msra.mxu0 0.0
    %1536 = vmatprep.subr.mxu0 0.0
    %1537 = vmatpush1.msra.mxu0 0.0
    %1538 = vmatprep.subr.mxu0 0.0
    %1539 = vmatpush1.msra.mxu0 0.0
    %1540 = vmatprep.subr.mxu0 0.0
    %1541 = vmatpush1.msra.mxu0 0.0
    %1542 = vmatprep.subr.mxu0 0.0
    %1543 = vmatpush1.msra.mxu0 0.0
    %1544 = vmatprep.subr.mxu0 0.0
    %1545 = vmatpush1.msra.mxu0 0.0
    %1546 = vmatprep.subr.mxu0 0.0
    %1547 = vmatpush1.msra.mxu0 0.0
    %1548 = vmatprep.subr.mxu0 0.0
    %1549 = vmatpush1.msra.mxu0 0.0
    %1550 = vmatprep.subr.mxu0 0.0
    %1551 = vmatpush1.msra.mxu0 %v1519
    %1552 = vmatprep.subr.mxu0 0.0
    %1553 = vmatpush1.msra.mxu0 %v1518
    %1554 = vmatprep.subr.mxu0 0.0
    %1555 = vmatpush1.msra.mxu0 %v1517
    %1556 = vmatprep.subr.mxu0 0.0
    %1557 = vmatpush1.msra.mxu0 %v1516
    %1558 = vmatprep.subr.mxu0 0.0
    %1559 = vmatpush2.msra.mxu0 0.0
    %1560 = vmatprep.subr.mxu0 0.0
    %1561 = vmatpush2.msra.mxu0 0.0
    %1562 = vmatprep.subr.mxu0 0.0
    %1563 = vmatpush2.msra.mxu0 0.0
    %1564 = vmatprep.subr.mxu0 0.0
    %1565 = vmatpush2.msra.mxu0 0.0
    %1566 = vmatprep.subr.mxu0 0.0
    %1567 = vmatpush2.msra.mxu0 0.0
    %1568 = vmatprep.subr.mxu0 0.0
    %1569 = vmatpush2.msra.mxu0 0.0
    %1570 = vmatprep.subr.mxu0 0.0
    %1571 = vmatpush2.msra.mxu0 0.0
    %1572 = vmatprep.subr.mxu0 0.0
    %1573 = vmatpush2.msra.mxu0 0.0
    %1574 = vmatprep.subr.mxu0 0.0
    %1575 = vmatpush2.msra.mxu0 0.0
    %1576 = vmatprep.subr.mxu0 0.0
    %1577 = vmatpush2.msra.mxu0 0.0
    %1578 = vmatprep.subr.mxu0 0.0
    %1579 = vmatpush2.msra.mxu0 0.0
    %1580 = vmatprep.subr.mxu0 0.0
    %1581 = vmatpush2.msra.mxu0 0.0
    %1582 = vmatprep.subr.mxu0 0.0
    %1583 = vmatpush2.msra.mxu0 0.0
    %1584 = vmatprep.subr.mxu0 0.0
    %1585 = vmatpush2.msra.mxu0 0.0
    %1586 = vmatprep.subr.mxu0 0.0
    %1587 = vmatpush2.msra.mxu0 0.0
    %1588 = vmatprep.subr.mxu0 0.0
    %1589 = vmatpush2.msra.mxu0 0.0
    %1590 = vmatprep.mubr.f32.mxu0 0.0
    %1591 = vmatmul.mubr.f32.gmra.mxu0 %v1521
    %v1592 = vpop.f32.mrf.mxu0
    %v1593 = vadd.f32 0.0, %v1592
    %v1594 = vpop.f32.mrf.mxu0
    %1595 = vmatprep.mubr.f32.mxu0 0.0
    %1596 = vmatmul.mubr.f32.gmra.mxu0 %v1524
    %v1597 = vpop.f32.mrf.mxu0
    %v1598 = vadd.f32 0.0, %v1597
    %v1599 = vpop.f32.mrf.mxu0
    %1600 = vdwg.mxu0
    %v1601 = vld [vmem:[%s53] sm:$0x1]
    %v1603 = vlaneseq
    %v1604 = vshrl.u32 %v1603, 7
    %v1605 = vsub.s32 0, %v1604
    %v1606 = vrot.slane %v1601, %v1605
    %v1608 = vmul.f32 %v1593, %v1606
    %v1609 = vmul.f32 %v1598, %v1606
    %v1610 = vld [vmem:[%s55] sm:$0xff]
    %v1611 = vld [vmem:[%s55 + $0x8] sm:$0xff]
    %v1612 = vld [vmem:[%s55 + $0x10] sm:$0xff]
    %v1613 = vld [vmem:[%s55 + $0x18] sm:$0xff]
    %v1614 = vld [vmem:[%s55 + $0x20] sm:$0xff]
    %v1615 = vld [vmem:[%s55 + $0x28] sm:$0xff]
    %v1616 = vld [vmem:[%s55 + $0x30] sm:$0xff]
    %v1617 = vld [vmem:[%s55 + $0x38] sm:$0xff]
    %v1619 = vsel %vm820, %v1608, 0
    %v1622 = vsel %vm820, %v1609, 0
    %1624 = vmatprep.subr.mxu0 0.0
    %1625 = vmatpush1.msra.mxu0 0.0
    %1626 = vmatprep.subr.mxu0 0.0
    %1627 = vmatpush1.msra.mxu0 0.0
    %1628 = vmatprep.subr.mxu0 0.0
    %1629 = vmatpush1.msra.mxu0 0.0
    %1630 = vmatprep.subr.mxu0 0.0
    %1631 = vmatpush1.msra.mxu0 0.0
    %1632 = vmatprep.subr.mxu0 0.0
    %1633 = vmatpush1.msra.mxu0 0.0
    %1634 = vmatprep.subr.mxu0 0.0
    %1635 = vmatpush1.msra.mxu0 0.0
    %1636 = vmatprep.subr.mxu0 0.0
    %1637 = vmatpush1.msra.mxu0 0.0
    %1638 = vmatprep.subr.mxu0 0.0
    %1639 = vmatpush1.msra.mxu0 0.0
    %1640 = vmatprep.subr.mxu0 0.0
    %1641 = vmatpush1.msra.mxu0 %v1617
    %1642 = vmatprep.subr.mxu0 0.0
    %1643 = vmatpush1.msra.mxu0 %v1616
    %1644 = vmatprep.subr.mxu0 0.0
    %1645 = vmatpush1.msra.mxu0 %v1615
    %1646 = vmatprep.subr.mxu0 0.0
    %1647 = vmatpush1.msra.mxu0 %v1614
    %1648 = vmatprep.subr.mxu0 0.0
    %1649 = vmatpush1.msra.mxu0 %v1613
    %1650 = vmatprep.subr.mxu0 0.0
    %1651 = vmatpush1.msra.mxu0 %v1612
    %1652 = vmatprep.subr.mxu0 0.0
    %1653 = vmatpush1.msra.mxu0 %v1611
    %1654 = vmatprep.subr.mxu0 0.0
    %1655 = vmatpush1.msra.mxu0 %v1610
    %1656 = vmatprep.subr.mxu0 0.0
    %1657 = vmatpush2.msra.mxu0 0.0
    %1658 = vmatprep.subr.mxu0 0.0
    %1659 = vmatpush2.msra.mxu0 0.0
    %1660 = vmatprep.subr.mxu0 0.0
    %1661 = vmatpush2.msra.mxu0 0.0
    %1662 = vmatprep.subr.mxu0 0.0
    %1663 = vmatpush2.msra.mxu0 0.0
    %1664 = vmatprep.subr.mxu0 0.0
    %1665 = vmatpush2.msra.mxu0 0.0
    %1666 = vmatprep.subr.mxu0 0.0
    %1667 = vmatpush2.msra.mxu0 0.0
    %1668 = vmatprep.subr.mxu0 0.0
    %1669 = vmatpush2.msra.mxu0 0.0
    %1670 = vmatprep.subr.mxu0 0.0
    %1671 = vmatpush2.msra.mxu0 0.0
    %1672 = vmatprep.subr.mxu0 0.0
    %1673 = vmatpush2.msra.mxu0 0.0
    %1674 = vmatprep.subr.mxu0 0.0
    %1675 = vmatpush2.msra.mxu0 0.0
    %1676 = vmatprep.subr.mxu0 0.0
    %1677 = vmatpush2.msra.mxu0 0.0
    %1678 = vmatprep.subr.mxu0 0.0
    %1679 = vmatpush2.msra.mxu0 0.0
    %1680 = vmatprep.subr.mxu0 0.0
    %1681 = vmatpush2.msra.mxu0 0.0
    %1682 = vmatprep.subr.mxu0 0.0
    %1683 = vmatpush2.msra.mxu0 0.0
    %1684 = vmatprep.subr.mxu0 0.0
    %1685 = vmatpush2.msra.mxu0 0.0
    %1686 = vmatprep.subr.mxu0 0.0
    %1687 = vmatpush2.msra.mxu0 0.0
    %1688 = vmatprep.mubr.f32.mxu0 0.0
    %1689 = vmatmul.mubr.f32.gmra.mxu0 %v1619
    %v1690 = vpop.f32.mrf.mxu0
    %v1691 = vadd.f32 0.0, %v1690
    %v1692 = vpop.f32.mrf.mxu0
    %1693 = vmatprep.mubr.f32.mxu0 0.0
    %1694 = vmatmul.mubr.f32.gmra.mxu0 %v1622
    %v1695 = vpop.f32.mrf.mxu0
    %v1696 = vadd.f32 0.0, %v1695
    %v1697 = vpop.f32.mrf.mxu0
    %1698 = vdwg.mxu0
    %v1699 = vlaneseq
    %v1700 = vshrl.u32 %v1699, 7
    %v1701 = vsub.s32 0, %v1700
    %v1702 = vrot.slane %v1514, %v1701
    %1704 = vbcast.lane.b32.xlu0 %v1702, 256
    %v1705 = vpop.permute.xlu0 %1704
    %v1706 = vlaneseq
    %v1707 = vshrl.u32 %v1706, 7
    %v1708 = vsub.s32 1, %v1707
    %v1709 = vrot.slane %v1514, %v1708
    %1711 = vbcast.lane.b32.xlu0 %v1709, 256
    %v1712 = vpop.permute.xlu0 %1711
    %v1713 = vlaneseq
    %v1714 = vshrl.u32 %v1713, 7
    %v1715 = vsub.s32 2, %v1714
    %v1716 = vrot.slane %v1514, %v1715
    %1718 = vbcast.lane.b32.xlu0 %v1716, 256
    %v1719 = vpop.permute.xlu0 %1718
    %v1720 = vlaneseq
    %v1721 = vshrl.u32 %v1720, 7
    %v1722 = vsub.s32 3, %v1721
    %v1723 = vrot.slane %v1514, %v1722
    %1725 = vbcast.lane.b32.xlu0 %v1723, 256
    %v1726 = vpop.permute.xlu0 %1725
    %v1727 = vlaneseq
    %v1728 = vshrl.u32 %v1727, 7
    %v1729 = vsub.s32 4, %v1728
    %v1730 = vrot.slane %v1514, %v1729
    %1732 = vbcast.lane.b32.xlu0 %v1730, 256
    %v1733 = vpop.permute.xlu0 %1732
    %v1734 = vlaneseq
    %v1735 = vshrl.u32 %v1734, 7
    %v1736 = vsub.s32 5, %v1735
    %v1737 = vrot.slane %v1514, %v1736
    %1739 = vbcast.lane.b32.xlu0 %v1737, 256
    %v1740 = vpop.permute.xlu0 %1739
    %v1741 = vlaneseq
    %v1742 = vshrl.u32 %v1741, 7
    %v1743 = vsub.s32 6, %v1742
    %v1744 = vrot.slane %v1514, %v1743
    %1746 = vbcast.lane.b32.xlu0 %v1744, 256
    %v1747 = vpop.permute.xlu0 %1746
    %v1748 = vlaneseq
    %v1749 = vshrl.u32 %v1748, 7
    %v1750 = vsub.s32 7, %v1749
    %v1751 = vrot.slane %v1514, %v1750
    %1753 = vbcast.lane.b32.xlu0 %v1751, 256
    %v1754 = vpop.permute.xlu0 %1753
    %v1755 = vlaneseq
    %v1756 = vshrl.u32 %v1755, 7
    %v1757 = vsub.s32 0, %v1756
    %v1758 = vrot.slane %v1515, %v1757
    %1760 = vbcast.lane.b32.xlu0 %v1758, 256
    %v1761 = vpop.permute.xlu0 %1760
    %v1762 = vlaneseq
    %v1763 = vshrl.u32 %v1762, 7
    %v1764 = vsub.s32 1, %v1763
    %v1765 = vrot.slane %v1515, %v1764
    %1767 = vbcast.lane.b32.xlu0 %v1765, 256
    %v1768 = vpop.permute.xlu0 %1767
    %v1769 = vlaneseq
    %v1770 = vshrl.u32 %v1769, 7
    %v1771 = vsub.s32 2, %v1770
    %v1772 = vrot.slane %v1515, %v1771
    %1774 = vbcast.lane.b32.xlu0 %v1772, 256
    %v1775 = vpop.permute.xlu0 %1774
    %v1776 = vlaneseq
    %v1777 = vshrl.u32 %v1776, 7
    %v1778 = vsub.s32 3, %v1777
    %v1779 = vrot.slane %v1515, %v1778
    %1781 = vbcast.lane.b32.xlu0 %v1779, 256
    %v1782 = vpop.permute.xlu0 %1781
    %vm1783 = vcmp.gt.f32.partialorder %v1705, 0.5
    %vm1784 = vcmp.gt.f32.partialorder %v1712, 0.5
    %vm1785 = vcmp.gt.f32.partialorder %v1719, 0.5
    %vm1786 = vcmp.gt.f32.partialorder %v1726, 0.5
    %vm1787 = vcmp.gt.f32.partialorder %v1733, 0.5
    %vm1788 = vcmp.gt.f32.partialorder %v1740, 0.5
    %vm1789 = vcmp.gt.f32.partialorder %v1747, 0.5
    %vm1790 = vcmp.gt.f32.partialorder %v1754, 0.5
    %vm1791 = vcmp.gt.f32.partialorder %v1761, 0.5
    %vm1792 = vcmp.gt.f32.partialorder %v1768, 0.5
    %vm1793 = vcmp.gt.f32.partialorder %v1775, 0.5
    %vm1794 = vcmp.gt.f32.partialorder %v1782, 0.5
    %v1797 = vcombine.high %v1691, %v1691
    %v1799 = vunpack.c.l.s4 1966171168
    %v1800 = vunpack.c.0.s8 %v1799
    %v1801 = vlaneseq
    %v1802 = vshrl.u32 %v1801, 7
    %v1803 = vsub.s32 %v1800, %v1802
    %v1804 = vrot.slane %v1691, %v1803
    %v1806 = vunpack.c.l.s4 1966171168
    %v1807 = vunpack.c.0.s8 %v1806
    %v1808 = vlaneseq
    %v1809 = vshrl.u32 %v1808, 7
    %v1810 = vsub.s32 %v1807, %v1809
    %v1811 = vrot.slane %v1797, %v1810
    %v1812 = vcombine.high %v1804, %v1804
    %v1813 = vcombine.high %v1811, %v1811
    %v1815 = vunpack.c.l.s4 1966171168
    %v1816 = vunpack.c.0.s8 %v1815
    %v1817 = vlaneseq
    %v1818 = vshrl.u32 %v1817, 7
    %v1819 = vsub.s32 %v1816, %v1818
    %v1820 = vrot.slane %v1804, %v1819
    %v1822 = vunpack.c.l.s4 1966171168
    %v1823 = vunpack.c.0.s8 %v1822
    %v1824 = vlaneseq
    %v1825 = vshrl.u32 %v1824, 7
    %v1826 = vsub.s32 %v1823, %v1825
    %v1827 = vrot.slane %v1811, %v1826
    %v1829 = vunpack.c.l.s4 1966171168
    %v1830 = vunpack.c.0.s8 %v1829
    %v1831 = vlaneseq
    %v1832 = vshrl.u32 %v1831, 7
    %v1833 = vsub.s32 %v1830, %v1832
    %v1834 = vrot.slane %v1812, %v1833
    %v1836 = vunpack.c.l.s4 1966171168
    %v1837 = vunpack.c.0.s8 %v1836
    %v1838 = vlaneseq
    %v1839 = vshrl.u32 %v1838, 7
    %v1840 = vsub.s32 %v1837, %v1839
    %v1841 = vrot.slane %v1813, %v1840
    %v1842 = vcombine.high %v1820, %v1820
    %v1843 = vcombine.high %v1827, %v1827
    %v1844 = vcombine.high %v1834, %v1834
    %v1845 = vcombine.high %v1841, %v1841
    %v1847 = vunpack.c.l.s4 1966171168
    %v1848 = vunpack.c.0.s8 %v1847
    %v1849 = vlaneseq
    %v1850 = vshrl.u32 %v1849, 7
    %v1851 = vsub.s32 %v1848, %v1850
    %v1852 = vrot.slane %v1696, %v1851
    %v1853 = vcombine.high %v1852, %v1852
    %v1855 = vunpack.c.l.s4 1966171168
    %v1856 = vunpack.c.0.s8 %v1855
    %v1857 = vlaneseq
    %v1858 = vshrl.u32 %v1857, 7
    %v1859 = vsub.s32 %v1856, %v1858
    %v1860 = vrot.slane %v1852, %v1859
    %v1862 = vunpack.c.l.s4 1966171168
    %v1863 = vunpack.c.0.s8 %v1862
    %v1864 = vlaneseq
    %v1865 = vshrl.u32 %v1864, 7
    %v1866 = vsub.s32 %v1863, %v1865
    %v1867 = vrot.slane %v1853, %v1866
    %v1868 = vcombine.high %v1860, %v1860
    %v1869 = vcombine.high %v1867, %v1867
    %v1870 = vsel %vm1783, 1, 0
    %v1871 = vsel %vm1784, 1, 0
    %v1872 = vsel %vm1785, 1, 0
    %v1873 = vsel %vm1786, 1, 0
    %v1874 = vsel %vm1787, 1, 0
    %v1875 = vsel %vm1788, 1, 0
    %v1876 = vsel %vm1789, 1, 0
    %v1877 = vsel %vm1790, 1, 0
    %v1878 = vsel %vm1791, 1, 0
    %v1879 = vsel %vm1792, 1, 0
    %v1880 = vsel %vm1793, 1, 0
    %v1881 = vsel %vm1794, 1, 0
    %vm1882 = vcmp.eq.s32.totalorder %v1870, 1
    %vm1883 = vcmp.eq.s32.totalorder %v1871, 1
    %vm1884 = vcmp.eq.s32.totalorder %v1872, 1
    %vm1885 = vcmp.eq.s32.totalorder %v1873, 1
    %vm1886 = vcmp.eq.s32.totalorder %v1874, 1
    %vm1887 = vcmp.eq.s32.totalorder %v1875, 1
    %vm1888 = vcmp.eq.s32.totalorder %v1876, 1
    %vm1889 = vcmp.eq.s32.totalorder %v1877, 1
    %vm1890 = vcmp.eq.s32.totalorder %v1878, 1
    %vm1891 = vcmp.eq.s32.totalorder %v1879, 1
    %vm1892 = vcmp.eq.s32.totalorder %v1880, 1
    %vm1893 = vcmp.eq.s32.totalorder %v1881, 1
    %v1894 = vlaneseq
    %v1895 = vshrl.u32 %v1894, 7
    %v1896 = vsub.s32 0, %v1895
    %v1897 = vrot.slane %v1820, %v1896
    %v1898 = vlaneseq
    %v1899 = vshrl.u32 %v1898, 7
    %v1900 = vsub.s32 0, %v1899
    %v1901 = vrot.slane %v1834, %v1900
    %v1902 = vlaneseq
    %v1903 = vshrl.u32 %v1902, 7
    %v1904 = vsub.s32 0, %v1903
    %v1905 = vrot.slane %v1842, %v1904
    %v1906 = vlaneseq
    %v1907 = vshrl.u32 %v1906, 7
    %v1908 = vsub.s32 0, %v1907
    %v1909 = vrot.slane %v1844, %v1908
    %v1910 = vlaneseq
    %v1911 = vshrl.u32 %v1910, 7
    %v1912 = vsub.s32 0, %v1911
    %v1913 = vrot.slane %v1827, %v1912
    %v1914 = vlaneseq
    %v1915 = vshrl.u32 %v1914, 7
    %v1916 = vsub.s32 0, %v1915
    %v1917 = vrot.slane %v1841, %v1916
    %v1918 = vlaneseq
    %v1919 = vshrl.u32 %v1918, 7
    %v1920 = vsub.s32 0, %v1919
    %v1921 = vrot.slane %v1843, %v1920
    %v1922 = vlaneseq
    %v1923 = vshrl.u32 %v1922, 7
    %v1924 = vsub.s32 0, %v1923
    %v1925 = vrot.slane %v1845, %v1924
    %v1926 = vlaneseq
    %v1927 = vshrl.u32 %v1926, 7
    %v1928 = vsub.s32 0, %v1927
    %v1929 = vrot.slane %v1860, %v1928
    %v1930 = vlaneseq
    %v1931 = vshrl.u32 %v1930, 7
    %v1932 = vsub.s32 0, %v1931
    %v1933 = vrot.slane %v1867, %v1932
    %v1934 = vlaneseq
    %v1935 = vshrl.u32 %v1934, 7
    %v1936 = vsub.s32 0, %v1935
    %v1937 = vrot.slane %v1868, %v1936
    %v1938 = vlaneseq
    %v1939 = vshrl.u32 %v1938, 7
    %v1940 = vsub.s32 0, %v1939
    %v1941 = vrot.slane %v1869, %v1940
    %v1954 = vsel %vm1882, %v1897, -1e+30
    %v1955 = vsel %vm1883, %v1901, -1e+30
    %v1956 = vsel %vm1884, %v1905, -1e+30
    %v1957 = vsel %vm1885, %v1909, -1e+30
    %v1958 = vsel %vm1886, %v1913, -1e+30
    %v1959 = vsel %vm1887, %v1917, -1e+30
    %v1960 = vsel %vm1888, %v1921, -1e+30
    %v1961 = vsel %vm1889, %v1925, -1e+30
    %v1962 = vsel %vm1890, %v1929, -1e+30
    %v1963 = vsel %vm1891, %v1933, -1e+30
    %v1964 = vsel %vm1892, %v1937, -1e+30
    %v1965 = vsel %vm1893, %v1941, -1e+30
    %vm1966 = vcmask 26624
    %v1967 = vsel %vm1966, %v1954, -inf
    %v1968 = vsel %vm1966, %v1955, -inf
    %v1969 = vsel %vm1966, %v1956, -inf
    %v1970 = vsel %vm1966, %v1957, -inf
    %v1971 = vsel %vm1966, %v1958, -inf
    %v1972 = vmax.f32 %v1967, %v1971
    %v1973 = vsel %vm1966, %v1959, -inf
    %v1974 = vmax.f32 %v1968, %v1973
    %v1975 = vsel %vm1966, %v1960, -inf
    %v1976 = vmax.f32 %v1969, %v1975
    %v1977 = vsel %vm1966, %v1961, -inf
    %v1978 = vmax.f32 %v1970, %v1977
    %v1979 = vsel %vm1966, %v1962, -inf
    %v1980 = vmax.f32 %v1972, %v1979
    %v1981 = vsel %vm1966, %v1963, -inf
    %v1982 = vmax.f32 %v1974, %v1981
    %v1983 = vsel %vm1966, %v1964, -inf
    %v1984 = vmax.f32 %v1976, %v1983
    %v1985 = vsel %vm1966, %v1965, -inf
    %v1986 = vmax.f32 %v1978, %v1985
    %v1987 = vmax.f32 %v1980, %v1982
    %v1988 = vmax.f32 %v1984, %v1986
    %v1989 = vmax.f32 %v1987, %v1988
    %vm1990 = vcmask 23552
    %v1992 = vsel %vm1990, %v1514, 0
    %v1995 = vsel %vm1990, %v1515, 0
    %vm1997 = vcmask 1042432
    %v1999 = vsel %vm1997, %v1989, 0
    %2001 = vmatprep.subr.mxu0 0.0
    %2002 = vmatpush1.msra.mxu0 0.0
    %2003 = vmatprep.subr.mxu0 0.0
    %2004 = vmatpush1.msra.mxu0 0.0
    %2005 = vmatprep.subr.mxu0 0.0
    %2006 = vmatpush1.msra.mxu0 0.0
    %2007 = vmatprep.subr.mxu0 0.0
    %2008 = vmatpush1.msra.mxu0 0.0
    %2009 = vmatprep.subr.mxu0 0.0
    %2010 = vmatpush1.msra.mxu0 0.0
    %2011 = vmatprep.subr.mxu0 0.0
    %2012 = vmatpush1.msra.mxu0 0.0
    %2013 = vmatprep.subr.mxu0 0.0
    %2014 = vmatpush1.msra.mxu0 0.0
    %2015 = vmatprep.subr.mxu0 0.0
    %2016 = vmatpush1.msra.mxu0 0.0
    %2017 = vmatprep.subr.mxu0 0.0
    %2018 = vmatpush1.msra.mxu0 0.0
    %2019 = vmatprep.subr.mxu0 0.0
    %2020 = vmatpush1.msra.mxu0 0.0
    %2021 = vmatprep.subr.mxu0 0.0
    %2022 = vmatpush1.msra.mxu0 0.0
    %2023 = vmatprep.subr.mxu0 0.0
    %2024 = vmatpush1.msra.mxu0 0.0
    %2025 = vmatprep.subr.mxu0 0.0
    %2026 = vmatpush1.msra.mxu0 0.0
    %2027 = vmatprep.subr.mxu0 0.0
    %2028 = vmatpush1.msra.mxu0 0.0
    %2029 = vmatprep.subr.mxu0 0.0
    %2030 = vmatpush1.msra.mxu0 0.0
    %2031 = vmatprep.subr.mxu0 0.0
    %2032 = vmatpush1.msra.mxu0 %v1999
    %2033 = vmatprep.subr.mxu0 0.0
    %2034 = vmatpush2.msra.mxu0 0.0
    %2035 = vmatprep.subr.mxu0 0.0
    %2036 = vmatpush2.msra.mxu0 0.0
    %2037 = vmatprep.subr.mxu0 0.0
    %2038 = vmatpush2.msra.mxu0 0.0
    %2039 = vmatprep.subr.mxu0 0.0
    %2040 = vmatpush2.msra.mxu0 0.0
    %2041 = vmatprep.subr.mxu0 0.0
    %2042 = vmatpush2.msra.mxu0 0.0
    %2043 = vmatprep.subr.mxu0 0.0
    %2044 = vmatpush2.msra.mxu0 0.0
    %2045 = vmatprep.subr.mxu0 0.0
    %2046 = vmatpush2.msra.mxu0 0.0
    %2047 = vmatprep.subr.mxu0 0.0
    %2048 = vmatpush2.msra.mxu0 0.0
    %2049 = vmatprep.subr.mxu0 0.0
    %2050 = vmatpush2.msra.mxu0 0.0
    %2051 = vmatprep.subr.mxu0 0.0
    %2052 = vmatpush2.msra.mxu0 0.0
    %2053 = vmatprep.subr.mxu0 0.0
    %2054 = vmatpush2.msra.mxu0 0.0
    %2055 = vmatprep.subr.mxu0 0.0
    %2056 = vmatpush2.msra.mxu0 0.0
    %2057 = vmatprep.subr.mxu0 0.0
    %2058 = vmatpush2.msra.mxu0 0.0
    %2059 = vmatprep.subr.mxu0 0.0
    %2060 = vmatpush2.msra.mxu0 0.0
    %2061 = vmatprep.subr.mxu0 0.0
    %2062 = vmatpush2.msra.mxu0 0.0
    %2063 = vmatprep.subr.mxu0 0.0
    %2064 = vmatpush2.msra.mxu0 0.0
    %2065 = vmatprep.mubr.f32.mxu0 0.0
    %2066 = vmatmul.mubr.f32.gmra.mxu0 %v1992
    %v2067 = vpop.f32.mrf.mxu0
    %v2068 = vadd.f32 0.0, %v2067
    %v2069 = vpop.f32.mrf.mxu0
    %2070 = vmatprep.mubr.f32.mxu0 0.0
    %2071 = vmatmul.mubr.f32.gmra.mxu0 %v1995
    %v2072 = vpop.f32.mrf.mxu0
    %v2073 = vadd.f32 0.0, %v2072
    %v2074 = vpop.f32.mrf.mxu0
    %2075 = vdwg.mxu0
    %v2076 = vsub.f32 %v1691, %v2068
    %v2077 = vsub.f32 %v1696, %v2073
    %v2078 = vmul.f32 %v2076, 1.442695
    %v2079 = vpow.pop %v2078
    %v2080 = vmul.f32 %v2077, 1.442695
    %v2081 = vpow.pop %v2080
    %v2082 = vld [vmem:[%s11] sm:$0x7]
    %v2084 = vsel %vm708, %v2082, 0
    %v2087 = vsel %vm715, %v2081, 0
    %2089 = vmatprep.subr.mxu0 0.0
    %2090 = vmatpush1.msra.mxu0 0.0
    %2091 = vmatprep.subr.mxu0 0.0
    %2092 = vmatpush1.msra.mxu0 0.0
    %2093 = vmatprep.subr.mxu0 0.0
    %2094 = vmatpush1.msra.mxu0 0.0
    %2095 = vmatprep.subr.mxu0 0.0
    %2096 = vmatpush1.msra.mxu0 0.0
    %2097 = vmatprep.subr.mxu0 0.0
    %2098 = vmatpush1.msra.mxu0 0.0
    %2099 = vmatprep.subr.mxu0 0.0
    %2100 = vmatpush1.msra.mxu0 0.0
    %2101 = vmatprep.subr.mxu0 0.0
    %2102 = vmatpush1.msra.mxu0 0.0
    %2103 = vmatprep.subr.mxu0 0.0
    %2104 = vmatpush1.msra.mxu0 0.0
    %2105 = vmatprep.subr.mxu0 0.0
    %2106 = vmatpush1.msra.mxu0 0.0
    %2107 = vmatprep.subr.mxu0 0.0
    %2108 = vmatpush1.msra.mxu0 0.0
    %2109 = vmatprep.subr.mxu0 0.0
    %2110 = vmatpush1.msra.mxu0 0.0
    %2111 = vmatprep.subr.mxu0 0.0
    %2112 = vmatpush1.msra.mxu0 0.0
    %2113 = vmatprep.subr.mxu0 0.0
    %2114 = vmatpush1.msra.mxu0 0.0
    %2115 = vmatprep.subr.mxu0 0.0
    %2116 = vmatpush1.msra.mxu0 0.0
    %2117 = vmatprep.subr.mxu0 0.0
    %2118 = vmatpush1.msra.mxu0 %v2087
    %2119 = vmatprep.subr.mxu0 0.0
    %2120 = vmatpush1.msra.mxu0 %v2079
    %2121 = vmatprep.subr.mxu0 0.0
    %2122 = vmatpush2.msra.mxu0 0.0
    %2123 = vmatprep.subr.mxu0 0.0
    %2124 = vmatpush2.msra.mxu0 0.0
    %2125 = vmatprep.subr.mxu0 0.0
    %2126 = vmatpush2.msra.mxu0 0.0
    %2127 = vmatprep.subr.mxu0 0.0
    %2128 = vmatpush2.msra.mxu0 0.0
    %2129 = vmatprep.subr.mxu0 0.0
    %2130 = vmatpush2.msra.mxu0 0.0
    %2131 = vmatprep.subr.mxu0 0.0
    %2132 = vmatpush2.msra.mxu0 0.0
    %2133 = vmatprep.subr.mxu0 0.0
    %2134 = vmatpush2.msra.mxu0 0.0
    %2135 = vmatprep.subr.mxu0 0.0
    %2136 = vmatpush2.msra.mxu0 0.0
    %2137 = vmatprep.subr.mxu0 0.0
    %2138 = vmatpush2.msra.mxu0 0.0
    %2139 = vmatprep.subr.mxu0 0.0
    %2140 = vmatpush2.msra.mxu0 0.0
    %2141 = vmatprep.subr.mxu0 0.0
    %2142 = vmatpush2.msra.mxu0 0.0
    %2143 = vmatprep.subr.mxu0 0.0
    %2144 = vmatpush2.msra.mxu0 0.0
    %2145 = vmatprep.subr.mxu0 0.0
    %2146 = vmatpush2.msra.mxu0 0.0
    %2147 = vmatprep.subr.mxu0 0.0
    %2148 = vmatpush2.msra.mxu0 0.0
    %2149 = vmatprep.subr.mxu0 0.0
    %2150 = vmatpush2.msra.mxu0 0.0
    %2151 = vmatprep.subr.mxu0 0.0
    %2152 = vmatpush2.msra.mxu0 0.0
    %2153 = vmatprep.mubr.f32.mxu0 0.0
    %2154 = vmatmul.mubr.f32.gmra.mxu0 %v2084
    %v2155 = vpop.f32.mrf.mxu0
    %v2156 = vadd.f32 0.0, %v2155
    %v2157 = vpop.f32.mrf.mxu0
    %2158 = vdwg.mxu0
    %v2160 = vsel %vm1997, %v2156, 0
    %2162 = vmatprep.subr.mxu0 0.0
    %2163 = vmatpush1.msra.mxu0 0.0
    %2164 = vmatprep.subr.mxu0 0.0
    %2165 = vmatpush1.msra.mxu0 0.0
    %2166 = vmatprep.subr.mxu0 0.0
    %2167 = vmatpush1.msra.mxu0 0.0
    %2168 = vmatprep.subr.mxu0 0.0
    %2169 = vmatpush1.msra.mxu0 0.0
    %2170 = vmatprep.subr.mxu0 0.0
    %2171 = vmatpush1.msra.mxu0 0.0
    %2172 = vmatprep.subr.mxu0 0.0
    %2173 = vmatpush1.msra.mxu0 0.0
    %2174 = vmatprep.subr.mxu0 0.0
    %2175 = vmatpush1.msra.mxu0 0.0
    %2176 = vmatprep.subr.mxu0 0.0
    %2177 = vmatpush1.msra.mxu0 0.0
    %2178 = vmatprep.subr.mxu0 0.0
    %2179 = vmatpush1.msra.mxu0 0.0
    %2180 = vmatprep.subr.mxu0 0.0
    %2181 = vmatpush1.msra.mxu0 0.0
    %2182 = vmatprep.subr.mxu0 0.0
    %2183 = vmatpush1.msra.mxu0 0.0
    %2184 = vmatprep.subr.mxu0 0.0
    %2185 = vmatpush1.msra.mxu0 0.0
    %2186 = vmatprep.subr.mxu0 0.0
    %2187 = vmatpush1.msra.mxu0 0.0
    %2188 = vmatprep.subr.mxu0 0.0
    %2189 = vmatpush1.msra.mxu0 0.0
    %2190 = vmatprep.subr.mxu0 0.0
    %2191 = vmatpush1.msra.mxu0 0.0
    %2192 = vmatprep.subr.mxu0 0.0
    %2193 = vmatpush1.msra.mxu0 %v2160
    %2194 = vmatprep.subr.mxu0 0.0
    %2195 = vmatpush2.msra.mxu0 0.0
    %2196 = vmatprep.subr.mxu0 0.0
    %2197 = vmatpush2.msra.mxu0 0.0
    %2198 = vmatprep.subr.mxu0 0.0
    %2199 = vmatpush2.msra.mxu0 0.0
    %2200 = vmatprep.subr.mxu0 0.0
    %2201 = vmatpush2.msra.mxu0 0.0
    %2202 = vmatprep.subr.mxu0 0.0
    %2203 = vmatpush2.msra.mxu0 0.0
    %2204 = vmatprep.subr.mxu0 0.0
    %2205 = vmatpush2.msra.mxu0 0.0
    %2206 = vmatprep.subr.mxu0 0.0
    %2207 = vmatpush2.msra.mxu0 0.0
    %2208 = vmatprep.subr.mxu0 0.0
    %2209 = vmatpush2.msra.mxu0 0.0
    %2210 = vmatprep.subr.mxu0 0.0
    %2211 = vmatpush2.msra.mxu0 0.0
    %2212 = vmatprep.subr.mxu0 0.0
    %2213 = vmatpush2.msra.mxu0 0.0
    %2214 = vmatprep.subr.mxu0 0.0
    %2215 = vmatpush2.msra.mxu0 0.0
    %2216 = vmatprep.subr.mxu0 0.0
    %2217 = vmatpush2.msra.mxu0 0.0
    %2218 = vmatprep.subr.mxu0 0.0
    %2219 = vmatpush2.msra.mxu0 0.0
    %2220 = vmatprep.subr.mxu0 0.0
    %2221 = vmatpush2.msra.mxu0 0.0
    %2222 = vmatprep.subr.mxu0 0.0
    %2223 = vmatpush2.msra.mxu0 0.0
    %2224 = vmatprep.subr.mxu0 0.0
    %2225 = vmatpush2.msra.mxu0 0.0
    %2226 = vmatprep.mubr.f32.mxu0 0.0
    %2227 = vmatmul.mubr.f32.gmra.mxu0 %v1992
    %v2228 = vpop.f32.mrf.mxu0
    %v2229 = vadd.f32 0.0, %v2228
    %v2230 = vpop.f32.mrf.mxu0
    %2231 = vmatprep.mubr.f32.mxu0 0.0
    %2232 = vmatmul.mubr.f32.gmra.mxu0 %v1995
    %v2233 = vpop.f32.mrf.mxu0
    %v2234 = vadd.f32 0.0, %v2233
    %v2235 = vpop.f32.mrf.mxu0
    %2236 = vdwg.mxu0
    %v2237 = vrcp.pop %v2229
    %v2238 = vrcp.pop %v2234
    %v2239 = vmul.f32 %v2079, %v2237
    %v2240 = vmul.f32 %v2081, %v2238
    %v2241 = vld [vmem:[%s57] sm:$0xf]
    %vm2242 = vcmask 31744
    %v2244 = vsel %vm2242, %v2239, 0
    %v2247 = vsel %vm2242, %v2240, 0
    %v2250 = vsel %vm715, %v2241, 0
    %2252 = vmatprep.subr.mxu0 0.0
    %2253 = vmatpush1.msra.mxu0 0.0
    %2254 = vmatprep.subr.mxu0 0.0
    %2255 = vmatpush1.msra.mxu0 0.0
    %2256 = vmatprep.subr.mxu0 0.0
    %2257 = vmatpush1.msra.mxu0 0.0
    %2258 = vmatprep.subr.mxu0 0.0
    %2259 = vmatpush1.msra.mxu0 0.0
    %2260 = vmatprep.subr.mxu0 0.0
    %2261 = vmatpush1.msra.mxu0 0.0
    %2262 = vmatprep.subr.mxu0 0.0
    %2263 = vmatpush1.msra.mxu0 0.0
    %2264 = vmatprep.subr.mxu0 0.0
    %2265 = vmatpush1.msra.mxu0 0.0
    %2266 = vmatprep.subr.mxu0 0.0
    %2267 = vmatpush1.msra.mxu0 0.0
    %2268 = vmatprep.subr.mxu0 0.0
    %2269 = vmatpush1.msra.mxu0 0.0
    %2270 = vmatprep.subr.mxu0 0.0
    %2271 = vmatpush1.msra.mxu0 0.0
    %2272 = vmatprep.subr.mxu0 0.0
    %2273 = vmatpush1.msra.mxu0 0.0
    %2274 = vmatprep.subr.mxu0 0.0
    %2275 = vmatpush1.msra.mxu0 0.0
    %2276 = vmatprep.subr.mxu0 0.0
    %2277 = vmatpush1.msra.mxu0 0.0
    %2278 = vmatprep.subr.mxu0 0.0
    %2279 = vmatpush1.msra.mxu0 0.0
    %2280 = vmatprep.subr.mxu0 0.0
    %2281 = vmatpush1.msra.mxu0 0.0
    %2282 = vmatprep.subr.mxu0 0.0
    %2283 = vmatpush1.msra.mxu0 %v2250
    %2284 = vmatprep.subr.mxu0 0.0
    %2285 = vmatpush2.msra.mxu0 0.0
    %2286 = vmatprep.subr.mxu0 0.0
    %2287 = vmatpush2.msra.mxu0 0.0
    %2288 = vmatprep.subr.mxu0 0.0
    %2289 = vmatpush2.msra.mxu0 0.0
    %2290 = vmatprep.subr.mxu0 0.0
    %2291 = vmatpush2.msra.mxu0 0.0
    %2292 = vmatprep.subr.mxu0 0.0
    %2293 = vmatpush2.msra.mxu0 0.0
    %2294 = vmatprep.subr.mxu0 0.0
    %2295 = vmatpush2.msra.mxu0 0.0
    %2296 = vmatprep.subr.mxu0 0.0
    %2297 = vmatpush2.msra.mxu0 0.0
    %2298 = vmatprep.subr.mxu0 0.0
    %2299 = vmatpush2.msra.mxu0 0.0
    %2300 = vmatprep.subr.mxu0 0.0
    %2301 = vmatpush2.msra.mxu0 0.0
    %2302 = vmatprep.subr.mxu0 0.0
    %2303 = vmatpush2.msra.mxu0 0.0
    %2304 = vmatprep.subr.mxu0 0.0
    %2305 = vmatpush2.msra.mxu0 0.0
    %2306 = vmatprep.subr.mxu0 0.0
    %2307 = vmatpush2.msra.mxu0 0.0
    %2308 = vmatprep.subr.mxu0 0.0
    %2309 = vmatpush2.msra.mxu0 0.0
    %2310 = vmatprep.subr.mxu0 0.0
    %2311 = vmatpush2.msra.mxu0 0.0
    %2312 = vmatprep.subr.mxu0 0.0
    %2313 = vmatpush2.msra.mxu0 0.0
    %2314 = vmatprep.subr.mxu0 0.0
    %2315 = vmatpush2.msra.mxu0 0.0
    %2316 = vmatprep.mubr.f32.mxu0 0.0
    %2317 = vmatmul.mubr.f32.gmra.mxu0 %v2244
    %v2318 = vpop.f32.mrf.mxu0
    %v2319 = vadd.f32 0.0, %v2318
    %v2320 = vpop.f32.mrf.mxu0
    %2321 = vmatprep.mubr.f32.mxu0 0.0
    %2322 = vmatmul.mubr.f32.gmra.mxu0 %v2247
    %v2323 = vpop.f32.mrf.mxu0
    %v2324 = vadd.f32 0.0, %v2323
    %v2325 = vpop.f32.mrf.mxu0
    %2326 = vdwg.mxu0
    %v2327 = vmul.f32 %v1593, %v2319
    %v2328 = vmul.f32 %v1598, %v2324
    %v2330 = vsel %vm715, %v2328, 0
    %2332 = vmatprep.subr.mxu0 0.0
    %2333 = vmatpush1.msra.mxu0 0.0
    %2334 = vmatprep.subr.mxu0 0.0
    %2335 = vmatpush1.msra.mxu0 0.0
    %2336 = vmatprep.subr.mxu0 0.0
    %2337 = vmatpush1.msra.mxu0 0.0
    %2338 = vmatprep.subr.mxu0 0.0
    %2339 = vmatpush1.msra.mxu0 0.0
    %2340 = vmatprep.subr.mxu0 0.0
    %2341 = vmatpush1.msra.mxu0 0.0
    %2342 = vmatprep.subr.mxu0 0.0
    %2343 = vmatpush1.msra.mxu0 0.0
    %2344 = vmatprep.subr.mxu0 0.0
    %2345 = vmatpush1.msra.mxu0 0.0
    %2346 = vmatprep.subr.mxu0 0.0
    %2347 = vmatpush1.msra.mxu0 0.0
    %2348 = vmatprep.subr.mxu0 0.0
    %2349 = vmatpush1.msra.mxu0 0.0
    %2350 = vmatprep.subr.mxu0 0.0
    %2351 = vmatpush1.msra.mxu0 0.0
    %2352 = vmatprep.subr.mxu0 0.0
    %2353 = vmatpush1.msra.mxu0 0.0
    %2354 = vmatprep.subr.mxu0 0.0
    %2355 = vmatpush1.msra.mxu0 0.0
    %2356 = vmatprep.subr.mxu0 0.0
    %2357 = vmatpush1.msra.mxu0 0.0
    %2358 = vmatprep.subr.mxu0 0.0
    %2359 = vmatpush1.msra.mxu0 0.0
    %2360 = vmatprep.subr.mxu0 0.0
    %2361 = vmatpush1.msra.mxu0 %v2330
    %2362 = vmatprep.subr.mxu0 0.0
    %2363 = vmatpush1.msra.mxu0 %v2327
    %2364 = vmatprep.subr.mxu0 0.0
    %2365 = vmatpush2.msra.mxu0 0.0
    %2366 = vmatprep.subr.mxu0 0.0
    %2367 = vmatpush2.msra.mxu0 0.0
    %2368 = vmatprep.subr.mxu0 0.0
    %2369 = vmatpush2.msra.mxu0 0.0
    %2370 = vmatprep.subr.mxu0 0.0
    %2371 = vmatpush2.msra.mxu0 0.0
    %2372 = vmatprep.subr.mxu0 0.0
    %2373 = vmatpush2.msra.mxu0 0.0
    %2374 = vmatprep.subr.mxu0 0.0
    %2375 = vmatpush2.msra.mxu0 0.0
    %2376 = vmatprep.subr.mxu0 0.0
    %2377 = vmatpush2.msra.mxu0 0.0
    %2378 = vmatprep.subr.mxu0 0.0
    %2379 = vmatpush2.msra.mxu0 0.0
    %2380 = vmatprep.subr.mxu0 0.0
    %2381 = vmatpush2.msra.mxu0 0.0
    %2382 = vmatprep.subr.mxu0 0.0
    %2383 = vmatpush2.msra.mxu0 0.0
    %2384 = vmatprep.subr.mxu0 0.0
    %2385 = vmatpush2.msra.mxu0 0.0
    %2386 = vmatprep.subr.mxu0 0.0
    %2387 = vmatpush2.msra.mxu0 0.0
    %2388 = vmatprep.subr.mxu0 0.0
    %2389 = vmatpush2.msra.mxu0 0.0
    %2390 = vmatprep.subr.mxu0 0.0
    %2391 = vmatpush2.msra.mxu0 0.0
    %2392 = vmatprep.subr.mxu0 0.0
    %2393 = vmatpush2.msra.mxu0 0.0
    %2394 = vmatprep.subr.mxu0 0.0
    %2395 = vmatpush2.msra.mxu0 0.0
    %2396 = vmatprep.mubr.f32.mxu0 0.0
    %2397 = vmatmul.mubr.f32.gmra.mxu0 %v2084
    %v2398 = vpop.f32.mrf.mxu0
    %v2399 = vadd.f32 0.0, %v2398
    %v2400 = vpop.f32.mrf.mxu0
    %2401 = vdwg.mxu0
    %v2402 = vld [vmem:[%s59] sm:$0x1]
    %v2403 = vld [vmem:[%s61] sm:$0x1]
    %vm2404 = vcmask 518144
    %v2405 = vsel %vm2404, %v2399, 0.0
    %2406 = vadd.xlane.f32.xlu0 %v2405
    %v2407 = vpop.xlane.xlu0 %2406
    %v2408 = vrcp.pop 64.0
    %v2409 = vmul.f32 %v2407, %v2408
    %v2410 = vmul.f32 %v2399, %v2399
    %v2411 = vsel %vm2404, %v2410, 0.0
    %2412 = vadd.xlane.f32.xlu0 %v2411
    %v2413 = vpop.xlane.xlu0 %2412
    %v2414 = vmul.f32 %v2413, %v2408
    %v2415 = vmul.f32 %v2409, %v2409
    %v2416 = vsub.f32 %v2414, %v2415
    %v2417 = vsub.f32 %v2399, %v2409
    %v2418 = vadd.f32 %v2416, 1e-05
    %v2419 = vrsqrt.pop %v2418
    %v2420 = vmul.f32 %v2417, %v2419
    %v2422 = vlaneseq
    %v2423 = vshrl.u32 %v2422, 7
    %v2424 = vsub.s32 0, %v2423
    %v2425 = vrot.slane %v2402, %v2424
    %v2427 = vmul.f32 %v2420, %v2425
    %v2429 = vlaneseq
    %v2430 = vshrl.u32 %v2429, 7
    %v2431 = vsub.s32 0, %v2430
    %v2432 = vrot.slane %v2403, %v2431
    %v2434 = vadd.f32 %v2427, %v2432
    %v2435 = vld [vmem:[%s15] sm:$0x7]
    %v2437 = vsel %vm708, %v2435, 0
    %v2439 = vsel %vm715, %v1513, 0
    %2441 = vmatprep.subr.mxu0 0.0
    %2442 = vmatpush1.msra.mxu0 0.0
    %2443 = vmatprep.subr.mxu0 0.0
    %2444 = vmatpush1.msra.mxu0 0.0
    %2445 = vmatprep.subr.mxu0 0.0
    %2446 = vmatpush1.msra.mxu0 0.0
    %2447 = vmatprep.subr.mxu0 0.0
    %2448 = vmatpush1.msra.mxu0 0.0
    %2449 = vmatprep.subr.mxu0 0.0
    %2450 = vmatpush1.msra.mxu0 0.0
    %2451 = vmatprep.subr.mxu0 0.0
    %2452 = vmatpush1.msra.mxu0 0.0
    %2453 = vmatprep.subr.mxu0 0.0
    %2454 = vmatpush1.msra.mxu0 0.0
    %2455 = vmatprep.subr.mxu0 0.0
    %2456 = vmatpush1.msra.mxu0 0.0
    %2457 = vmatprep.subr.mxu0 0.0
    %2458 = vmatpush1.msra.mxu0 0.0
    %2459 = vmatprep.subr.mxu0 0.0
    %2460 = vmatpush1.msra.mxu0 0.0
    %2461 = vmatprep.subr.mxu0 0.0
    %2462 = vmatpush1.msra.mxu0 0.0
    %2463 = vmatprep.subr.mxu0 0.0
    %2464 = vmatpush1.msra.mxu0 0.0
    %2465 = vmatprep.subr.mxu0 0.0
    %2466 = vmatpush1.msra.mxu0 0.0
    %2467 = vmatprep.subr.mxu0 0.0
    %2468 = vmatpush1.msra.mxu0 0.0
    %2469 = vmatprep.subr.mxu0 0.0
    %2470 = vmatpush1.msra.mxu0 %v2439
    %2471 = vmatprep.subr.mxu0 0.0
    %2472 = vmatpush1.msra.mxu0 %v1512
    %2473 = vmatprep.subr.mxu0 0.0
    %2474 = vmatpush2.msra.mxu0 0.0
    %2475 = vmatprep.subr.mxu0 0.0
    %2476 = vmatpush2.msra.mxu0 0.0
    %2477 = vmatprep.subr.mxu0 0.0
    %2478 = vmatpush2.msra.mxu0 0.0
    %2479 = vmatprep.subr.mxu0 0.0
    %2480 = vmatpush2.msra.mxu0 0.0
    %2481 = vmatprep.subr.mxu0 0.0
    %2482 = vmatpush2.msra.mxu0 0.0
    %2483 = vmatprep.subr.mxu0 0.0
    %2484 = vmatpush2.msra.mxu0 0.0
    %2485 = vmatprep.subr.mxu0 0.0
    %2486 = vmatpush2.msra.mxu0 0.0
    %2487 = vmatprep.subr.mxu0 0.0
    %2488 = vmatpush2.msra.mxu0 0.0
    %2489 = vmatprep.subr.mxu0 0.0
    %2490 = vmatpush2.msra.mxu0 0.0
    %2491 = vmatprep.subr.mxu0 0.0
    %2492 = vmatpush2.msra.mxu0 0.0
    %2493 = vmatprep.subr.mxu0 0.0
    %2494 = vmatpush2.msra.mxu0 0.0
    %2495 = vmatprep.subr.mxu0 0.0
    %2496 = vmatpush2.msra.mxu0 0.0
    %2497 = vmatprep.subr.mxu0 0.0
    %2498 = vmatpush2.msra.mxu0 0.0
    %2499 = vmatprep.subr.mxu0 0.0
    %2500 = vmatpush2.msra.mxu0 0.0
    %2501 = vmatprep.subr.mxu0 0.0
    %2502 = vmatpush2.msra.mxu0 0.0
    %2503 = vmatprep.subr.mxu0 0.0
    %2504 = vmatpush2.msra.mxu0 0.0
    %2505 = vmatprep.mubr.f32.mxu0 0.0
    %2506 = vmatmul.mubr.f32.gmra.mxu0 %v2437
    %v2507 = vpop.f32.mrf.mxu0
    %v2508 = vadd.f32 0.0, %v2507
    %v2509 = vpop.f32.mrf.mxu0
    %2510 = vdwg.mxu0
    %v2511 = vld [vmem:[%s17] sm:$0x7]
    %v2513 = vsel %vm708, %v2511, 0
    %2515 = vmatprep.subr.mxu0 0.0
    %2516 = vmatpush1.msra.mxu0 0.0
    %2517 = vmatprep.subr.mxu0 0.0
    %2518 = vmatpush1.msra.mxu0 0.0
    %2519 = vmatprep.subr.mxu0 0.0
    %2520 = vmatpush1.msra.mxu0 0.0
    %2521 = vmatprep.subr.mxu0 0.0
    %2522 = vmatpush1.msra.mxu0 0.0
    %2523 = vmatprep.subr.mxu0 0.0
    %2524 = vmatpush1.msra.mxu0 0.0
    %2525 = vmatprep.subr.mxu0 0.0
    %2526 = vmatpush1.msra.mxu0 0.0
    %2527 = vmatprep.subr.mxu0 0.0
    %2528 = vmatpush1.msra.mxu0 0.0
    %2529 = vmatprep.subr.mxu0 0.0
    %2530 = vmatpush1.msra.mxu0 0.0
    %2531 = vmatprep.subr.mxu0 0.0
    %2532 = vmatpush1.msra.mxu0 0.0
    %2533 = vmatprep.subr.mxu0 0.0
    %2534 = vmatpush1.msra.mxu0 0.0
    %2535 = vmatprep.subr.mxu0 0.0
    %2536 = vmatpush1.msra.mxu0 0.0
    %2537 = vmatprep.subr.mxu0 0.0
    %2538 = vmatpush1.msra.mxu0 0.0
    %2539 = vmatprep.subr.mxu0 0.0
    %2540 = vmatpush1.msra.mxu0 0.0
    %2541 = vmatprep.subr.mxu0 0.0
    %2542 = vmatpush1.msra.mxu0 0.0
    %2543 = vmatprep.subr.mxu0 0.0
    %2544 = vmatpush1.msra.mxu0 %v2439
    %2545 = vmatprep.subr.mxu0 0.0
    %2546 = vmatpush1.msra.mxu0 %v1512
    %2547 = vmatprep.subr.mxu0 0.0
    %2548 = vmatpush2.msra.mxu0 0.0
    %2549 = vmatprep.subr.mxu0 0.0
    %2550 = vmatpush2.msra.mxu0 0.0
    %2551 = vmatprep.subr.mxu0 0.0
    %2552 = vmatpush2.msra.mxu0 0.0
    %2553 = vmatprep.subr.mxu0 0.0
    %2554 = vmatpush2.msra.mxu0 0.0
    %2555 = vmatprep.subr.mxu0 0.0
    %2556 = vmatpush2.msra.mxu0 0.0
    %2557 = vmatprep.subr.mxu0 0.0
    %2558 = vmatpush2.msra.mxu0 0.0
    %2559 = vmatprep.subr.mxu0 0.0
    %2560 = vmatpush2.msra.mxu0 0.0
    %2561 = vmatprep.subr.mxu0 0.0
    %2562 = vmatpush2.msra.mxu0 0.0
    %2563 = vmatprep.subr.mxu0 0.0
    %2564 = vmatpush2.msra.mxu0 0.0
    %2565 = vmatprep.subr.mxu0 0.0
    %2566 = vmatpush2.msra.mxu0 0.0
    %2567 = vmatprep.subr.mxu0 0.0
    %2568 = vmatpush2.msra.mxu0 0.0
    %2569 = vmatprep.subr.mxu0 0.0
    %2570 = vmatpush2.msra.mxu0 0.0
    %2571 = vmatprep.subr.mxu0 0.0
    %2572 = vmatpush2.msra.mxu0 0.0
    %2573 = vmatprep.subr.mxu0 0.0
    %2574 = vmatpush2.msra.mxu0 0.0
    %2575 = vmatprep.subr.mxu0 0.0
    %2576 = vmatpush2.msra.mxu0 0.0
    %2577 = vmatprep.subr.mxu0 0.0
    %2578 = vmatpush2.msra.mxu0 0.0
    %2579 = vmatprep.mubr.f32.mxu0 0.0
    %2580 = vmatmul.mubr.f32.gmra.mxu0 %v2513
    %v2581 = vpop.f32.mrf.mxu0
    %v2582 = vadd.f32 0.0, %v2581
    %v2583 = vpop.f32.mrf.mxu0
    %2584 = vdwg.mxu0
    %v2585 = vld [vmem:[%s63] sm:$0xff]
    %v2586 = vld [vmem:[%s63 + $0x8] sm:$0xff]
    %v2587 = vld [vmem:[%s63 + $0x10] sm:$0xff]
    %v2588 = vld [vmem:[%s63 + $0x18] sm:$0xff]
    %v2589 = vld [vmem:[%s63 + $0x20] sm:$0xff]
    %v2590 = vld [vmem:[%s63 + $0x28] sm:$0xff]
    %v2591 = vld [vmem:[%s63 + $0x30] sm:$0xff]
    %v2592 = vld [vmem:[%s63 + $0x38] sm:$0xff]
    %v2593 = vld [vmem:[%s65] sm:$0xff]
    %v2594 = vld [vmem:[%s65 + $0x8] sm:$0xff]
    %v2595 = vld [vmem:[%s65 + $0x10] sm:$0xff]
    %v2596 = vld [vmem:[%s65 + $0x18] sm:$0xff]
    %v2598 = vsel %vm239, %v2508, 0
    %2600 = vmatprep.subr.mxu0 0.0
    %2601 = vmatpush1.msra.mxu0 0.0
    %2602 = vmatprep.subr.mxu0 0.0
    %2603 = vmatpush1.msra.mxu0 0.0
    %2604 = vmatprep.subr.mxu0 0.0
    %2605 = vmatpush1.msra.mxu0 0.0
    %2606 = vmatprep.subr.mxu0 0.0
    %2607 = vmatpush1.msra.mxu0 0.0
    %2608 = vmatprep.subr.mxu0 0.0
    %2609 = vmatpush1.msra.mxu0 0.0
    %2610 = vmatprep.subr.mxu0 0.0
    %2611 = vmatpush1.msra.mxu0 0.0
    %2612 = vmatprep.subr.mxu0 0.0
    %2613 = vmatpush1.msra.mxu0 0.0
    %2614 = vmatprep.subr.mxu0 0.0
    %2615 = vmatpush1.msra.mxu0 0.0
    %2616 = vmatprep.subr.mxu0 0.0
    %2617 = vmatpush1.msra.mxu0 0.0
    %2618 = vmatprep.subr.mxu0 0.0
    %2619 = vmatpush1.msra.mxu0 0.0
    %2620 = vmatprep.subr.mxu0 0.0
    %2621 = vmatpush1.msra.mxu0 0.0
    %2622 = vmatprep.subr.mxu0 0.0
    %2623 = vmatpush1.msra.mxu0 0.0
    %2624 = vmatprep.subr.mxu0 0.0
    %2625 = vmatpush1.msra.mxu0 %v2596
    %2626 = vmatprep.subr.mxu0 0.0
    %2627 = vmatpush1.msra.mxu0 %v2595
    %2628 = vmatprep.subr.mxu0 0.0
    %2629 = vmatpush1.msra.mxu0 %v2594
    %2630 = vmatprep.subr.mxu0 0.0
    %2631 = vmatpush1.msra.mxu0 %v2593
    %2632 = vmatprep.subr.mxu0 0.0
    %2633 = vmatpush2.msra.mxu0 0.0
    %2634 = vmatprep.subr.mxu0 0.0
    %2635 = vmatpush2.msra.mxu0 0.0
    %2636 = vmatprep.subr.mxu0 0.0
    %2637 = vmatpush2.msra.mxu0 0.0
    %2638 = vmatprep.subr.mxu0 0.0
    %2639 = vmatpush2.msra.mxu0 0.0
    %2640 = vmatprep.subr.mxu0 0.0
    %2641 = vmatpush2.msra.mxu0 0.0
    %2642 = vmatprep.subr.mxu0 0.0
    %2643 = vmatpush2.msra.mxu0 0.0
    %2644 = vmatprep.subr.mxu0 0.0
    %2645 = vmatpush2.msra.mxu0 0.0
    %2646 = vmatprep.subr.mxu0 0.0
    %2647 = vmatpush2.msra.mxu0 0.0
    %2648 = vmatprep.subr.mxu0 0.0
    %2649 = vmatpush2.msra.mxu0 0.0
    %2650 = vmatprep.subr.mxu0 0.0
    %2651 = vmatpush2.msra.mxu0 0.0
    %2652 = vmatprep.subr.mxu0 0.0
    %2653 = vmatpush2.msra.mxu0 0.0
    %2654 = vmatprep.subr.mxu0 0.0
    %2655 = vmatpush2.msra.mxu0 0.0
    %2656 = vmatprep.subr.mxu0 0.0
    %2657 = vmatpush2.msra.mxu0 0.0
    %2658 = vmatprep.subr.mxu0 0.0
    %2659 = vmatpush2.msra.mxu0 0.0
    %2660 = vmatprep.subr.mxu0 0.0
    %2661 = vmatpush2.msra.mxu0 0.0
    %2662 = vmatprep.subr.mxu0 0.0
    %2663 = vmatpush2.msra.mxu0 0.0
    %2664 = vmatprep.mubr.f32.mxu0 0.0
    %2665 = vmatmul.mubr.f32.gmra.mxu0 %v2598
    %v2666 = vpop.f32.mrf.mxu0
    %v2667 = vadd.f32 0.0, %v2666
    %v2668 = vpop.f32.mrf.mxu0
    %2669 = vdwg.mxu0
    %v2671 = vsel %vm820, %v2434, 0
    %2673 = vmatprep.subr.mxu0 0.0
    %2674 = vmatpush1.msra.mxu0 0.0
    %2675 = vmatprep.subr.mxu0 0.0
    %2676 = vmatpush1.msra.mxu0 0.0
    %2677 = vmatprep.subr.mxu0 0.0
    %2678 = vmatpush1.msra.mxu0 0.0
    %2679 = vmatprep.subr.mxu0 0.0
    %2680 = vmatpush1.msra.mxu0 0.0
    %2681 = vmatprep.subr.mxu0 0.0
    %2682 = vmatpush1.msra.mxu0 0.0
    %2683 = vmatprep.subr.mxu0 0.0
    %2684 = vmatpush1.msra.mxu0 0.0
    %2685 = vmatprep.subr.mxu0 0.0
    %2686 = vmatpush1.msra.mxu0 0.0
    %2687 = vmatprep.subr.mxu0 0.0
    %2688 = vmatpush1.msra.mxu0 0.0
    %2689 = vmatprep.subr.mxu0 0.0
    %2690 = vmatpush1.msra.mxu0 %v2592
    %2691 = vmatprep.subr.mxu0 0.0
    %2692 = vmatpush1.msra.mxu0 %v2591
    %2693 = vmatprep.subr.mxu0 0.0
    %2694 = vmatpush1.msra.mxu0 %v2590
    %2695 = vmatprep.subr.mxu0 0.0
    %2696 = vmatpush1.msra.mxu0 %v2589
    %2697 = vmatprep.subr.mxu0 0.0
    %2698 = vmatpush1.msra.mxu0 %v2588
    %2699 = vmatprep.subr.mxu0 0.0
    %2700 = vmatpush1.msra.mxu0 %v2587
    %2701 = vmatprep.subr.mxu0 0.0
    %2702 = vmatpush1.msra.mxu0 %v2586
    %2703 = vmatprep.subr.mxu0 0.0
    %2704 = vmatpush1.msra.mxu0 %v2585
    %2705 = vmatprep.subr.mxu0 0.0
    %2706 = vmatpush2.msra.mxu0 0.0
    %2707 = vmatprep.subr.mxu0 0.0
    %2708 = vmatpush2.msra.mxu0 0.0
    %2709 = vmatprep.subr.mxu0 0.0
    %2710 = vmatpush2.msra.mxu0 0.0
    %2711 = vmatprep.subr.mxu0 0.0
    %2712 = vmatpush2.msra.mxu0 0.0
    %2713 = vmatprep.subr.mxu0 0.0
    %2714 = vmatpush2.msra.mxu0 0.0
    %2715 = vmatprep.subr.mxu0 0.0
    %2716 = vmatpush2.msra.mxu0 0.0
    %2717 = vmatprep.subr.mxu0 0.0
    %2718 = vmatpush2.msra.mxu0 0.0
    %2719 = vmatprep.subr.mxu0 0.0
    %2720 = vmatpush2.msra.mxu0 0.0
    %2721 = vmatprep.subr.mxu0 0.0
    %2722 = vmatpush2.msra.mxu0 0.0
    %2723 = vmatprep.subr.mxu0 0.0
    %2724 = vmatpush2.msra.mxu0 0.0
    %2725 = vmatprep.subr.mxu0 0.0
    %2726 = vmatpush2.msra.mxu0 0.0
    %2727 = vmatprep.subr.mxu0 0.0
    %2728 = vmatpush2.msra.mxu0 0.0
    %2729 = vmatprep.subr.mxu0 0.0
    %2730 = vmatpush2.msra.mxu0 0.0
    %2731 = vmatprep.subr.mxu0 0.0
    %2732 = vmatpush2.msra.mxu0 0.0
    %2733 = vmatprep.subr.mxu0 0.0
    %2734 = vmatpush2.msra.mxu0 0.0
    %2735 = vmatprep.subr.mxu0 0.0
    %2736 = vmatpush2.msra.mxu0 0.0
    %2737 = vmatprep.mubr.f32.mxu0 0.0
    %2738 = vmatmul.mubr.f32.gmra.mxu0 %v2671
    %v2739 = vpop.f32.mrf.mxu0
    %v2740 = vadd.f32 %v2667, %v2739
    %v2741 = vpop.f32.mrf.mxu0
    %2742 = vdwg.mxu0
    %v2743 = vld [vmem:[%s67] sm:$0xff]
    %v2744 = vld [vmem:[%s67 + $0x8] sm:$0xff]
    %v2745 = vld [vmem:[%s67 + $0x10] sm:$0xff]
    %v2746 = vld [vmem:[%s67 + $0x18] sm:$0xff]
    %v2748 = vsel %vm239, %v2582, 0
    %2750 = vmatprep.subr.mxu0 0.0
    %2751 = vmatpush1.msra.mxu0 0.0
    %2752 = vmatprep.subr.mxu0 0.0
    %2753 = vmatpush1.msra.mxu0 0.0
    %2754 = vmatprep.subr.mxu0 0.0
    %2755 = vmatpush1.msra.mxu0 0.0
    %2756 = vmatprep.subr.mxu0 0.0
    %2757 = vmatpush1.msra.mxu0 0.0
    %2758 = vmatprep.subr.mxu0 0.0
    %2759 = vmatpush1.msra.mxu0 0.0
    %2760 = vmatprep.subr.mxu0 0.0
    %2761 = vmatpush1.msra.mxu0 0.0
    %2762 = vmatprep.subr.mxu0 0.0
    %2763 = vmatpush1.msra.mxu0 0.0
    %2764 = vmatprep.subr.mxu0 0.0
    %2765 = vmatpush1.msra.mxu0 0.0
    %2766 = vmatprep.subr.mxu0 0.0
    %2767 = vmatpush1.msra.mxu0 0.0
    %2768 = vmatprep.subr.mxu0 0.0
    %2769 = vmatpush1.msra.mxu0 0.0
    %2770 = vmatprep.subr.mxu0 0.0
    %2771 = vmatpush1.msra.mxu0 0.0
    %2772 = vmatprep.subr.mxu0 0.0
    %2773 = vmatpush1.msra.mxu0 0.0
    %2774 = vmatprep.subr.mxu0 0.0
    %2775 = vmatpush1.msra.mxu0 %v2746
    %2776 = vmatprep.subr.mxu0 0.0
    %2777 = vmatpush1.msra.mxu0 %v2745
    %2778 = vmatprep.subr.mxu0 0.0
    %2779 = vmatpush1.msra.mxu0 %v2744
    %2780 = vmatprep.subr.mxu0 0.0
    %2781 = vmatpush1.msra.mxu0 %v2743
    %2782 = vmatprep.subr.mxu0 0.0
    %2783 = vmatpush2.msra.mxu0 0.0
    %2784 = vmatprep.subr.mxu0 0.0
    %2785 = vmatpush2.msra.mxu0 0.0
    %2786 = vmatprep.subr.mxu0 0.0
    %2787 = vmatpush2.msra.mxu0 0.0
    %2788 = vmatprep.subr.mxu0 0.0
    %2789 = vmatpush2.msra.mxu0 0.0
    %2790 = vmatprep.subr.mxu0 0.0
    %2791 = vmatpush2.msra.mxu0 0.0
    %2792 = vmatprep.subr.mxu0 0.0
    %2793 = vmatpush2.msra.mxu0 0.0
    %2794 = vmatprep.subr.mxu0 0.0
    %2795 = vmatpush2.msra.mxu0 0.0
    %2796 = vmatprep.subr.mxu0 0.0
    %2797 = vmatpush2.msra.mxu0 0.0
    %2798 = vmatprep.subr.mxu0 0.0
    %2799 = vmatpush2.msra.mxu0 0.0
    %2800 = vmatprep.subr.mxu0 0.0
    %2801 = vmatpush2.msra.mxu0 0.0
    %2802 = vmatprep.subr.mxu0 0.0
    %2803 = vmatpush2.msra.mxu0 0.0
    %2804 = vmatprep.subr.mxu0 0.0
    %2805 = vmatpush2.msra.mxu0 0.0
    %2806 = vmatprep.subr.mxu0 0.0
    %2807 = vmatpush2.msra.mxu0 0.0
    %2808 = vmatprep.subr.mxu0 0.0
    %2809 = vmatpush2.msra.mxu0 0.0
    %2810 = vmatprep.subr.mxu0 0.0
    %2811 = vmatpush2.msra.mxu0 0.0
    %2812 = vmatprep.subr.mxu0 0.0
    %2813 = vmatpush2.msra.mxu0 0.0
    %2814 = vmatprep.mubr.f32.mxu0 0.0
    %2815 = vmatmul.mubr.f32.gmra.mxu0 %v2748
    %v2816 = vpop.f32.mrf.mxu0
    %v2817 = vadd.f32 0.0, %v2816
    %v2818 = vpop.f32.mrf.mxu0
    %2819 = vdwg.mxu0
    %v2820 = vadd.f32 %v2740, %v2817
    %v2821 = vld [vmem:[%s69] sm:$0x1]
    %v2823 = vlaneseq
    %v2824 = vshrl.u32 %v2823, 7
    %v2825 = vsub.s32 0, %v2824
    %v2826 = vrot.slane %v2821, %v2825
    %v2828 = vadd.f32 %v2820, %v2826
    %vm2829 = vcmp.gt.f32.partialorder %v2828, 0.0
    %v2830 = vmul.f32 %v2828, 0.1
    %v2831 = vsel %vm2829, %v2828, %v2830
    %v2832 = vld [vmem:[%s71] sm:$0xff]
    %v2833 = vld [vmem:[%s71 + $0x8] sm:$0xff]
    %v2834 = vld [vmem:[%s71 + $0x10] sm:$0xff]
    %v2835 = vld [vmem:[%s71 + $0x18] sm:$0xff]
    %v2836 = vld [vmem:[%s73] sm:$0x1]
    %v2838 = vlaneseq
    %v2839 = vshrl.u32 %v2838, 7
    %v2840 = vsub.s32 0, %v2839
    %v2841 = vrot.slane %v2836, %v2840
    %v2844 = vsel %vm239, %v2831, 0
    %2846 = vmatprep.subr.mxu0 0.0
    %2847 = vmatpush1.msra.mxu0 0.0
    %2848 = vmatprep.subr.mxu0 0.0
    %2849 = vmatpush1.msra.mxu0 0.0
    %2850 = vmatprep.subr.mxu0 0.0
    %2851 = vmatpush1.msra.mxu0 0.0
    %2852 = vmatprep.subr.mxu0 0.0
    %2853 = vmatpush1.msra.mxu0 0.0
    %2854 = vmatprep.subr.mxu0 0.0
    %2855 = vmatpush1.msra.mxu0 0.0
    %2856 = vmatprep.subr.mxu0 0.0
    %2857 = vmatpush1.msra.mxu0 0.0
    %2858 = vmatprep.subr.mxu0 0.0
    %2859 = vmatpush1.msra.mxu0 0.0
    %2860 = vmatprep.subr.mxu0 0.0
    %2861 = vmatpush1.msra.mxu0 0.0
    %2862 = vmatprep.subr.mxu0 0.0
    %2863 = vmatpush1.msra.mxu0 0.0
    %2864 = vmatprep.subr.mxu0 0.0
    %2865 = vmatpush1.msra.mxu0 0.0
    %2866 = vmatprep.subr.mxu0 0.0
    %2867 = vmatpush1.msra.mxu0 0.0
    %2868 = vmatprep.subr.mxu0 0.0
    %2869 = vmatpush1.msra.mxu0 0.0
    %2870 = vmatprep.subr.mxu0 0.0
    %2871 = vmatpush1.msra.mxu0 %v2835
    %2872 = vmatprep.subr.mxu0 0.0
    %2873 = vmatpush1.msra.mxu0 %v2834
    %2874 = vmatprep.subr.mxu0 0.0
    %2875 = vmatpush1.msra.mxu0 %v2833
    %2876 = vmatprep.subr.mxu0 0.0
    %2877 = vmatpush1.msra.mxu0 %v2832
    %2878 = vmatprep.subr.mxu0 0.0
    %2879 = vmatpush2.msra.mxu0 0.0
    %2880 = vmatprep.subr.mxu0 0.0
    %2881 = vmatpush2.msra.mxu0 0.0
    %2882 = vmatprep.subr.mxu0 0.0
    %2883 = vmatpush2.msra.mxu0 0.0
    %2884 = vmatprep.subr.mxu0 0.0
    %2885 = vmatpush2.msra.mxu0 0.0
    %2886 = vmatprep.subr.mxu0 0.0
    %2887 = vmatpush2.msra.mxu0 0.0
    %2888 = vmatprep.subr.mxu0 0.0
    %2889 = vmatpush2.msra.mxu0 0.0
    %2890 = vmatprep.subr.mxu0 0.0
    %2891 = vmatpush2.msra.mxu0 0.0
    %2892 = vmatprep.subr.mxu0 0.0
    %2893 = vmatpush2.msra.mxu0 0.0
    %2894 = vmatprep.subr.mxu0 0.0
    %2895 = vmatpush2.msra.mxu0 0.0
    %2896 = vmatprep.subr.mxu0 0.0
    %2897 = vmatpush2.msra.mxu0 0.0
    %2898 = vmatprep.subr.mxu0 0.0
    %2899 = vmatpush2.msra.mxu0 0.0
    %2900 = vmatprep.subr.mxu0 0.0
    %2901 = vmatpush2.msra.mxu0 0.0
    %2902 = vmatprep.subr.mxu0 0.0
    %2903 = vmatpush2.msra.mxu0 0.0
    %2904 = vmatprep.subr.mxu0 0.0
    %2905 = vmatpush2.msra.mxu0 0.0
    %2906 = vmatprep.subr.mxu0 0.0
    %2907 = vmatpush2.msra.mxu0 0.0
    %2908 = vmatprep.subr.mxu0 0.0
    %2909 = vmatpush2.msra.mxu0 0.0
    %2910 = vmatprep.mubr.f32.mxu0 0.0
    %2911 = vmatmul.mubr.f32.gmra.mxu0 %v2844
    %v2912 = vpop.f32.mrf.mxu0
    %v2913 = vadd.f32 %v2841, %v2912
    %v2914 = vpop.f32.mrf.mxu0
    %2915 = vdwg.mxu0
    %vm2916 = vcmp.gt.f32.partialorder %v2913, 0.0
    %v2917 = vmul.f32 %v2913, 0.1
    %v2918 = vsel %vm2916, %v2913, %v2917
    %v2919 = vld [vmem:[%s75] sm:$0x1]
    %v2921 = vlaneseq
    %v2922 = vshrl.u32 %v2921, 7
    %v2923 = vsub.s32 0, %v2922
    %v2924 = vrot.slane %v2919, %v2923
    %v2926 = vmul.f32 %v2918, %v2924
    %vm2927 = vcmask 124928
    %v2928 = vsel %vm2927, %v2926, 0.0
    %2929 = vadd.xlane.f32.xlu0 %v2928
    %v2930 = vpop.xlane.xlu0 %2929
    %v2931 = vld [vmem:[#allocation2] sm:$0x1]
    %v2933 = vlaneseq
    %v2934 = vshrl.u32 %v2933, 7
    %v2935 = vsub.s32 0, %v2934
    %v2936 = vrot.slane %v2931, %v2935
    %v2938 = vadd.f32 %v2930, %v2936
    %2940 = vset.pattern.permute.xlu0 0
    %2941 = vperm.xlu0 %2940, %v2938
    %v2942 = vpop.permute.xlu0 %2941
    %2944 = vst [vmem:[%s79] sm:$0x7] %v2942
    // Predicated region
    $region162: #{rasg_forward.1} parent=1 // pred_check
      _
    $region163: #{rasg_forward.1} parent=1 // pred_check_branch
      %2946 = sbr.rel (0) target = $region165
    $region164: #{rasg_forward.1} parent=1 // pred_region
      _
    $region165: #{rasg_forward.1} parent=1 // pred_fallthru
      _
    // Predicated region
    $region166: #{rasg_forward.1} parent=1 // pred_check
      _
    $region167: #{rasg_forward.1} parent=1 // pred_check_branch
      %2948 = sbr.rel (0) target = $region169
    $region168: #{rasg_forward.1} parent=1 // pred_region
      _
    $region169: #{rasg_forward.1} parent=1 // pred_fallthru
      _
    %2949 = vsyncpa [#allocation4], 1

</llo_original>
